<compile_context>
chip_gen: v6e
topology: v6e:2x2x1
jax: 0.10.0
libtpu: 0.0.40
codegen_flags: <defaults>
</compile_context>

<pallas_src>
import functools

import jax
import jax.numpy as jnp
from jax.experimental import pallas as pl


# ----------------------------- Pallas kernels -----------------------------

def _start_kernel(x_ref, w_ref, b_ref, o_ref):
    # 1x1 start conv.  Weights/bias are pre-padded to the full 128-wide output slab
    # ([x | dense=0 | unused=0]) so a single un-masked store writes the whole block.
    o_ref[...] = (jnp.dot(x_ref[...], w_ref[...], preferred_element_type=jnp.float32)
                  + b_ref[...])


def _layer_kernel(prev_ref, s0_ref, s1_ref, wt_ref, bf_ref, bg_ref,
                  wg_ref, yb_ref, gb_ref, k1_ref, k2_ref, lng_ref, lnb_ref,
                  o_ref, *, rc, dc, chunk, batch):
    # Fused ST-layer.  Row order is (b, n, t); all ops are plain 2D matmuls / slices.
    prev = prev_ref[...]                         # (R0, 2*rc + sc) combined slab
    x = prev[:, 0:rc]                            # layer input ("res")
    dprev = prev[:, rc:2 * rc]                   # carried dense accumulator

    # ---- dilated gated temporal conv: taps via row-selector matmuls S0 / S1 ----
    u = jnp.dot(x, wt_ref[...], preferred_element_type=jnp.float32)    # (R0, 4*dc)
    ua = jnp.dot(s0_ref[...], u, preferred_element_type=jnp.float32)   # rows (b,n,t)
    ub = jnp.dot(s1_ref[...], u, preferred_element_type=jnp.float32)   # rows (b,n,t+d)
    filt = ua[:, 0:dc] + ub[:, dc:2 * dc] + bf_ref[...]
    gate = ua[:, 2 * dc:3 * dc] + ub[:, 3 * dc:4 * dc] + bg_ref[...]
    xt = jnp.tanh(filt) * jax.nn.sigmoid(gate)                          # (R, dc)

    # ---- gcn channel mix + skip 1x1 conv in one wide matmul ----
    y = jnp.dot(xt, wg_ref[...], preferred_element_type=jnp.float32) + yb_ref[...]
    y1 = y[:, 0:rc]
    y2 = y[:, rc:2 * rc]
    o_ref[:, 2 * rc:] = y[:, 2 * rc:]            # skip-conv output (bias already in yb)

    # ---- graph mixing (supports pre-kron'd with identities -> plain 2D matmuls) ----
    h = (jnp.dot(k1_ref[...], y1, preferred_element_type=jnp.float32)
         + jnp.dot(k2_ref[...], y2, preferred_element_type=jnp.float32)
         + gb_ref[...])                          # (R, rc)

    # ---- dense (residual) accumulator: last t_out time steps of (res + dense_prev) ----
    dense = jnp.dot(s1_ref[...], x + dprev, preferred_element_type=jnp.float32)
    o_ref[:, rc:2 * rc] = dense

    # ---- gated residual merge ----
    g = jax.nn.sigmoid(h)
    xm = h * g + dense * (1.0 - g)

    # ---- LayerNorm over (C, N, T) per batch: each batch is a contiguous row chunk ----
    lng = lng_ref[...]
    lnb = lnb_ref[...]
    inv = 1.0 / float(chunk * rc)
    for b in range(batch):
        xb = xm[b * chunk:(b + 1) * chunk, :]
        mu = jnp.sum(jnp.sum(xb, axis=1, keepdims=True), axis=0, keepdims=True) * inv
        xc = xb - mu
        var = jnp.sum(jnp.sum(xc * xc, axis=1, keepdims=True), axis=0, keepdims=True) * inv
        o_ref[b * chunk:(b + 1) * chunk, 0:rc] = (
            xc * jax.lax.rsqrt(var + 1e-5)) * lng + lnb


def _end_kernel(skip_ref, w1_ref, b1_ref, w2_ref, b2_ref, o_ref):
    # Fused end convs for both b/g branches.
    # relu(skip) once, one [M, skip_in]@[skip_in, 2*ec] matmul, then a block-diagonal
    # [2*ec, 2*out_len] matmul + sigmoid.
    r = jnp.maximum(skip_ref[...], 0.0)
    y1 = jnp.maximum(
        jnp.dot(r, w1_ref[...], preferred_element_type=jnp.float32) + b1_ref[...], 0.0)
    o_ref[...] = jax.nn.sigmoid(
        jnp.dot(y1, w2_ref[...], preferred_element_type=jnp.float32) + b2_ref[...])


def _sir_kernel(pb_ref, pg_ref, mob_ref, mobt_ref, s_ref, i_ref, r_ref, o_ref, *, steps):
    # SIR rollout, statically unrolled (sequential data dependency -> no grid).
    mob = mob_ref[...]
    mobt = mobt_ref[...]
    s = s_ref[...]
    i = i_ref[...]
    r = r_ref[...]
    for t in range(steps):
        pop = s + i + r
        inv_pop = 1.0 / jnp.maximum(pop, 1e-12)          # single guarded reciprocal
        prop = (jnp.dot(i * inv_pop, mob, preferred_element_type=jnp.float32)
                + jnp.dot(i, mobt, preferred_element_type=jnp.float32) * inv_pop)
        i_new = pb_ref[t] * prop
        ig = i * pg_ref[t]
        r = ig + r
        i = i + i_new - ig
        s = s - i_new
        o_ref[t] = i_new


# ----------------------------- model (glue + params) -----------------------------

CFG = dict(
    batch=2, num_nodes=8, in_dim=4, in_len=3, out_len=4,
    residual_channels=32, dilation_channels=32, skip_channels=64,
    end_channels=64, kernel_size=2, blocks=1, layers=2, dropout=0.0,
)


def _dilations_and_ln_T(cfg):
    # Mirrors the bookkeeping in stcell.__init__.
    dil, ln_T = [], []
    rf = 1
    total = (2 ** cfg["layers"] - 1) * cfg["blocks"] + 2
    for _ in range(cfg["blocks"]):
        add, d = 1, 1
        for _ in range(cfg["layers"]):
            dil.append(d)
            d *= 2
            rf += add
            add *= 2
            ln_T.append(total - rf)
    return dil, ln_T, rf


def init_params(key, cfg):
    _, ln_T, _ = _dilations_and_ln_T(cfg)
    p = {}
    N = cfg["num_nodes"]
    rc, dc, sc, ec = (cfg["residual_channels"], cfg["dilation_channels"],
                      cfg["skip_channels"], cfg["end_channels"])

    def nrm(k, shape, scale=0.1):
        return scale * jax.random.normal(k, shape, dtype=jnp.float32)

    keys = iter(jax.random.split(key, 256))
    p["start_w"] = nrm(next(keys), (cfg["in_dim"], rc))
    p["start_b"] = nrm(next(keys), (1, rc))
    n_layers = cfg["blocks"] * cfg["layers"]
    for i in range(n_layers):
        for name in ("filt", "gate"):
            p[f"{name}_w0_{i}"] = nrm(next(keys), (rc, dc))   # temporal tap 0
            p[f"{name}_w1_{i}"] = nrm(next(keys), (rc, dc))   # temporal tap 1
            p[f"{name}_b_{i}"] = nrm(next(keys), (1, dc))
        p[f"skip_w_{i}"] = nrm(next(keys), (dc, sc))
        p[f"skip_b_{i}"] = nrm(next(keys), (1, sc))
        p[f"gcn_w1_{i}"] = nrm(next(keys), (dc, rc))          # mlp block for support A1
        p[f"gcn_w2_{i}"] = nrm(next(keys), (dc, rc))          # mlp block for support A2
        p[f"gcn_b_{i}"] = nrm(next(keys), (1, rc))
        p[f"ln_g_{i}"] = jnp.ones((rc, N, ln_T[i]), jnp.float32)
        p[f"ln_b_{i}"] = jnp.zeros((rc, N, ln_T[i]), jnp.float32)
    skip_in = sc * n_layers
    for tag in ("b", "g"):
        p[f"end_{tag}1_w"] = nrm(next(keys), (skip_in, ec))
        p[f"end_{tag}1_b"] = nrm(next(keys), (1, ec))
        p[f"end_{tag}2_w"] = nrm(next(keys), (ec, cfg["out_len"]))
        p[f"end_{tag}2_b"] = nrm(next(keys), (1, cfg["out_len"]))
    # Adaptive graph-learning parameter: g_rescaled = log(adpinit+1)/max_log
    adpinit = jax.random.uniform(next(keys), (N, N), dtype=jnp.float32)
    log_g = jnp.log(adpinit + 1.0)
    p["max_log"] = jnp.max(log_g)
    p["g_rescaled"] = log_g / p["max_log"]
    return p


def mepognn_forward(p, cfg, x_node, SIR):
    # glm_type == 'Adaptive'
    B, N = cfg["batch"], cfg["num_nodes"]
    rc, dc = cfg["residual_channels"], cfg["dilation_channels"]
    sc, ec = cfg["skip_channels"], cfg["end_channels"]
    L = cfg["out_len"]
    n_layers = cfg["blocks"] * cfg["layers"]
    dilations, ln_T, rf = _dilations_and_ln_T(cfg)

    # ---- adaptive graph learning (tiny XLA ops, fused under jit) ----
    mob = jnp.exp(jnp.maximum(p["g_rescaled"] * p["max_log"], 0.0))
    a1 = mob / jnp.sum(mob, axis=1, keepdims=True)
    mob_t = mob.T
    a2 = mob_t / jnp.sum(mob_t, axis=1, keepdims=True)

    # ---- single layout change at the model input: NCHW -> rows (b, n, t, c) ----
    x = jnp.transpose(x_node, (0, 2, 3, 1))                         # (B, N, T, C_in)
    t_in = x.shape[2]
    if t_in < rf:
        x = jnp.pad(x, ((0, 0), (0, 0), (rf - t_in, 0), (0, 0)))
    T = x.shape[2]
    x2d = x.reshape(B * N * T, cfg["in_dim"])

    slab = 2 * rc + sc                                              # [x | dense | skip]
    w_start = jnp.zeros((cfg["in_dim"], slab), jnp.float32).at[:, :rc].set(p["start_w"])
    b_start = jnp.zeros((1, slab), jnp.float32).at[:, :rc].set(p["start_b"])
    prev = pl.pallas_call(
        _start_kernel,
        out_shape=jax.ShapeDtypeStruct((B * N * T, slab), jnp.float32),
    )(x2d, w_start, b_start)

    skip_parts = []
    for i in range(n_layers):
        d = dilations[i]
        t_out = T - d
        assert t_out == ln_T[i]
        r0, r = B * N * T, B * N * t_out
        chunk = N * t_out

        # row selectors for the two dilated temporal taps (also reused for the
        # "last t_out time steps" truncation of the dense accumulator, since d = T - t_out)
        rows = jnp.arange(r)
        grp = rows // t_out
        tt = rows % t_out
        sel0 = jax.nn.one_hot(grp * T + tt, r0, dtype=jnp.float32)          # tap x[t]
        sel1 = jax.nn.one_hot(grp * T + tt + d, r0, dtype=jnp.float32)      # tap x[t+d]

        # graph supports applied as kron'd mixing matrices: h = (I_B (x) A (x) I_t) @ y
        # TODO(synk): for large B*N*T replace the kron trick with a node-major
        # [N,N]@[N,B*T*C] wide matmul (this formulation scales as (B*N*T)^2).
        eye_t = jnp.eye(t_out, dtype=jnp.float32)
        eye_b = jnp.eye(B, dtype=jnp.float32)
        k1 = jnp.kron(eye_b, jnp.kron(a1, eye_t))
        k2 = jnp.kron(eye_b, jnp.kron(a2, eye_t))

        # fused weight slabs
        w_t = jnp.concatenate([p[f"filt_w0_{i}"], p[f"filt_w1_{i}"],
                               p[f"gate_w0_{i}"], p[f"gate_w1_{i}"]], axis=1)   # (rc, 4*dc)
        w_g = jnp.concatenate([p[f"gcn_w1_{i}"], p[f"gcn_w2_{i}"],
                               p[f"skip_w_{i}"]], axis=1)                       # (dc, 2*rc+sc)
        y_b = jnp.concatenate([jnp.zeros((1, 2 * rc), jnp.float32),
                               p[f"skip_b_{i}"]], axis=1)                       # (1, 2*rc+sc)
        ln_g = jnp.transpose(p[f"ln_g_{i}"], (1, 2, 0)).reshape(chunk, rc)
        ln_b = jnp.transpose(p[f"ln_b_{i}"], (1, 2, 0)).reshape(chunk, rc)

        prev = pl.pallas_call(
            functools.partial(_layer_kernel, rc=rc, dc=dc, chunk=chunk, batch=B),
            out_shape=jax.ShapeDtypeStruct((r, slab), jnp.float32),
        )(prev, sel0, sel1, w_t, p[f"filt_b_{i}"], p[f"gate_b_{i}"],
          w_g, y_b, p[f"gcn_b_{i}"], k1, k2, ln_g, ln_b)

        # skip contribution: keep only the last time step of each (b, n) group
        s_full = prev[:, 2 * rc:].reshape(B, N, t_out, sc)
        skip_parts.append(s_full[:, :, t_out - 1, :].reshape(B * N, sc))
        T = t_out

    assert T == 1  # receptive field consumes all time steps (as in the reference config)
    skip2d = jnp.concatenate(skip_parts[::-1], axis=1)       # newest layer first (PyTorch order)

    # ---- fused twin end-conv branches ----
    w1 = jnp.concatenate([p["end_b1_w"], p["end_g1_w"]], axis=1)            # (skip_in, 2*ec)
    b1 = jnp.concatenate([p["end_b1_b"], p["end_g1_b"]], axis=1)
    w2 = jnp.zeros((2 * ec, 2 * L), jnp.float32)
    w2 = w2.at[:ec, :L].set(p["end_b2_w"]).at[ec:, L:].set(p["end_g2_w"])   # block diagonal
    b2 = jnp.concatenate([p["end_b2_b"], p["end_g2_b"]], axis=1)
    params_bg = pl.pallas_call(
        _end_kernel,
        out_shape=jax.ShapeDtypeStruct((B * N, 2 * L), jnp.float32),
    )(skip2d, w1, b1, w2, b2)

    pbg = params_bg.reshape(B, N, 2 * L)
    pb = jnp.transpose(pbg[:, :, :L], (2, 0, 1))             # (L, B, N)
    pg = jnp.transpose(pbg[:, :, L:], (2, 0, 1))

    # ---- SIR rollout ----
    sir_last = SIR[:, -1]                                    # (B, N, 3)
    out = pl.pallas_call(
        functools.partial(_sir_kernel, steps=L),
        out_shape=jax.ShapeDtypeStruct((L, B, N), jnp.float32),
    )(pb, pg, mob, mob_t, sir_last[..., 0], sir_last[..., 1], sir_last[..., 2])

    return jnp.transpose(out, (1, 0, 2))[..., None]          # (B, out_len, N, 1)


# TODO(synk): 'Dynamic' glm_type branch (softmax incidence + einsum over the OD tensor)
# is not exercised here; only the 'Adaptive' branch is implemented end-to-end.
# TODO(synk): before scaling B/N/T up, add M-blocked grids (parallel semantics) with an
# explicit vmem_limit, and cast matmul operands to bfloat16 (f32 accumulation).

if __name__ == "__main__":
    cfg = CFG
    key = jax.random.PRNGKey(0)
    kp, kx, ks1, ks2, ks3 = jax.random.split(key, 5)
    params = init_params(kp, cfg)
    B, N = cfg["batch"], cfg["num_nodes"]
    x_node = 0.1 * jax.random.normal(kx, (B, cfg["in_dim"], N, cfg["in_len"]), jnp.float32)
    S0 = 900.0 + 100.0 * jax.random.uniform(ks1, (B, cfg["in_len"], N, 1), dtype=jnp.float32)
    I0 = 1.0 + 10.0 * jax.random.uniform(ks2, (B, cfg["in_len"], N, 1), dtype=jnp.float32)
    R0 = 5.0 * jax.random.uniform(ks3, (B, cfg["in_len"], N, 1), dtype=jnp.float32)
    SIR = jnp.concatenate([S0, I0, R0], axis=-1)             # [B, T, N, 3]

    fwd = jax.jit(lambda p, xn, sir: mepognn_forward(p, cfg, xn, sir))
    out = jax.block_until_ready(fwd(params, x_node, SIR))
    assert out.shape == (B, cfg["out_len"], N, 1)
    assert bool(jnp.all(jnp.isfinite(out)))
    print("KERNEL_OK")
</pallas_src>

<mosaic_0001>
module attributes {stable_mosaic.version = 11 : i64} {
  func.func @_start_kernel(%arg0: memref<64x4xf32, #tpu.memory_space<vmem>>, %arg1: memref<4x128xf32, #tpu.memory_space<vmem>>, %arg2: memref<1x128xf32, #tpu.memory_space<vmem>>, %arg3: memref<64x128xf32, #tpu.memory_space<vmem>>) attributes {dimension_semantics = [], scalar_prefetch = 0 : i64, scratch_operands = 0 : i64, tpu.core_type = #tpu.core_type<tc>} {
    %c0 = arith.constant 0 : index
    %c0_0 = arith.constant 0 : index
    %0 = vector.load %arg0[%c0, %c0_0] : memref<64x4xf32, #tpu.memory_space<vmem>>, vector<64x4xf32>
    %c0_1 = arith.constant 0 : index
    %c0_2 = arith.constant 0 : index
    %1 = vector.load %arg1[%c0_1, %c0_2] : memref<4x128xf32, #tpu.memory_space<vmem>>, vector<4x128xf32>
    %cst = arith.constant dense<0.000000e+00> : vector<64x128xf32>
    %2 = tpu.matmul %0, %1, %cst {dimension_numbers = #tpu.dot_dimension_numbers<[1], [0], [0], [1], [0, 0, 1, 1], [], []>} : vector<64x4xf32>, vector<4x128xf32>, vector<64x128xf32> -> vector<64x128xf32>
    %c0_3 = arith.constant 0 : index
    %c0_4 = arith.constant 0 : index
    %3 = vector.load %arg2[%c0_3, %c0_4] : memref<1x128xf32, #tpu.memory_space<vmem>>, vector<1x128xf32>
    %4 = vector.broadcast %3 : vector<1x128xf32> to vector<64x128xf32>
    %5 = arith.addf %2, %4 : vector<64x128xf32>
    %c0_5 = arith.constant 0 : index
    %c0_6 = arith.constant 0 : index
    %6 = vector.load %arg3[%c0_5, %c0_6] : memref<64x128xf32, #tpu.memory_space<vmem>>, vector<64x128xf32>
    tpu.vector_store %arg3[%c0_5, %c0_6], %5 {strides = array<i32>} : memref<64x128xf32, #tpu.memory_space<vmem>>, vector<64x128xf32>,
    return
  }
}

module attributes {stable_mosaic.version = 11 : i64} {
  func.func @_layer_kernel(%arg0: memref<64x128xf32, #tpu.memory_space<vmem>>, %arg1: memref<48x64xf32, #tpu.memory_space<vmem>>, %arg2: memref<48x64xf32, #tpu.memory_space<vmem>>, %arg3: memref<32x128xf32, #tpu.memory_space<vmem>>, %arg4: memref<1x32xf32, #tpu.memory_space<vmem>>, %arg5: memref<1x32xf32, #tpu.memory_space<vmem>>, %arg6: memref<32x128xf32, #tpu.memory_space<vmem>>, %arg7: memref<1x128xf32, #tpu.memory_space<vmem>>, %arg8: memref<1x32xf32, #tpu.memory_space<vmem>>, %arg9: memref<48x48xf32, #tpu.memory_space<vmem>>, %arg10: memref<48x48xf32, #tpu.memory_space<vmem>>, %arg11: memref<24x32xf32, #tpu.memory_space<vmem>>, %arg12: memref<24x32xf32, #tpu.memory_space<vmem>>, %arg13: memref<48x128xf32, #tpu.memory_space<vmem>>) attributes {dimension_semantics = [], scalar_prefetch = 0 : i64, scratch_operands = 0 : i64, tpu.core_type = #tpu.core_type<tc>} {
    %c0 = arith.constant 0 : index
    %c0_0 = arith.constant 0 : index
    %0 = vector.load %arg0[%c0, %c0_0] : memref<64x128xf32, #tpu.memory_space<vmem>>, vector<64x128xf32>
    %1 = vector.extract_strided_slice %0 {offsets = [0, 0], sizes = [64, 32], strides = [1, 1]} : vector<64x128xf32> to vector<64x32xf32>
    %2 = vector.extract_strided_slice %0 {offsets = [0, 32], sizes = [64, 32], strides = [1, 1]} : vector<64x128xf32> to vector<64x32xf32>
    %c0_1 = arith.constant 0 : index
    %c0_2 = arith.constant 0 : index
    %3 = vector.load %arg3[%c0_1, %c0_2] : memref<32x128xf32, #tpu.memory_space<vmem>>, vector<32x128xf32>
    %cst = arith.constant dense<0.000000e+00> : vector<64x128xf32>
    %4 = tpu.matmul %1, %3, %cst {dimension_numbers = #tpu.dot_dimension_numbers<[1], [0], [0], [1], [0, 0, 1, 1], [], []>} : vector<64x32xf32>, vector<32x128xf32>, vector<64x128xf32> -> vector<64x128xf32>
    %c0_3 = arith.constant 0 : index
    %c0_4 = arith.constant 0 : index
    %5 = vector.load %arg1[%c0_3, %c0_4] : memref<48x64xf32, #tpu.memory_space<vmem>>, vector<48x64xf32>
    %cst_5 = arith.constant dense<0.000000e+00> : vector<48x128xf32>
    %6 = tpu.matmul %5, %4, %cst_5 {dimension_numbers = #tpu.dot_dimension_numbers<[1], [0], [0], [1], [0, 0, 1, 1], [], []>} : vector<48x64xf32>, vector<64x128xf32>, vector<48x128xf32> -> vector<48x128xf32>
    %c0_6 = arith.constant 0 : index
    %c0_7 = arith.constant 0 : index
    %7 = vector.load %arg2[%c0_6, %c0_7] : memref<48x64xf32, #tpu.memory_space<vmem>>, vector<48x64xf32>
    %cst_8 = arith.constant dense<0.000000e+00> : vector<48x128xf32>
    %8 = tpu.matmul %7, %4, %cst_8 {dimension_numbers = #tpu.dot_dimension_numbers<[1], [0], [0], [1], [0, 0, 1, 1], [], []>} : vector<48x64xf32>, vector<64x128xf32>, vector<48x128xf32> -> vector<48x128xf32>
    %9 = vector.extract_strided_slice %6 {offsets = [0, 0], sizes = [48, 32], strides = [1, 1]} : vector<48x128xf32> to vector<48x32xf32>
    %10 = vector.extract_strided_slice %8 {offsets = [0, 32], sizes = [48, 32], strides = [1, 1]} : vector<48x128xf32> to vector<48x32xf32>
    %11 = arith.addf %9, %10 : vector<48x32xf32>
    %c0_9 = arith.constant 0 : index
    %c0_10 = arith.constant 0 : index
    %12 = vector.load %arg4[%c0_9, %c0_10] : memref<1x32xf32, #tpu.memory_space<vmem>>, vector<1x32xf32>
    %13 = vector.broadcast %12 : vector<1x32xf32> to vector<48x32xf32>
    %14 = arith.addf %11, %13 : vector<48x32xf32>
    %15 = vector.extract_strided_slice %6 {offsets = [0, 64], sizes = [48, 32], strides = [1, 1]} : vector<48x128xf32> to vector<48x32xf32>
    %16 = vector.extract_strided_slice %8 {offsets = [0, 96], sizes = [48, 32], strides = [1, 1]} : vector<48x128xf32> to vector<48x32xf32>
    %17 = arith.addf %15, %16 : vector<48x32xf32>
    %c0_11 = arith.constant 0 : index
    %c0_12 = arith.constant 0 : index
    %18 = vector.load %arg5[%c0_11, %c0_12] : memref<1x32xf32, #tpu.memory_space<vmem>>, vector<1x32xf32>
    %19 = vector.broadcast %18 : vector<1x32xf32> to vector<48x32xf32>
    %20 = arith.addf %17, %19 : vector<48x32xf32>
    %21 = math.tanh %14 : vector<48x32xf32>
    %22 = arith.negf %20 : vector<48x32xf32>
    %23 = math.exp %22 : vector<48x32xf32>
    %cst_13 = arith.constant 1.000000e+00 : f32
    %24 = vector.broadcast %cst_13 : f32 to vector<48x32xf32>
    %25 = arith.addf %24, %23 : vector<48x32xf32>
    %26 = arith.divf %24, %25 : vector<48x32xf32>
    %27 = arith.mulf %21, %26 : vector<48x32xf32>
    %c0_14 = arith.constant 0 : index
    %c0_15 = arith.constant 0 : index
    %28 = vector.load %arg6[%c0_14, %c0_15] : memref<32x128xf32, #tpu.memory_space<vmem>>, vector<32x128xf32>
    %cst_16 = arith.constant dense<0.000000e+00> : vector<48x128xf32>
    %29 = tpu.matmul %27, %28, %cst_16 {dimension_numbers = #tpu.dot_dimension_numbers<[1], [0], [0], [1], [0, 0, 1, 1], [], []>} : vector<48x32xf32>, vector<32x128xf32>, vector<48x128xf32> -> vector<48x128xf32>
    %c0_17 = arith.constant 0 : index
    %c0_18 = arith.constant 0 : index
    %30 = vector.load %arg7[%c0_17, %c0_18] : memref<1x128xf32, #tpu.memory_space<vmem>>, vector<1x128xf32>
    %31 = vector.broadcast %30 : vector<1x128xf32> to vector<48x128xf32>
    %32 = arith.addf %29, %31 : vector<48x128xf32>
    %33 = vector.extract_strided_slice %32 {offsets = [0, 0], sizes = [48, 32], strides = [1, 1]} : vector<48x128xf32> to vector<48x32xf32>
    %34 = vector.extract_strided_slice %32 {offsets = [0, 32], sizes = [48, 32], strides = [1, 1]} : vector<48x128xf32> to vector<48x32xf32>
    %35 = vector.extract_strided_slice %32 {offsets = [0, 64], sizes = [48, 64], strides = [1, 1]} : vector<48x128xf32> to vector<48x64xf32>
    %c0_19 = arith.constant 0 : index
    %c64 = arith.constant 64 : index
    %36 = vector.load %arg13[%c0_19, %c64] : memref<48x128xf32, #tpu.memory_space<vmem>>, vector<48x64xf32>
    tpu.vector_store %arg13[%c0_19, %c64], %35 {strides = array<i32>} : memref<48x128xf32, #tpu.memory_space<vmem>>, vector<48x64xf32>,
    %c0_20 = arith.constant 0 : index
    %c0_21 = arith.constant 0 : index
    %37 = vector.load %arg9[%c0_20, %c0_21] : memref<48x48xf32, #tpu.memory_space<vmem>>, vector<48x48xf32>
    %cst_22 = arith.constant dense<0.000000e+00> : vector<48x32xf32>
    %38 = tpu.matmul %37, %33, %cst_22 {dimension_numbers = #tpu.dot_dimension_numbers<[1], [0], [0], [1], [0, 0, 1, 1], [], []>} : vector<48x48xf32>, vector<48x32xf32>, vector<48x32xf32> -> vector<48x32xf32>
    %c0_23 = arith.constant 0 : index
    %c0_24 = arith.constant 0 : index
    %39 = vector.load %arg10[%c0_23, %c0_24] : memref<48x48xf32, #tpu.memory_space<vmem>>, vector<48x48xf32>
    %cst_25 = arith.constant dense<0.000000e+00> : vector<48x32xf32>
    %40 = tpu.matmul %39, %34, %cst_25 {dimension_numbers = #tpu.dot_dimension_numbers<[1], [0], [0], [1], [0, 0, 1, 1], [], []>} : vector<48x48xf32>, vector<48x32xf32>, vector<48x32xf32> -> vector<48x32xf32>
    %41 = arith.addf %38, %40 : vector<48x32xf32>
    %c0_26 = arith.constant 0 : index
    %c0_27 = arith.constant 0 : index
    %42 = vector.load %arg8[%c0_26, %c0_27] : memref<1x32xf32, #tpu.memory_space<vmem>>, vector<1x32xf32>
    %43 = vector.broadcast %42 : vector<1x32xf32> to vector<48x32xf32>
    %44 = arith.addf %41, %43 : vector<48x32xf32>
    %c0_28 = arith.constant 0 : index
    %c0_29 = arith.constant 0 : index
    %45 = vector.load %arg2[%c0_28, %c0_29] : memref<48x64xf32, #tpu.memory_space<vmem>>, vector<48x64xf32>
    %46 = arith.addf %1, %2 : vector<64x32xf32>
    %cst_30 = arith.constant dense<0.000000e+00> : vector<48x32xf32>
    %47 = tpu.matmul %45, %46, %cst_30 {dimension_numbers = #tpu.dot_dimension_numbers<[1], [0], [0], [1], [0, 0, 1, 1], [], []>} : vector<48x64xf32>, vector<64x32xf32>, vector<48x32xf32> -> vector<48x32xf32>
    %c0_31 = arith.constant 0 : index
    %c32 = arith.constant 32 : index
    %48 = vector.load %arg13[%c0_31, %c32] : memref<48x128xf32, #tpu.memory_space<vmem>>, vector<48x32xf32>
    tpu.vector_store %arg13[%c0_31, %c32], %47 {strides = array<i32>} : memref<48x128xf32, #tpu.memory_space<vmem>>, vector<48x32xf32>,
    %49 = arith.negf %44 : vector<48x32xf32>
    %50 = math.exp %49 : vector<48x32xf32>
    %cst_32 = arith.constant 1.000000e+00 : f32
    %51 = vector.broadcast %cst_32 : f32 to vector<48x32xf32>
    %52 = arith.addf %51, %50 : vector<48x32xf32>
    %53 = arith.divf %51, %52 : vector<48x32xf32>
    %54 = arith.mulf %44, %53 : vector<48x32xf32>
    %cst_33 = arith.constant 1.000000e+00 : f32
    %55 = vector.broadcast %cst_33 : f32 to vector<48x32xf32>
    %56 = arith.subf %55, %53 : vector<48x32xf32>
    %57 = arith.mulf %47, %56 : vector<48x32xf32>
    %58 = arith.addf %54, %57 : vector<48x32xf32>
    %c0_34 = arith.constant 0 : index
    %c0_35 = arith.constant 0 : index
    %59 = vector.load %arg11[%c0_34, %c0_35] : memref<24x32xf32, #tpu.memory_space<vmem>>, vector<24x32xf32>
    %c0_36 = arith.constant 0 : index
    %c0_37 = arith.constant 0 : index
    %60 = vector.load %arg12[%c0_36, %c0_37] : memref<24x32xf32, #tpu.memory_space<vmem>>, vector<24x32xf32>
    %61 = vector.extract_strided_slice %58 {offsets = [0, 0], sizes = [24, 32], strides = [1, 1]} : vector<48x32xf32> to vector<24x32xf32>
    %cst_38 = arith.constant dense<0.000000e+00> : vector<24xf32>
    %62 = vector.multi_reduction <add>, %61, %cst_38 [1] : vector<24x32xf32> to vector<24xf32>
    %63 = vector.shape_cast %62 : vector<24xf32> to vector<24x1xf32>
    %cst_39 = arith.constant dense<0.000000e+00> : vector<1xf32>
    %64 = vector.multi_reduction <add>, %63, %cst_39 [0] : vector<24x1xf32> to vector<1xf32>
    %65 = vector.shape_cast %64 : vector<1xf32> to vector<1x1xf32>
    %cst_40 = arith.constant 0.00130208337 : f32
    %66 = vector.broadcast %cst_40 : f32 to vector<1x1xf32>
    %67 = arith.mulf %65, %66 : vector<1x1xf32>
    %68 = vector.broadcast %67 : vector<1x1xf32> to vector<24x32xf32>
    %69 = arith.subf %61, %68 : vector<24x32xf32>
    %70 = arith.mulf %69, %69 : vector<24x32xf32>
    %cst_41 = arith.constant dense<0.000000e+00> : vector<24xf32>
    %71 = vector.multi_reduction <add>, %70, %cst_41 [1] : vector<24x32xf32> to vector<24xf32>
    %72 = vector.shape_cast %71 : vector<24xf32> to vector<24x1xf32>
    %cst_42 = arith.constant dense<0.000000e+00> : vector<1xf32>
    %73 = vector.multi_reduction <add>, %72, %cst_42 [0] : vector<24x1xf32> to vector<1xf32>
    %74 = vector.shape_cast %73 : vector<1xf32> to vector<1x1xf32>
    %cst_43 = arith.constant 0.00130208337 : f32
    %75 = vector.broadcast %cst_43 : f32 to vector<1x1xf32>
    %76 = arith.mulf %74, %75 : vector<1x1xf32>
    %cst_44 = arith.constant 9.99999974E-6 : f32
    %77 = vector.broadcast %cst_44 : f32 to vector<1x1xf32>
    %78 = arith.addf %76, %77 : vector<1x1xf32>
    %79 = math.rsqrt %78 : vector<1x1xf32>
    %80 = vector.broadcast %79 : vector<1x1xf32> to vector<24x32xf32>
    %81 = arith.mulf %69, %80 : vector<24x32xf32>
    %82 = arith.mulf %81, %59 : vector<24x32xf32>
    %83 = arith.addf %82, %60 : vector<24x32xf32>
    %c0_45 = arith.constant 0 : index
    %c0_46 = arith.constant 0 : index
    %84 = vector.load %arg13[%c0_45, %c0_46] : memref<48x128xf32, #tpu.memory_space<vmem>>, vector<24x32xf32>
    tpu.vector_store %arg13[%c0_45, %c0_46], %83 {strides = array<i32>} : memref<48x128xf32, #tpu.memory_space<vmem>>, vector<24x32xf32>,
    %85 = vector.extract_strided_slice %58 {offsets = [24, 0], sizes = [24, 32], strides = [1, 1]} : vector<48x32xf32> to vector<24x32xf32>
    %cst_47 = arith.constant dense<0.000000e+00> : vector<24xf32>
    %86 = vector.multi_reduction <add>, %85, %cst_47 [1] : vector<24x32xf32> to vector<24xf32>
    %87 = vector.shape_cast %86 : vector<24xf32> to vector<24x1xf32>
    %cst_48 = arith.constant dense<0.000000e+00> : vector<1xf32>
    %88 = vector.multi_reduction <add>, %87, %cst_48 [0] : vector<24x1xf32> to vector<1xf32>
    %89 = vector.shape_cast %88 : vector<1xf32> to vector<1x1xf32>
    %cst_49 = arith.constant 0.00130208337 : f32
    %90 = vector.broadcast %cst_49 : f32 to vector<1x1xf32>
    %91 = arith.mulf %89, %90 : vector<1x1xf32>
    %92 = vector.broadcast %91 : vector<1x1xf32> to vector<24x32xf32>
    %93 = arith.subf %85, %92 : vector<24x32xf32>
    %94 = arith.mulf %93, %93 : vector<24x32xf32>
    %cst_50 = arith.constant dense<0.000000e+00> : vector<24xf32>
    %95 = vector.multi_reduction <add>, %94, %cst_50 [1] : vector<24x32xf32> to vector<24xf32>
    %96 = vector.shape_cast %95 : vector<24xf32> to vector<24x1xf32>
    %cst_51 = arith.constant dense<0.000000e+00> : vector<1xf32>
    %97 = vector.multi_reduction <add>, %96, %cst_51 [0] : vector<24x1xf32> to vector<1xf32>
    %98 = vector.shape_cast %97 : vector<1xf32> to vector<1x1xf32>
    %cst_52 = arith.constant 0.00130208337 : f32
    %99 = vector.broadcast %cst_52 : f32 to vector<1x1xf32>
    %100 = arith.mulf %98, %99 : vector<1x1xf32>
    %cst_53 = arith.constant 9.99999974E-6 : f32
    %101 = vector.broadcast %cst_53 : f32 to vector<1x1xf32>
    %102 = arith.addf %100, %101 : vector<1x1xf32>
    %103 = math.rsqrt %102 : vector<1x1xf32>
    %104 = vector.broadcast %103 : vector<1x1xf32> to vector<24x32xf32>
    %105 = arith.mulf %93, %104 : vector<24x32xf32>
    %106 = arith.mulf %105, %59 : vector<24x32xf32>
    %107 = arith.addf %106, %60 : vector<24x32xf32>
    %c24 = arith.constant 24 : index
    %c0_54 = arith.constant 0 : index
    %108 = vector.load %arg13[%c24, %c0_54] : memref<48x128xf32, #tpu.memory_space<vmem>>, vector<24x32xf32>
    tpu.vector_store %arg13[%c24, %c0_54], %107 {strides = array<i32>} : memref<48x128xf32, #tpu.memory_space<vmem>>, vector<24x32xf32>,
    return
  }
}

module attributes {stable_mosaic.version = 11 : i64} {
  func.func @_layer_kernel(%arg0: memref<48x128xf32, #tpu.memory_space<vmem>>, %arg1: memref<16x48xf32, #tpu.memory_space<vmem>>, %arg2: memref<16x48xf32, #tpu.memory_space<vmem>>, %arg3: memref<32x128xf32, #tpu.memory_space<vmem>>, %arg4: memref<1x32xf32, #tpu.memory_space<vmem>>, %arg5: memref<1x32xf32, #tpu.memory_space<vmem>>, %arg6: memref<32x128xf32, #tpu.memory_space<vmem>>, %arg7: memref<1x128xf32, #tpu.memory_space<vmem>>, %arg8: memref<1x32xf32, #tpu.memory_space<vmem>>, %arg9: memref<16x16xf32, #tpu.memory_space<vmem>>, %arg10: memref<16x16xf32, #tpu.memory_space<vmem>>, %arg11: memref<8x32xf32, #tpu.memory_space<vmem>>, %arg12: memref<8x32xf32, #tpu.memory_space<vmem>>, %arg13: memref<16x128xf32, #tpu.memory_space<vmem>>) attributes {dimension_semantics = [], scalar_prefetch = 0 : i64, scratch_operands = 0 : i64, tpu.core_type = #tpu.core_type<tc>} {
    %c0 = arith.constant 0 : index
    %c0_0 = arith.constant 0 : index
    %0 = vector.load %arg0[%c0, %c0_0] : memref<48x128xf32, #tpu.memory_space<vmem>>, vector<48x128xf32>
    %1 = vector.extract_strided_slice %0 {offsets = [0, 0], sizes = [48, 32], strides = [1, 1]} : vector<48x128xf32> to vector<48x32xf32>
    %2 = vector.extract_strided_slice %0 {offsets = [0, 32], sizes = [48, 32], strides = [1, 1]} : vector<48x128xf32> to vector<48x32xf32>
    %c0_1 = arith.constant 0 : index
    %c0_2 = arith.constant 0 : index
    %3 = vector.load %arg3[%c0_1, %c0_2] : memref<32x128xf32, #tpu.memory_space<vmem>>, vector<32x128xf32>
    %cst = arith.constant dense<0.000000e+00> : vector<48x128xf32>
    %4 = tpu.matmul %1, %3, %cst {dimension_numbers = #tpu.dot_dimension_numbers<[1], [0], [0], [1], [0, 0, 1, 1], [], []>} : vector<48x32xf32>, vector<32x128xf32>, vector<48x128xf32> -> vector<48x128xf32>
    %c0_3 = arith.constant 0 : index
    %c0_4 = arith.constant 0 : index
    %5 = vector.load %arg1[%c0_3, %c0_4] : memref<16x48xf32, #tpu.memory_space<vmem>>, vector<16x48xf32>
    %cst_5 = arith.constant dense<0.000000e+00> : vector<16x128xf32>
    %6 = tpu.matmul %5, %4, %cst_5 {dimension_numbers = #tpu.dot_dimension_numbers<[1], [0], [0], [1], [0, 0, 1, 1], [], []>} : vector<16x48xf32>, vector<48x128xf32>, vector<16x128xf32> -> vector<16x128xf32>
    %c0_6 = arith.constant 0 : index
    %c0_7 = arith.constant 0 : index
    %7 = vector.load %arg2[%c0_6, %c0_7] : memref<16x48xf32, #tpu.memory_space<vmem>>, vector<16x48xf32>
    %cst_8 = arith.constant dense<0.000000e+00> : vector<16x128xf32>
    %8 = tpu.matmul %7, %4, %cst_8 {dimension_numbers = #tpu.dot_dimension_numbers<[1], [0], [0], [1], [0, 0, 1, 1], [], []>} : vector<16x48xf32>, vector<48x128xf32>, vector<16x128xf32> -> vector<16x128xf32>
    %9 = vector.extract_strided_slice %6 {offsets = [0, 0], sizes = [16, 32], strides = [1, 1]} : vector<16x128xf32> to vector<16x32xf32>
    %10 = vector.extract_strided_slice %8 {offsets = [0, 32], sizes = [16, 32], strides = [1, 1]} : vector<16x128xf32> to vector<16x32xf32>
    %11 = arith.addf %9, %10 : vector<16x32xf32>
    %c0_9 = arith.constant 0 : index
    %c0_10 = arith.constant 0 : index
    %12 = vector.load %arg4[%c0_9, %c0_10] : memref<1x32xf32, #tpu.memory_space<vmem>>, vector<1x32xf32>
    %13 = vector.broadcast %12 : vector<1x32xf32> to vector<16x32xf32>
    %14 = arith.addf %11, %13 : vector<16x32xf32>
    %15 = vector.extract_strided_slice %6 {offsets = [0, 64], sizes = [16, 32], strides = [1, 1]} : vector<16x128xf32> to vector<16x32xf32>
    %16 = vector.extract_strided_slice %8 {offsets = [0, 96], sizes = [16, 32], strides = [1, 1]} : vector<16x128xf32> to vector<16x32xf32>
    %17 = arith.addf %15, %16 : vector<16x32xf32>
    %c0_11 = arith.constant 0 : index
    %c0_12 = arith.constant 0 : index
    %18 = vector.load %arg5[%c0_11, %c0_12] : memref<1x32xf32, #tpu.memory_space<vmem>>, vector<1x32xf32>
    %19 = vector.broadcast %18 : vector<1x32xf32> to vector<16x32xf32>
    %20 = arith.addf %17, %19 : vector<16x32xf32>
    %21 = math.tanh %14 : vector<16x32xf32>
    %22 = arith.negf %20 : vector<16x32xf32>
    %23 = math.exp %22 : vector<16x32xf32>
    %cst_13 = arith.constant 1.000000e+00 : f32
    %24 = vector.broadcast %cst_13 : f32 to vector<16x32xf32>
    %25 = arith.addf %24, %23 : vector<16x32xf32>
    %26 = arith.divf %24, %25 : vector<16x32xf32>
    %27 = arith.mulf %21, %26 : vector<16x32xf32>
    %c0_14 = arith.constant 0 : index
    %c0_15 = arith.constant 0 : index
    %28 = vector.load %arg6[%c0_14, %c0_15] : memref<32x128xf32, #tpu.memory_space<vmem>>, vector<32x128xf32>
    %cst_16 = arith.constant dense<0.000000e+00> : vector<16x128xf32>
    %29 = tpu.matmul %27, %28, %cst_16 {dimension_numbers = #tpu.dot_dimension_numbers<[1], [0], [0], [1], [0, 0, 1, 1], [], []>} : vector<16x32xf32>, vector<32x128xf32>, vector<16x128xf32> -> vector<16x128xf32>
    %c0_17 = arith.constant 0 : index
    %c0_18 = arith.constant 0 : index
    %30 = vector.load %arg7[%c0_17, %c0_18] : memref<1x128xf32, #tpu.memory_space<vmem>>, vector<1x128xf32>
    %31 = vector.broadcast %30 : vector<1x128xf32> to vector<16x128xf32>
    %32 = arith.addf %29, %31 : vector<16x128xf32>
    %33 = vector.extract_strided_slice %32 {offsets = [0, 0], sizes = [16, 32], strides = [1, 1]} : vector<16x128xf32> to vector<16x32xf32>
    %34 = vector.extract_strided_slice %32 {offsets = [0, 32], sizes = [16, 32], strides = [1, 1]} : vector<16x128xf32> to vector<16x32xf32>
    %35 = vector.extract_strided_slice %32 {offsets = [0, 64], sizes = [16, 64], strides = [1, 1]} : vector<16x128xf32> to vector<16x64xf32>
    %c0_19 = arith.constant 0 : index
    %c64 = arith.constant 64 : index
    %36 = vector.load %arg13[%c0_19, %c64] : memref<16x128xf32, #tpu.memory_space<vmem>>, vector<16x64xf32>
    tpu.vector_store %arg13[%c0_19, %c64], %35 {strides = array<i32>} : memref<16x128xf32, #tpu.memory_space<vmem>>, vector<16x64xf32>,
    %c0_20 = arith.constant 0 : index
    %c0_21 = arith.constant 0 : index
    %37 = vector.load %arg9[%c0_20, %c0_21] : memref<16x16xf32, #tpu.memory_space<vmem>>, vector<16x16xf32>
    %cst_22 = arith.constant dense<0.000000e+00> : vector<16x32xf32>
    %38 = tpu.matmul %37, %33, %cst_22 {dimension_numbers = #tpu.dot_dimension_numbers<[1], [0], [0], [1], [0, 0, 1, 1], [], []>} : vector<16x16xf32>, vector<16x32xf32>, vector<16x32xf32> -> vector<16x32xf32>
    %c0_23 = arith.constant 0 : index
    %c0_24 = arith.constant 0 : index
    %39 = vector.load %arg10[%c0_23, %c0_24] : memref<16x16xf32, #tpu.memory_space<vmem>>, vector<16x16xf32>
    %cst_25 = arith.constant dense<0.000000e+00> : vector<16x32xf32>
    %40 = tpu.matmul %39, %34, %cst_25 {dimension_numbers = #tpu.dot_dimension_numbers<[1], [0], [0], [1], [0, 0, 1, 1], [], []>} : vector<16x16xf32>, vector<16x32xf32>, vector<16x32xf32> -> vector<16x32xf32>
    %41 = arith.addf %38, %40 : vector<16x32xf32>
    %c0_26 = arith.constant 0 : index
    %c0_27 = arith.constant 0 : index
    %42 = vector.load %arg8[%c0_26, %c0_27] : memref<1x32xf32, #tpu.memory_space<vmem>>, vector<1x32xf32>
    %43 = vector.broadcast %42 : vector<1x32xf32> to vector<16x32xf32>
    %44 = arith.addf %41, %43 : vector<16x32xf32>
    %c0_28 = arith.constant 0 : index
    %c0_29 = arith.constant 0 : index
    %45 = vector.load %arg2[%c0_28, %c0_29] : memref<16x48xf32, #tpu.memory_space<vmem>>, vector<16x48xf32>
    %46 = arith.addf %1, %2 : vector<48x32xf32>
    %cst_30 = arith.constant dense<0.000000e+00> : vector<16x32xf32>
    %47 = tpu.matmul %45, %46, %cst_30 {dimension_numbers = #tpu.dot_dimension_numbers<[1], [0], [0], [1], [0, 0, 1, 1], [], []>} : vector<16x48xf32>, vector<48x32xf32>, vector<16x32xf32> -> vector<16x32xf32>
    %c0_31 = arith.constant 0 : index
    %c32 = arith.constant 32 : index
    %48 = vector.load %arg13[%c0_31, %c32] : memref<16x128xf32, #tpu.memory_space<vmem>>, vector<16x32xf32>
    tpu.vector_store %arg13[%c0_31, %c32], %47 {strides = array<i32>} : memref<16x128xf32, #tpu.memory_space<vmem>>, vector<16x32xf32>,
    %49 = arith.negf %44 : vector<16x32xf32>
    %50 = math.exp %49 : vector<16x32xf32>
    %cst_32 = arith.constant 1.000000e+00 : f32
    %51 = vector.broadcast %cst_32 : f32 to vector<16x32xf32>
    %52 = arith.addf %51, %50 : vector<16x32xf32>
    %53 = arith.divf %51, %52 : vector<16x32xf32>
    %54 = arith.mulf %44, %53 : vector<16x32xf32>
    %cst_33 = arith.constant 1.000000e+00 : f32
    %55 = vector.broadcast %cst_33 : f32 to vector<16x32xf32>
    %56 = arith.subf %55, %53 : vector<16x32xf32>
    %57 = arith.mulf %47, %56 : vector<16x32xf32>
    %58 = arith.addf %54, %57 : vector<16x32xf32>
    %c0_34 = arith.constant 0 : index
    %c0_35 = arith.constant 0 : index
    %59 = vector.load %arg11[%c0_34, %c0_35] : memref<8x32xf32, #tpu.memory_space<vmem>>, vector<8x32xf32>
    %c0_36 = arith.constant 0 : index
    %c0_37 = arith.constant 0 : index
    %60 = vector.load %arg12[%c0_36, %c0_37] : memref<8x32xf32, #tpu.memory_space<vmem>>, vector<8x32xf32>
    %61 = vector.extract_strided_slice %58 {offsets = [0, 0], sizes = [8, 32], strides = [1, 1]} : vector<16x32xf32> to vector<8x32xf32>
    %cst_38 = arith.constant dense<0.000000e+00> : vector<8xf32>
    %62 = vector.multi_reduction <add>, %61, %cst_38 [1] : vector<8x32xf32> to vector<8xf32>
    %63 = vector.shape_cast %62 : vector<8xf32> to vector<8x1xf32>
    %cst_39 = arith.constant dense<0.000000e+00> : vector<1xf32>
    %64 = vector.multi_reduction <add>, %63, %cst_39 [0] : vector<8x1xf32> to vector<1xf32>
    %65 = vector.shape_cast %64 : vector<1xf32> to vector<1x1xf32>
    %cst_40 = arith.constant 3.906250e-03 : f32
    %66 = vector.broadcast %cst_40 : f32 to vector<1x1xf32>
    %67 = arith.mulf %65, %66 : vector<1x1xf32>
    %68 = vector.broadcast %67 : vector<1x1xf32> to vector<8x32xf32>
    %69 = arith.subf %61, %68 : vector<8x32xf32>
    %70 = arith.mulf %69, %69 : vector<8x32xf32>
    %cst_41 = arith.constant dense<0.000000e+00> : vector<8xf32>
    %71 = vector.multi_reduction <add>, %70, %cst_41 [1] : vector<8x32xf32> to vector<8xf32>
    %72 = vector.shape_cast %71 : vector<8xf32> to vector<8x1xf32>
    %cst_42 = arith.constant dense<0.000000e+00> : vector<1xf32>
    %73 = vector.multi_reduction <add>, %72, %cst_42 [0] : vector<8x1xf32> to vector<1xf32>
    %74 = vector.shape_cast %73 : vector<1xf32> to vector<1x1xf32>
    %cst_43 = arith.constant 3.906250e-03 : f32
    %75 = vector.broadcast %cst_43 : f32 to vector<1x1xf32>
    %76 = arith.mulf %74, %75 : vector<1x1xf32>
    %cst_44 = arith.constant 9.99999974E-6 : f32
    %77 = vector.broadcast %cst_44 : f32 to vector<1x1xf32>
    %78 = arith.addf %76, %77 : vector<1x1xf32>
    %79 = math.rsqrt %78 : vector<1x1xf32>
    %80 = vector.broadcast %79 : vector<1x1xf32> to vector<8x32xf32>
    %81 = arith.mulf %69, %80 : vector<8x32xf32>
    %82 = arith.mulf %81, %59 : vector<8x32xf32>
    %83 = arith.addf %82, %60 : vector<8x32xf32>
    %c0_45 = arith.constant 0 : index
    %c0_46 = arith.constant 0 : index
    %84 = vector.load %arg13[%c0_45, %c0_46] : memref<16x128xf32, #tpu.memory_space<vmem>>, vector<8x32xf32>
    tpu.vector_store %arg13[%c0_45, %c0_46], %83 {strides = array<i32>} : memref<16x128xf32, #tpu.memory_space<vmem>>, vector<8x32xf32>,
    %85 = vector.extract_strided_slice %58 {offsets = [8, 0], sizes = [8, 32], strides = [1, 1]} : vector<16x32xf32> to vector<8x32xf32>
    %cst_47 = arith.constant dense<0.000000e+00> : vector<8xf32>
    %86 = vector.multi_reduction <add>, %85, %cst_47 [1] : vector<8x32xf32> to vector<8xf32>
    %87 = vector.shape_cast %86 : vector<8xf32> to vector<8x1xf32>
    %cst_48 = arith.constant dense<0.000000e+00> : vector<1xf32>
    %88 = vector.multi_reduction <add>, %87, %cst_48 [0] : vector<8x1xf32> to vector<1xf32>
    %89 = vector.shape_cast %88 : vector<1xf32> to vector<1x1xf32>
    %cst_49 = arith.constant 3.906250e-03 : f32
    %90 = vector.broadcast %cst_49 : f32 to vector<1x1xf32>
    %91 = arith.mulf %89, %90 : vector<1x1xf32>
    %92 = vector.broadcast %91 : vector<1x1xf32> to vector<8x32xf32>
    %93 = arith.subf %85, %92 : vector<8x32xf32>
    %94 = arith.mulf %93, %93 : vector<8x32xf32>
    %cst_50 = arith.constant dense<0.000000e+00> : vector<8xf32>
    %95 = vector.multi_reduction <add>, %94, %cst_50 [1] : vector<8x32xf32> to vector<8xf32>
    %96 = vector.shape_cast %95 : vector<8xf32> to vector<8x1xf32>
    %cst_51 = arith.constant dense<0.000000e+00> : vector<1xf32>
    %97 = vector.multi_reduction <add>, %96, %cst_51 [0] : vector<8x1xf32> to vector<1xf32>
    %98 = vector.shape_cast %97 : vector<1xf32> to vector<1x1xf32>
    %cst_52 = arith.constant 3.906250e-03 : f32
    %99 = vector.broadcast %cst_52 : f32 to vector<1x1xf32>
    %100 = arith.mulf %98, %99 : vector<1x1xf32>
    %cst_53 = arith.constant 9.99999974E-6 : f32
    %101 = vector.broadcast %cst_53 : f32 to vector<1x1xf32>
    %102 = arith.addf %100, %101 : vector<1x1xf32>
    %103 = math.rsqrt %102 : vector<1x1xf32>
    %104 = vector.broadcast %103 : vector<1x1xf32> to vector<8x32xf32>
    %105 = arith.mulf %93, %104 : vector<8x32xf32>
    %106 = arith.mulf %105, %59 : vector<8x32xf32>
    %107 = arith.addf %106, %60 : vector<8x32xf32>
    %c8 = arith.constant 8 : index
    %c0_54 = arith.constant 0 : index
    %108 = vector.load %arg13[%c8, %c0_54] : memref<16x128xf32, #tpu.memory_space<vmem>>, vector<8x32xf32>
    tpu.vector_store %arg13[%c8, %c0_54], %107 {strides = array<i32>} : memref<16x128xf32, #tpu.memory_space<vmem>>, vector<8x32xf32>,
    return
  }
}

module attributes {stable_mosaic.version = 11 : i64} {
  func.func @_end_kernel(%arg0: memref<16x128xf32, #tpu.memory_space<vmem>>, %arg1: memref<128x128xf32, #tpu.memory_space<vmem>>, %arg2: memref<1x128xf32, #tpu.memory_space<vmem>>, %arg3: memref<128x8xf32, #tpu.memory_space<vmem>>, %arg4: memref<1x8xf32, #tpu.memory_space<vmem>>, %arg5: memref<16x8xf32, #tpu.memory_space<vmem>>) attributes {dimension_semantics = [], scalar_prefetch = 0 : i64, scratch_operands = 0 : i64, tpu.core_type = #tpu.core_type<tc>} {
    %c0 = arith.constant 0 : index
    %c0_0 = arith.constant 0 : index
    %0 = vector.load %arg0[%c0, %c0_0] : memref<16x128xf32, #tpu.memory_space<vmem>>, vector<16x128xf32>
    %cst = arith.constant 0.000000e+00 : f32
    %1 = vector.broadcast %cst : f32 to vector<16x128xf32>
    %2 = arith.maximumf %0, %1 : vector<16x128xf32>
    %c0_1 = arith.constant 0 : index
    %c0_2 = arith.constant 0 : index
    %3 = vector.load %arg1[%c0_1, %c0_2] : memref<128x128xf32, #tpu.memory_space<vmem>>, vector<128x128xf32>
    %cst_3 = arith.constant dense<0.000000e+00> : vector<16x128xf32>
    %4 = tpu.matmul %2, %3, %cst_3 {dimension_numbers = #tpu.dot_dimension_numbers<[1], [0], [0], [1], [0, 0, 1, 1], [], []>} : vector<16x128xf32>, vector<128x128xf32>, vector<16x128xf32> -> vector<16x128xf32>
    %c0_4 = arith.constant 0 : index
    %c0_5 = arith.constant 0 : index
    %5 = vector.load %arg2[%c0_4, %c0_5] : memref<1x128xf32, #tpu.memory_space<vmem>>, vector<1x128xf32>
    %6 = vector.broadcast %5 : vector<1x128xf32> to vector<16x128xf32>
    %7 = arith.addf %4, %6 : vector<16x128xf32>
    %cst_6 = arith.constant 0.000000e+00 : f32
    %8 = vector.broadcast %cst_6 : f32 to vector<16x128xf32>
    %9 = arith.maximumf %7, %8 : vector<16x128xf32>
    %c0_7 = arith.constant 0 : index
    %c0_8 = arith.constant 0 : index
    %10 = vector.load %arg3[%c0_7, %c0_8] : memref<128x8xf32, #tpu.memory_space<vmem>>, vector<128x8xf32>
    %cst_9 = arith.constant dense<0.000000e+00> : vector<16x8xf32>
    %11 = tpu.matmul %9, %10, %cst_9 {dimension_numbers = #tpu.dot_dimension_numbers<[1], [0], [0], [1], [0, 0, 1, 1], [], []>} : vector<16x128xf32>, vector<128x8xf32>, vector<16x8xf32> -> vector<16x8xf32>
    %c0_10 = arith.constant 0 : index
    %c0_11 = arith.constant 0 : index
    %12 = vector.load %arg4[%c0_10, %c0_11] : memref<1x8xf32, #tpu.memory_space<vmem>>, vector<1x8xf32>
    %13 = vector.broadcast %12 : vector<1x8xf32> to vector<16x8xf32>
    %14 = arith.addf %11, %13 : vector<16x8xf32>
    %15 = arith.negf %14 : vector<16x8xf32>
    %16 = math.exp %15 : vector<16x8xf32>
    %cst_12 = arith.constant 1.000000e+00 : f32
    %17 = vector.broadcast %cst_12 : f32 to vector<16x8xf32>
    %18 = arith.addf %17, %16 : vector<16x8xf32>
    %19 = arith.divf %17, %18 : vector<16x8xf32>
    %c0_13 = arith.constant 0 : index
    %c0_14 = arith.constant 0 : index
    %20 = vector.load %arg5[%c0_13, %c0_14] : memref<16x8xf32, #tpu.memory_space<vmem>>, vector<16x8xf32>
    tpu.vector_store %arg5[%c0_13, %c0_14], %19 {strides = array<i32>} : memref<16x8xf32, #tpu.memory_space<vmem>>, vector<16x8xf32>,
    return
  }
}

module attributes {stable_mosaic.version = 11 : i64} {
  func.func @_sir_kernel(%arg0: memref<4x2x8xf32, #tpu.memory_space<vmem>>, %arg1: memref<4x2x8xf32, #tpu.memory_space<vmem>>, %arg2: memref<8x8xf32, #tpu.memory_space<vmem>>, %arg3: memref<8x8xf32, #tpu.memory_space<vmem>>, %arg4: memref<2x8xf32, #tpu.memory_space<vmem>>, %arg5: memref<2x8xf32, #tpu.memory_space<vmem>>, %arg6: memref<2x8xf32, #tpu.memory_space<vmem>>, %arg7: memref<4x2x8xf32, #tpu.memory_space<vmem>>) attributes {dimension_semantics = [], scalar_prefetch = 0 : i64, scratch_operands = 0 : i64, tpu.core_type = #tpu.core_type<tc>} {
    %c0 = arith.constant 0 : index
    %c0_0 = arith.constant 0 : index
    %0 = vector.load %arg2[%c0, %c0_0] : memref<8x8xf32, #tpu.memory_space<vmem>>, vector<8x8xf32>
    %c0_1 = arith.constant 0 : index
    %c0_2 = arith.constant 0 : index
    %1 = vector.load %arg3[%c0_1, %c0_2] : memref<8x8xf32, #tpu.memory_space<vmem>>, vector<8x8xf32>
    %c0_3 = arith.constant 0 : index
    %c0_4 = arith.constant 0 : index
    %2 = vector.load %arg4[%c0_3, %c0_4] : memref<2x8xf32, #tpu.memory_space<vmem>>, vector<2x8xf32>
    %c0_5 = arith.constant 0 : index
    %c0_6 = arith.constant 0 : index
    %3 = vector.load %arg5[%c0_5, %c0_6] : memref<2x8xf32, #tpu.memory_space<vmem>>, vector<2x8xf32>
    %c0_7 = arith.constant 0 : index
    %c0_8 = arith.constant 0 : index
    %4 = vector.load %arg6[%c0_7, %c0_8] : memref<2x8xf32, #tpu.memory_space<vmem>>, vector<2x8xf32>
    %5 = arith.addf %2, %3 : vector<2x8xf32>
    %6 = arith.addf %5, %4 : vector<2x8xf32>
    %cst = arith.constant 9.99999996E-13 : f32
    %7 = vector.broadcast %cst : f32 to vector<2x8xf32>
    %8 = arith.maximumf %6, %7 : vector<2x8xf32>
    %cst_9 = arith.constant 1.000000e+00 : f32
    %9 = vector.broadcast %cst_9 : f32 to vector<2x8xf32>
    %10 = arith.divf %9, %8 : vector<2x8xf32>
    %11 = arith.mulf %3, %10 : vector<2x8xf32>
    %cst_10 = arith.constant dense<0.000000e+00> : vector<2x8xf32>
    %12 = tpu.matmul %11, %0, %cst_10 {dimension_numbers = #tpu.dot_dimension_numbers<[1], [0], [0], [1], [0, 0, 1, 1], [], []>} : vector<2x8xf32>, vector<8x8xf32>, vector<2x8xf32> -> vector<2x8xf32>
    %cst_11 = arith.constant dense<0.000000e+00> : vector<2x8xf32>
    %13 = tpu.matmul %3, %1, %cst_11 {dimension_numbers = #tpu.dot_dimension_numbers<[1], [0], [0], [1], [0, 0, 1, 1], [], []>} : vector<2x8xf32>, vector<8x8xf32>, vector<2x8xf32> -> vector<2x8xf32>
    %14 = arith.mulf %13, %10 : vector<2x8xf32>
    %15 = arith.addf %12, %14 : vector<2x8xf32>
    %c0_12 = arith.constant 0 : index
    %c0_13 = arith.constant 0 : index
    %c0_14 = arith.constant 0 : index
    %16 = vector.load %arg0[%c0_12, %c0_13, %c0_14] : memref<4x2x8xf32, #tpu.memory_space<vmem>>, vector<1x2x8xf32>
    %17 = vector.shape_cast %16 : vector<1x2x8xf32> to vector<2x8xf32>
    %18 = arith.mulf %17, %15 : vector<2x8xf32>
    %c0_15 = arith.constant 0 : index
    %c0_16 = arith.constant 0 : index
    %c0_17 = arith.constant 0 : index
    %19 = vector.load %arg1[%c0_15, %c0_16, %c0_17] : memref<4x2x8xf32, #tpu.memory_space<vmem>>, vector<1x2x8xf32>
    %20 = vector.shape_cast %19 : vector<1x2x8xf32> to vector<2x8xf32>
    %21 = arith.mulf %3, %20 : vector<2x8xf32>
    %22 = arith.addf %21, %4 : vector<2x8xf32>
    %23 = arith.addf %3, %18 : vector<2x8xf32>
    %24 = arith.subf %23, %21 : vector<2x8xf32>
    %25 = arith.subf %2, %18 : vector<2x8xf32>
    %c0_18 = arith.constant 0 : index
    %c0_19 = arith.constant 0 : index
    %c0_20 = arith.constant 0 : index
    %26 = vector.load %arg7[%c0_18, %c0_19, %c0_20] : memref<4x2x8xf32, #tpu.memory_space<vmem>>, vector<1x2x8xf32>
    %27 = vector.shape_cast %26 : vector<1x2x8xf32> to vector<2x8xf32>
    %28 = vector.shape_cast %18 : vector<2x8xf32> to vector<1x2x8xf32>
    tpu.vector_store %arg7[%c0_18, %c0_19, %c0_20], %28 {strides = array<i32>} : memref<4x2x8xf32, #tpu.memory_space<vmem>>, vector<1x2x8xf32>,
    %29 = arith.addf %25, %24 : vector<2x8xf32>
    %30 = arith.addf %29, %22 : vector<2x8xf32>
    %cst_21 = arith.constant 9.99999996E-13 : f32
    %31 = vector.broadcast %cst_21 : f32 to vector<2x8xf32>
    %32 = arith.maximumf %30, %31 : vector<2x8xf32>
    %cst_22 = arith.constant 1.000000e+00 : f32
    %33 = vector.broadcast %cst_22 : f32 to vector<2x8xf32>
    %34 = arith.divf %33, %32 : vector<2x8xf32>
    %35 = arith.mulf %24, %34 : vector<2x8xf32>
    %cst_23 = arith.constant dense<0.000000e+00> : vector<2x8xf32>
    %36 = tpu.matmul %35, %0, %cst_23 {dimension_numbers = #tpu.dot_dimension_numbers<[1], [0], [0], [1], [0, 0, 1, 1], [], []>} : vector<2x8xf32>, vector<8x8xf32>, vector<2x8xf32> -> vector<2x8xf32>
    %cst_24 = arith.constant dense<0.000000e+00> : vector<2x8xf32>
    %37 = tpu.matmul %24, %1, %cst_24 {dimension_numbers = #tpu.dot_dimension_numbers<[1], [0], [0], [1], [0, 0, 1, 1], [], []>} : vector<2x8xf32>, vector<8x8xf32>, vector<2x8xf32> -> vector<2x8xf32>
    %38 = arith.mulf %37, %34 : vector<2x8xf32>
    %39 = arith.addf %36, %38 : vector<2x8xf32>
    %c1 = arith.constant 1 : index
    %c0_25 = arith.constant 0 : index
    %c0_26 = arith.constant 0 : index
    %40 = vector.load %arg0[%c1, %c0_25, %c0_26] : memref<4x2x8xf32, #tpu.memory_space<vmem>>, vector<1x2x8xf32>
    %41 = vector.shape_cast %40 : vector<1x2x8xf32> to vector<2x8xf32>
    %42 = arith.mulf %41, %39 : vector<2x8xf32>
    %c1_27 = arith.constant 1 : index
    %c0_28 = arith.constant 0 : index
    %c0_29 = arith.constant 0 : index
    %43 = vector.load %arg1[%c1_27, %c0_28, %c0_29] : memref<4x2x8xf32, #tpu.memory_space<vmem>>, vector<1x2x8xf32>
    %44 = vector.shape_cast %43 : vector<1x2x8xf32> to vector<2x8xf32>
    %45 = arith.mulf %24, %44 : vector<2x8xf32>
    %46 = arith.addf %45, %22 : vector<2x8xf32>
    %47 = arith.addf %24, %42 : vector<2x8xf32>
    %48 = arith.subf %47, %45 : vector<2x8xf32>
    %49 = arith.subf %25, %42 : vector<2x8xf32>
    %c1_30 = arith.constant 1 : index
    %c0_31 = arith.constant 0 : index
    %c0_32 = arith.constant 0 : index
    %50 = vector.load %arg7[%c1_30, %c0_31, %c0_32] : memref<4x2x8xf32, #tpu.memory_space<vmem>>, vector<1x2x8xf32>
    %51 = vector.shape_cast %50 : vector<1x2x8xf32> to vector<2x8xf32>
    %52 = vector.shape_cast %42 : vector<2x8xf32> to vector<1x2x8xf32>
    tpu.vector_store %arg7[%c1_30, %c0_31, %c0_32], %52 {strides = array<i32>} : memref<4x2x8xf32, #tpu.memory_space<vmem>>, vector<1x2x8xf32>,
    %53 = arith.addf %49, %48 : vector<2x8xf32>
    %54 = arith.addf %53, %46 : vector<2x8xf32>
    %cst_33 = arith.constant 9.99999996E-13 : f32
    %55 = vector.broadcast %cst_33 : f32 to vector<2x8xf32>
    %56 = arith.maximumf %54, %55 : vector<2x8xf32>
    %cst_34 = arith.constant 1.000000e+00 : f32
    %57 = vector.broadcast %cst_34 : f32 to vector<2x8xf32>
    %58 = arith.divf %57, %56 : vector<2x8xf32>
    %59 = arith.mulf %48, %58 : vector<2x8xf32>
    %cst_35 = arith.constant dense<0.000000e+00> : vector<2x8xf32>
    %60 = tpu.matmul %59, %0, %cst_35 {dimension_numbers = #tpu.dot_dimension_numbers<[1], [0], [0], [1], [0, 0, 1, 1], [], []>} : vector<2x8xf32>, vector<8x8xf32>, vector<2x8xf32> -> vector<2x8xf32>
    %cst_36 = arith.constant dense<0.000000e+00> : vector<2x8xf32>
    %61 = tpu.matmul %48, %1, %cst_36 {dimension_numbers = #tpu.dot_dimension_numbers<[1], [0], [0], [1], [0, 0, 1, 1], [], []>} : vector<2x8xf32>, vector<8x8xf32>, vector<2x8xf32> -> vector<2x8xf32>
    %62 = arith.mulf %61, %58 : vector<2x8xf32>
    %63 = arith.addf %60, %62 : vector<2x8xf32>
    %c2 = arith.constant 2 : index
    %c0_37 = arith.constant 0 : index
    %c0_38 = arith.constant 0 : index
    %64 = vector.load %arg0[%c2, %c0_37, %c0_38] : memref<4x2x8xf32, #tpu.memory_space<vmem>>, vector<1x2x8xf32>
    %65 = vector.shape_cast %64 : vector<1x2x8xf32> to vector<2x8xf32>
    %66 = arith.mulf %65, %63 : vector<2x8xf32>
    %c2_39 = arith.constant 2 : index
    %c0_40 = arith.constant 0 : index
    %c0_41 = arith.constant 0 : index
    %67 = vector.load %arg1[%c2_39, %c0_40, %c0_41] : memref<4x2x8xf32, #tpu.memory_space<vmem>>, vector<1x2x8xf32>
    %68 = vector.shape_cast %67 : vector<1x2x8xf32> to vector<2x8xf32>
    %69 = arith.mulf %48, %68 : vector<2x8xf32>
    %70 = arith.addf %69, %46 : vector<2x8xf32>
    %71 = arith.addf %48, %66 : vector<2x8xf32>
    %72 = arith.subf %71, %69 : vector<2x8xf32>
    %73 = arith.subf %49, %66 : vector<2x8xf32>
    %c2_42 = arith.constant 2 : index
    %c0_43 = arith.constant 0 : index
    %c0_44 = arith.constant 0 : index
    %74 = vector.load %arg7[%c2_42, %c0_43, %c0_44] : memref<4x2x8xf32, #tpu.memory_space<vmem>>, vector<1x2x8xf32>
    %75 = vector.shape_cast %74 : vector<1x2x8xf32> to vector<2x8xf32>
    %76 = vector.shape_cast %66 : vector<2x8xf32> to vector<1x2x8xf32>
    tpu.vector_store %arg7[%c2_42, %c0_43, %c0_44], %76 {strides = array<i32>} : memref<4x2x8xf32, #tpu.memory_space<vmem>>, vector<1x2x8xf32>,
    %77 = arith.addf %73, %72 : vector<2x8xf32>
    %78 = arith.addf %77, %70 : vector<2x8xf32>
    %cst_45 = arith.constant 9.99999996E-13 : f32
    %79 = vector.broadcast %cst_45 : f32 to vector<2x8xf32>
    %80 = arith.maximumf %78, %79 : vector<2x8xf32>
    %cst_46 = arith.constant 1.000000e+00 : f32
    %81 = vector.broadcast %cst_46 : f32 to vector<2x8xf32>
    %82 = arith.divf %81, %80 : vector<2x8xf32>
    %83 = arith.mulf %72, %82 : vector<2x8xf32>
    %cst_47 = arith.constant dense<0.000000e+00> : vector<2x8xf32>
    %84 = tpu.matmul %83, %0, %cst_47 {dimension_numbers = #tpu.dot_dimension_numbers<[1], [0], [0], [1], [0, 0, 1, 1], [], []>} : vector<2x8xf32>, vector<8x8xf32>, vector<2x8xf32> -> vector<2x8xf32>
    %cst_48 = arith.constant dense<0.000000e+00> : vector<2x8xf32>
    %85 = tpu.matmul %72, %1, %cst_48 {dimension_numbers = #tpu.dot_dimension_numbers<[1], [0], [0], [1], [0, 0, 1, 1], [], []>} : vector<2x8xf32>, vector<8x8xf32>, vector<2x8xf32> -> vector<2x8xf32>
    %86 = arith.mulf %85, %82 : vector<2x8xf32>
    %87 = arith.addf %84, %86 : vector<2x8xf32>
    %c3 = arith.constant 3 : index
    %c0_49 = arith.constant 0 : index
    %c0_50 = arith.constant 0 : index
    %88 = vector.load %arg0[%c3, %c0_49, %c0_50] : memref<4x2x8xf32, #tpu.memory_space<vmem>>, vector<1x2x8xf32>
    %89 = vector.shape_cast %88 : vector<1x2x8xf32> to vector<2x8xf32>
    %90 = arith.mulf %89, %87 : vector<2x8xf32>
    %c3_51 = arith.constant 3 : index
    %c0_52 = arith.constant 0 : index
    %c0_53 = arith.constant 0 : index
    %91 = vector.load %arg7[%c3_51, %c0_52, %c0_53] : memref<4x2x8xf32, #tpu.memory_space<vmem>>, vector<1x2x8xf32>
    %92 = vector.shape_cast %91 : vector<1x2x8xf32> to vector<2x8xf32>
    %93 = vector.shape_cast %90 : vector<2x8xf32> to vector<1x2x8xf32>
    tpu.vector_store %arg7[%c3_51, %c0_52, %c0_53], %93 {strides = array<i32>} : memref<4x2x8xf32, #tpu.memory_space<vmem>>, vector<1x2x8xf32>,
    return
  }
}

</mosaic_0001>

<llo_original>
// kernel: _lambda_.5
$region0: #{_lambda_.5}
  #allocation0 [shape = 'u32[]', space=smem, size = 0x4, offset = 0x4, fixed_abs, tag = 'smem constant byte address 0x4 - core index']
  #allocation1 [shape = 'u32[144,128]{1,0:T(1,128)}', space=vmem, size = 0x12000, scoped, tag = 'internal scratch']
  %s0 = inlined_call_operand.vmem [shape: f32[64,4], index: 0, kind: input, shape index: {}]
  %s1 = inlined_call_operand.vmem [shape: f32[4,128], index: 1, kind: input, shape index: {}]
  %s2 = inlined_call_operand.vmem [shape: f32[1,128], index: 2, kind: input, shape index: {}]
  %s3 = inlined_call_operand.vmem [shape: f32[64,128], index: 3, kind: output, shape index: {}]
  %s4 = sld [smem:[#allocation0]]
  $region22: #{_lambda_.5} parent=0
    _
  %s6 = ssub.s32 1, %s4
  %s7 = scalar_select 0, %s6, %s4
  // Predicated region
  $region2: #{_lambda_.5} parent=0 // pred_check
    _
  $region3: #{_lambda_.5} parent=0 // pred_check_branch
    %9 = sbr.rel (0) target = $region5
  $region4: #{_lambda_.5} parent=0 // pred_region
    _
  $region5: #{_lambda_.5} parent=0 // pred_fallthru
    _
  // Predicated region
  $region6: #{_lambda_.5} parent=0 // pred_check
    _
  $region7: #{_lambda_.5} parent=0 // pred_check_branch
    %11 = sbr.rel (0) target = $region9
  $region8: #{_lambda_.5} parent=0 // pred_region
    _
  $region9: #{_lambda_.5} parent=0 // pred_fallthru
    _
  // Predicated region
  $region10: #{_lambda_.5} parent=0 // pred_check
    _
  $region11: #{_lambda_.5} parent=0 // pred_check_branch
    %13 = sbr.rel (0) target = $region13
  $region12: #{_lambda_.5} parent=0 // pred_region
    _
  $region13: #{_lambda_.5} parent=0 // pred_fallthru
    _
  %v14 = vld [vmem:[%s0] sm:$0xff]
  %v15 = vld [vmem:[%s0 + $0x8] sm:$0xff]
  %v16 = vld [vmem:[%s0 + $0x10] sm:$0xff]
  %v17 = vld [vmem:[%s0 + $0x18] sm:$0xff]
  %v18 = vld [vmem:[%s0 + $0x20] sm:$0xff]
  %v19 = vld [vmem:[%s0 + $0x28] sm:$0xff]
  %v20 = vld [vmem:[%s0 + $0x30] sm:$0xff]
  %v21 = vld [vmem:[%s0 + $0x38] sm:$0xff]
  %v22 = vld [vmem:[%s1] sm:$0xf]
  %v23 = vld [vmem:[%s2] sm:$0x1]
  %v25 = vlaneseq
  %v26 = vshrl.u32 %v25, 7
  %v27 = vsub.s32 0, %v26
  %v28 = vrot.slane %v23, %v27
  %vm30 = vcmask 31744
  %v32 = vsel %vm30, %v14, 0
  %v35 = vsel %vm30, %v15, 0
  %v38 = vsel %vm30, %v16, 0
  %v41 = vsel %vm30, %v17, 0
  %v44 = vsel %vm30, %v18, 0
  %v47 = vsel %vm30, %v19, 0
  %v50 = vsel %vm30, %v20, 0
  %v53 = vsel %vm30, %v21, 0
  %vm55 = vcmask 1043456
  %v57 = vsel %vm55, %v22, 0
  %59 = vmatprep.subr.mxu0 0.0
  %60 = vmatpush1.msra.mxu0 0.0
  %61 = vmatprep.subr.mxu0 0.0
  %62 = vmatpush1.msra.mxu0 0.0
  %63 = vmatprep.subr.mxu0 0.0
  %64 = vmatpush1.msra.mxu0 0.0
  %65 = vmatprep.subr.mxu0 0.0
  %66 = vmatpush1.msra.mxu0 0.0
  %67 = vmatprep.subr.mxu0 0.0
  %68 = vmatpush1.msra.mxu0 0.0
  %69 = vmatprep.subr.mxu0 0.0
  %70 = vmatpush1.msra.mxu0 0.0
  %71 = vmatprep.subr.mxu0 0.0
  %72 = vmatpush1.msra.mxu0 0.0
  %73 = vmatprep.subr.mxu0 0.0
  %74 = vmatpush1.msra.mxu0 0.0
  %75 = vmatprep.subr.mxu0 0.0
  %76 = vmatpush1.msra.mxu0 0.0
  %77 = vmatprep.subr.mxu0 0.0
  %78 = vmatpush1.msra.mxu0 0.0
  %79 = vmatprep.subr.mxu0 0.0
  %80 = vmatpush1.msra.mxu0 0.0
  %81 = vmatprep.subr.mxu0 0.0
  %82 = vmatpush1.msra.mxu0 0.0
  %83 = vmatprep.subr.mxu0 0.0
  %84 = vmatpush1.msra.mxu0 0.0
  %85 = vmatprep.subr.mxu0 0.0
  %86 = vmatpush1.msra.mxu0 0.0
  %87 = vmatprep.subr.mxu0 0.0
  %88 = vmatpush1.msra.mxu0 0.0
  %89 = vmatprep.subr.mxu0 0.0
  %90 = vmatpush1.msra.mxu0 %v57
  %91 = vmatprep.subr.mxu0 0.0
  %92 = vmatpush2.msra.mxu0 0.0
  %93 = vmatprep.subr.mxu0 0.0
  %94 = vmatpush2.msra.mxu0 0.0
  %95 = vmatprep.subr.mxu0 0.0
  %96 = vmatpush2.msra.mxu0 0.0
  %97 = vmatprep.subr.mxu0 0.0
  %98 = vmatpush2.msra.mxu0 0.0
  %99 = vmatprep.subr.mxu0 0.0
  %100 = vmatpush2.msra.mxu0 0.0
  %101 = vmatprep.subr.mxu0 0.0
  %102 = vmatpush2.msra.mxu0 0.0
  %103 = vmatprep.subr.mxu0 0.0
  %104 = vmatpush2.msra.mxu0 0.0
  %105 = vmatprep.subr.mxu0 0.0
  %106 = vmatpush2.msra.mxu0 0.0
  %107 = vmatprep.subr.mxu0 0.0
  %108 = vmatpush2.msra.mxu0 0.0
  %109 = vmatprep.subr.mxu0 0.0
  %110 = vmatpush2.msra.mxu0 0.0
  %111 = vmatprep.subr.mxu0 0.0
  %112 = vmatpush2.msra.mxu0 0.0
  %113 = vmatprep.subr.mxu0 0.0
  %114 = vmatpush2.msra.mxu0 0.0
  %115 = vmatprep.subr.mxu0 0.0
  %116 = vmatpush2.msra.mxu0 0.0
  %117 = vmatprep.subr.mxu0 0.0
  %118 = vmatpush2.msra.mxu0 0.0
  %119 = vmatprep.subr.mxu0 0.0
  %120 = vmatpush2.msra.mxu0 0.0
  %121 = vmatprep.subr.mxu0 0.0
  %122 = vmatpush2.msra.mxu0 0.0
  %123 = vmatprep.mubr.f32.mxu0 0.0
  %124 = vmatmul.mubr.f32.gmra.mxu0 %v32
  %v125 = vpop.f32.mrf.mxu0
  %v126 = vadd.f32 %v28, %v125
  %v127 = vpop.f32.mrf.mxu0
  %128 = vmatprep.mubr.f32.mxu0 0.0
  %129 = vmatmul.mubr.f32.gmra.mxu0 %v35
  %v130 = vpop.f32.mrf.mxu0
  %v131 = vadd.f32 %v28, %v130
  %v132 = vpop.f32.mrf.mxu0
  %133 = vmatprep.mubr.f32.mxu0 0.0
  %134 = vmatmul.mubr.f32.gmra.mxu0 %v38
  %v135 = vpop.f32.mrf.mxu0
  %v136 = vadd.f32 %v28, %v135
  %v137 = vpop.f32.mrf.mxu0
  %138 = vmatprep.mubr.f32.mxu0 0.0
  %139 = vmatmul.mubr.f32.gmra.mxu0 %v41
  %v140 = vpop.f32.mrf.mxu0
  %v141 = vadd.f32 %v28, %v140
  %v142 = vpop.f32.mrf.mxu0
  %143 = vmatprep.mubr.f32.mxu0 0.0
  %144 = vmatmul.mubr.f32.gmra.mxu0 %v44
  %v145 = vpop.f32.mrf.mxu0
  %v146 = vadd.f32 %v28, %v145
  %v147 = vpop.f32.mrf.mxu0
  %148 = vmatprep.mubr.f32.mxu0 0.0
  %149 = vmatmul.mubr.f32.gmra.mxu0 %v47
  %v150 = vpop.f32.mrf.mxu0
  %v151 = vadd.f32 %v28, %v150
  %v152 = vpop.f32.mrf.mxu0
  %153 = vmatprep.mubr.f32.mxu0 0.0
  %154 = vmatmul.mubr.f32.gmra.mxu0 %v50
  %v155 = vpop.f32.mrf.mxu0
  %v156 = vadd.f32 %v28, %v155
  %v157 = vpop.f32.mrf.mxu0
  %158 = vmatprep.mubr.f32.mxu0 0.0
  %159 = vmatmul.mubr.f32.gmra.mxu0 %v53
  %v160 = vpop.f32.mrf.mxu0
  %v161 = vadd.f32 %v28, %v160
  %v162 = vpop.f32.mrf.mxu0
  %163 = vdwg.mxu0
  %164 = vst [vmem:[%s3] sm:$0xff] %v126
  %165 = vst [vmem:[%s3 + $0x8] sm:$0xff] %v131
  %166 = vst [vmem:[%s3 + $0x10] sm:$0xff] %v136
  %167 = vst [vmem:[%s3 + $0x18] sm:$0xff] %v141
  %168 = vst [vmem:[%s3 + $0x20] sm:$0xff] %v146
  %169 = vst [vmem:[%s3 + $0x28] sm:$0xff] %v151
  %170 = vst [vmem:[%s3 + $0x30] sm:$0xff] %v156
  %171 = vst [vmem:[%s3 + $0x38] sm:$0xff] %v161
  // Predicated region
  $region14: #{_lambda_.5} parent=0 // pred_check
    _
  $region15: #{_lambda_.5} parent=0 // pred_check_branch
    %173 = sbr.rel (0) target = $region17
  $region16: #{_lambda_.5} parent=0 // pred_region
    _
  $region17: #{_lambda_.5} parent=0 // pred_fallthru
    _
  // Predicated region
  $region18: #{_lambda_.5} parent=0 // pred_check
    _
  $region19: #{_lambda_.5} parent=0 // pred_check_branch
    %175 = sbr.rel (0) target = $region21
  $region20: #{_lambda_.5} parent=0 // pred_region
    _
  $region21: #{_lambda_.5} parent=0 // pred_fallthru
    _

// kernel: _lambda_.6
$region0: #{_lambda_.6}
  #allocation0 [shape = 'u32[]', space=smem, size = 0x4, offset = 0x4, fixed_abs, tag = 'smem constant byte address 0x4 - core index']
  #allocation1 [shape = 'u32[144,128]{1,0:T(1,128)}', space=vmem, size = 0x12000, scoped, tag = 'internal scratch']
  %s0 = inlined_call_operand.vmem [shape: f32[64,128], index: 0, kind: input, shape index: {}]
  %s1 = inlined_call_operand.vmem [shape: f32[48,64], index: 1, kind: input, shape index: {}]
  %s2 = inlined_call_operand.vmem [shape: f32[48,64], index: 2, kind: input, shape index: {}]
  %s3 = inlined_call_operand.vmem [shape: f32[32,128], index: 3, kind: input, shape index: {}]
  %s4 = inlined_call_operand.vmem [shape: f32[1,32], index: 4, kind: input, shape index: {}]
  %s5 = inlined_call_operand.vmem [shape: f32[1,32], index: 5, kind: input, shape index: {}]
  %s6 = inlined_call_operand.vmem [shape: f32[32,128], index: 6, kind: input, shape index: {}]
  %s7 = inlined_call_operand.vmem [shape: f32[1,128], index: 7, kind: input, shape index: {}]
  %s8 = inlined_call_operand.vmem [shape: f32[1,32], index: 8, kind: input, shape index: {}]
  %s9 = inlined_call_operand.vmem [shape: f32[48,48], index: 9, kind: input, shape index: {}]
  %s10 = inlined_call_operand.vmem [shape: f32[48,48], index: 10, kind: input, shape index: {}]
  %s11 = inlined_call_operand.vmem [shape: f32[24,32], index: 11, kind: input, shape index: {}]
  %s12 = inlined_call_operand.vmem [shape: f32[24,32], index: 12, kind: input, shape index: {}]
  %s13 = inlined_call_operand.vmem [shape: f32[48,128], index: 13, kind: output, shape index: {}]
  %s14 = sld [smem:[#allocation0]]
  $region62: #{_lambda_.6} parent=0
    _
  %s16 = ssub.s32 1, %s14
  %s17 = scalar_select 0, %s16, %s14
  // Predicated region
  $region2: #{_lambda_.6} parent=0 // pred_check
    _
  $region3: #{_lambda_.6} parent=0 // pred_check_branch
    %19 = sbr.rel (0) target = $region5
  $region4: #{_lambda_.6} parent=0 // pred_region
    _
  $region5: #{_lambda_.6} parent=0 // pred_fallthru
    _
  // Predicated region
  $region6: #{_lambda_.6} parent=0 // pred_check
    _
  $region7: #{_lambda_.6} parent=0 // pred_check_branch
    %21 = sbr.rel (0) target = $region9
  $region8: #{_lambda_.6} parent=0 // pred_region
    _
  $region9: #{_lambda_.6} parent=0 // pred_fallthru
    _
  // Predicated region
  $region10: #{_lambda_.6} parent=0 // pred_check
    _
  $region11: #{_lambda_.6} parent=0 // pred_check_branch
    %23 = sbr.rel (0) target = $region13
  $region12: #{_lambda_.6} parent=0 // pred_region
    _
  $region13: #{_lambda_.6} parent=0 // pred_fallthru
    _
  // Predicated region
  $region14: #{_lambda_.6} parent=0 // pred_check
    _
  $region15: #{_lambda_.6} parent=0 // pred_check_branch
    %25 = sbr.rel (0) target = $region17
  $region16: #{_lambda_.6} parent=0 // pred_region
    _
  $region17: #{_lambda_.6} parent=0 // pred_fallthru
    _
  // Predicated region
  $region18: #{_lambda_.6} parent=0 // pred_check
    _
  $region19: #{_lambda_.6} parent=0 // pred_check_branch
    %27 = sbr.rel (0) target = $region21
  $region20: #{_lambda_.6} parent=0 // pred_region
    _
  $region21: #{_lambda_.6} parent=0 // pred_fallthru
    _
  // Predicated region
  $region22: #{_lambda_.6} parent=0 // pred_check
    _
  $region23: #{_lambda_.6} parent=0 // pred_check_branch
    %29 = sbr.rel (0) target = $region25
  $region24: #{_lambda_.6} parent=0 // pred_region
    _
  $region25: #{_lambda_.6} parent=0 // pred_fallthru
    _
  // Predicated region
  $region26: #{_lambda_.6} parent=0 // pred_check
    _
  $region27: #{_lambda_.6} parent=0 // pred_check_branch
    %31 = sbr.rel (0) target = $region29
  $region28: #{_lambda_.6} parent=0 // pred_region
    _
  $region29: #{_lambda_.6} parent=0 // pred_fallthru
    _
  // Predicated region
  $region30: #{_lambda_.6} parent=0 // pred_check
    _
  $region31: #{_lambda_.6} parent=0 // pred_check_branch
    %33 = sbr.rel (0) target = $region33
  $region32: #{_lambda_.6} parent=0 // pred_region
    _
  $region33: #{_lambda_.6} parent=0 // pred_fallthru
    _
  // Predicated region
  $region34: #{_lambda_.6} parent=0 // pred_check
    _
  $region35: #{_lambda_.6} parent=0 // pred_check_branch
    %35 = sbr.rel (0) target = $region37
  $region36: #{_lambda_.6} parent=0 // pred_region
    _
  $region37: #{_lambda_.6} parent=0 // pred_fallthru
    _
  // Predicated region
  $region38: #{_lambda_.6} parent=0 // pred_check
    _
  $region39: #{_lambda_.6} parent=0 // pred_check_branch
    %37 = sbr.rel (0) target = $region41
  $region40: #{_lambda_.6} parent=0 // pred_region
    _
  $region41: #{_lambda_.6} parent=0 // pred_fallthru
    _
  // Predicated region
  $region42: #{_lambda_.6} parent=0 // pred_check
    _
  $region43: #{_lambda_.6} parent=0 // pred_check_branch
    %39 = sbr.rel (0) target = $region45
  $region44: #{_lambda_.6} parent=0 // pred_region
    _
  $region45: #{_lambda_.6} parent=0 // pred_fallthru
    _
  // Predicated region
  $region46: #{_lambda_.6} parent=0 // pred_check
    _
  $region47: #{_lambda_.6} parent=0 // pred_check_branch
    %41 = sbr.rel (0) target = $region49
  $region48: #{_lambda_.6} parent=0 // pred_region
    _
  $region49: #{_lambda_.6} parent=0 // pred_fallthru
    _
  // Predicated region
  $region50: #{_lambda_.6} parent=0 // pred_check
    _
  $region51: #{_lambda_.6} parent=0 // pred_check_branch
    %43 = sbr.rel (0) target = $region53
  $region52: #{_lambda_.6} parent=0 // pred_region
    _
  $region53: #{_lambda_.6} parent=0 // pred_fallthru
    _
  %v44 = vld [vmem:[%s0] sm:$0xff]
  %v45 = vld [vmem:[%s0 + $0x8] sm:$0xff]
  %v46 = vld [vmem:[%s0 + $0x10] sm:$0xff]
  %v47 = vld [vmem:[%s0 + $0x18] sm:$0xff]
  %v48 = vld [vmem:[%s0 + $0x20] sm:$0xff]
  %v49 = vld [vmem:[%s0 + $0x28] sm:$0xff]
  %v50 = vld [vmem:[%s0 + $0x30] sm:$0xff]
  %v51 = vld [vmem:[%s0 + $0x38] sm:$0xff]
  %v52 = vld [vmem:[%s3] sm:$0xff]
  %v53 = vld [vmem:[%s3 + $0x8] sm:$0xff]
  %v54 = vld [vmem:[%s3 + $0x10] sm:$0xff]
  %v55 = vld [vmem:[%s3 + $0x18] sm:$0xff]
  %vm56 = vcmask 261120
  %v58 = vsel %vm56, %v44, 0
  %v61 = vsel %vm56, %v45, 0
  %v64 = vsel %vm56, %v46, 0
  %v67 = vsel %vm56, %v47, 0
  %v70 = vsel %vm56, %v48, 0
  %v73 = vsel %vm56, %v49, 0
  %v76 = vsel %vm56, %v50, 0
  %v79 = vsel %vm56, %v51, 0
  %81 = vmatprep.subr.mxu0 0.0
  %82 = vmatpush1.msra.mxu0 0.0
  %83 = vmatprep.subr.mxu0 0.0
  %84 = vmatpush1.msra.mxu0 0.0
  %85 = vmatprep.subr.mxu0 0.0
  %86 = vmatpush1.msra.mxu0 0.0
  %87 = vmatprep.subr.mxu0 0.0
  %88 = vmatpush1.msra.mxu0 0.0
  %89 = vmatprep.subr.mxu0 0.0
  %90 = vmatpush1.msra.mxu0 0.0
  %91 = vmatprep.subr.mxu0 0.0
  %92 = vmatpush1.msra.mxu0 0.0
  %93 = vmatprep.subr.mxu0 0.0
  %94 = vmatpush1.msra.mxu0 0.0
  %95 = vmatprep.subr.mxu0 0.0
  %96 = vmatpush1.msra.mxu0 0.0
  %97 = vmatprep.subr.mxu0 0.0
  %98 = vmatpush1.msra.mxu0 0.0
  %99 = vmatprep.subr.mxu0 0.0
  %100 = vmatpush1.msra.mxu0 0.0
  %101 = vmatprep.subr.mxu0 0.0
  %102 = vmatpush1.msra.mxu0 0.0
  %103 = vmatprep.subr.mxu0 0.0
  %104 = vmatpush1.msra.mxu0 0.0
  %105 = vmatprep.subr.mxu0 0.0
  %106 = vmatpush1.msra.mxu0 %v55
  %107 = vmatprep.subr.mxu0 0.0
  %108 = vmatpush1.msra.mxu0 %v54
  %109 = vmatprep.subr.mxu0 0.0
  %110 = vmatpush1.msra.mxu0 %v53
  %111 = vmatprep.subr.mxu0 0.0
  %112 = vmatpush1.msra.mxu0 %v52
  %113 = vmatprep.subr.mxu0 0.0
  %114 = vmatpush2.msra.mxu0 0.0
  %115 = vmatprep.subr.mxu0 0.0
  %116 = vmatpush2.msra.mxu0 0.0
  %117 = vmatprep.subr.mxu0 0.0
  %118 = vmatpush2.msra.mxu0 0.0
  %119 = vmatprep.subr.mxu0 0.0
  %120 = vmatpush2.msra.mxu0 0.0
  %121 = vmatprep.subr.mxu0 0.0
  %122 = vmatpush2.msra.mxu0 0.0
  %123 = vmatprep.subr.mxu0 0.0
  %124 = vmatpush2.msra.mxu0 0.0
  %125 = vmatprep.subr.mxu0 0.0
  %126 = vmatpush2.msra.mxu0 0.0
  %127 = vmatprep.subr.mxu0 0.0
  %128 = vmatpush2.msra.mxu0 0.0
  %129 = vmatprep.subr.mxu0 0.0
  %130 = vmatpush2.msra.mxu0 0.0
  %131 = vmatprep.subr.mxu0 0.0
  %132 = vmatpush2.msra.mxu0 0.0
  %133 = vmatprep.subr.mxu0 0.0
  %134 = vmatpush2.msra.mxu0 0.0
  %135 = vmatprep.subr.mxu0 0.0
  %136 = vmatpush2.msra.mxu0 0.0
  %137 = vmatprep.subr.mxu0 0.0
  %138 = vmatpush2.msra.mxu0 0.0
  %139 = vmatprep.subr.mxu0 0.0
  %140 = vmatpush2.msra.mxu0 0.0
  %141 = vmatprep.subr.mxu0 0.0
  %142 = vmatpush2.msra.mxu0 0.0
  %143 = vmatprep.subr.mxu0 0.0
  %144 = vmatpush2.msra.mxu0 0.0
  %145 = vmatprep.mubr.f32.mxu0 0.0
  %146 = vmatmul.mubr.f32.gmra.mxu0 %v58
  %v147 = vpop.f32.mrf.mxu0
  %v148 = vadd.f32 0.0, %v147
  %v149 = vpop.f32.mrf.mxu0
  %150 = vmatprep.mubr.f32.mxu0 0.0
  %151 = vmatmul.mubr.f32.gmra.mxu0 %v61
  %v152 = vpop.f32.mrf.mxu0
  %v153 = vadd.f32 0.0, %v152
  %v154 = vpop.f32.mrf.mxu0
  %155 = vmatprep.mubr.f32.mxu0 0.0
  %156 = vmatmul.mubr.f32.gmra.mxu0 %v64
  %v157 = vpop.f32.mrf.mxu0
  %v158 = vadd.f32 0.0, %v157
  %v159 = vpop.f32.mrf.mxu0
  %160 = vmatprep.mubr.f32.mxu0 0.0
  %161 = vmatmul.mubr.f32.gmra.mxu0 %v67
  %v162 = vpop.f32.mrf.mxu0
  %v163 = vadd.f32 0.0, %v162
  %v164 = vpop.f32.mrf.mxu0
  %165 = vmatprep.mubr.f32.mxu0 0.0
  %166 = vmatmul.mubr.f32.gmra.mxu0 %v70
  %v167 = vpop.f32.mrf.mxu0
  %v168 = vadd.f32 0.0, %v167
  %v169 = vpop.f32.mrf.mxu0
  %170 = vmatprep.mubr.f32.mxu0 0.0
  %171 = vmatmul.mubr.f32.gmra.mxu0 %v73
  %v172 = vpop.f32.mrf.mxu0
  %v173 = vadd.f32 0.0, %v172
  %v174 = vpop.f32.mrf.mxu0
  %175 = vmatprep.mubr.f32.mxu0 0.0
  %176 = vmatmul.mubr.f32.gmra.mxu0 %v76
  %v177 = vpop.f32.mrf.mxu0
  %v178 = vadd.f32 0.0, %v177
  %v179 = vpop.f32.mrf.mxu0
  %180 = vmatprep.mubr.f32.mxu0 0.0
  %181 = vmatmul.mubr.f32.gmra.mxu0 %v79
  %v182 = vpop.f32.mrf.mxu0
  %v183 = vadd.f32 0.0, %v182
  %v184 = vpop.f32.mrf.mxu0
  %185 = vdwg.mxu0
  %v186 = vld [vmem:[%s1] sm:$0xff]
  %v187 = vld [vmem:[%s1 + $0x8] sm:$0xff]
  %v188 = vld [vmem:[%s1 + $0x10] sm:$0xff]
  %v189 = vld [vmem:[%s1 + $0x18] sm:$0xff]
  %v190 = vld [vmem:[%s1 + $0x20] sm:$0xff]
  %v191 = vld [vmem:[%s1 + $0x28] sm:$0xff]
  %vm192 = vcmask 523264
  %v194 = vsel %vm192, %v186, 0
  %v197 = vsel %vm192, %v187, 0
  %v200 = vsel %vm192, %v188, 0
  %v203 = vsel %vm192, %v189, 0
  %v206 = vsel %vm192, %v190, 0
  %v209 = vsel %vm192, %v191, 0
  %211 = vmatprep.subr.mxu0 0.0
  %212 = vmatpush1.msra.mxu0 0.0
  %213 = vmatprep.subr.mxu0 0.0
  %214 = vmatpush1.msra.mxu0 0.0
  %215 = vmatprep.subr.mxu0 0.0
  %216 = vmatpush1.msra.mxu0 0.0
  %217 = vmatprep.subr.mxu0 0.0
  %218 = vmatpush1.msra.mxu0 0.0
  %219 = vmatprep.subr.mxu0 0.0
  %220 = vmatpush1.msra.mxu0 0.0
  %221 = vmatprep.subr.mxu0 0.0
  %222 = vmatpush1.msra.mxu0 0.0
  %223 = vmatprep.subr.mxu0 0.0
  %224 = vmatpush1.msra.mxu0 0.0
  %225 = vmatprep.subr.mxu0 0.0
  %226 = vmatpush1.msra.mxu0 0.0
  %227 = vmatprep.subr.mxu0 0.0
  %228 = vmatpush1.msra.mxu0 %v183
  %229 = vmatprep.subr.mxu0 0.0
  %230 = vmatpush1.msra.mxu0 %v178
  %231 = vmatprep.subr.mxu0 0.0
  %232 = vmatpush1.msra.mxu0 %v173
  %233 = vmatprep.subr.mxu0 0.0
  %234 = vmatpush1.msra.mxu0 %v168
  %235 = vmatprep.subr.mxu0 0.0
  %236 = vmatpush1.msra.mxu0 %v163
  %237 = vmatprep.subr.mxu0 0.0
  %238 = vmatpush1.msra.mxu0 %v158
  %239 = vmatprep.subr.mxu0 0.0
  %240 = vmatpush1.msra.mxu0 %v153
  %241 = vmatprep.subr.mxu0 0.0
  %242 = vmatpush1.msra.mxu0 %v148
  %243 = vmatprep.subr.mxu0 0.0
  %244 = vmatpush2.msra.mxu0 0.0
  %245 = vmatprep.subr.mxu0 0.0
  %246 = vmatpush2.msra.mxu0 0.0
  %247 = vmatprep.subr.mxu0 0.0
  %248 = vmatpush2.msra.mxu0 0.0
  %249 = vmatprep.subr.mxu0 0.0
  %250 = vmatpush2.msra.mxu0 0.0
  %251 = vmatprep.subr.mxu0 0.0
  %252 = vmatpush2.msra.mxu0 0.0
  %253 = vmatprep.subr.mxu0 0.0
  %254 = vmatpush2.msra.mxu0 0.0
  %255 = vmatprep.subr.mxu0 0.0
  %256 = vmatpush2.msra.mxu0 0.0
  %257 = vmatprep.subr.mxu0 0.0
  %258 = vmatpush2.msra.mxu0 0.0
  %259 = vmatprep.subr.mxu0 0.0
  %260 = vmatpush2.msra.mxu0 0.0
  %261 = vmatprep.subr.mxu0 0.0
  %262 = vmatpush2.msra.mxu0 0.0
  %263 = vmatprep.subr.mxu0 0.0
  %264 = vmatpush2.msra.mxu0 0.0
  %265 = vmatprep.subr.mxu0 0.0
  %266 = vmatpush2.msra.mxu0 0.0
  %267 = vmatprep.subr.mxu0 0.0
  %268 = vmatpush2.msra.mxu0 0.0
  %269 = vmatprep.subr.mxu0 0.0
  %270 = vmatpush2.msra.mxu0 0.0
  %271 = vmatprep.subr.mxu0 0.0
  %272 = vmatpush2.msra.mxu0 0.0
  %273 = vmatprep.subr.mxu0 0.0
  %274 = vmatpush2.msra.mxu0 0.0
  %275 = vmatprep.mubr.f32.mxu0 0.0
  %276 = vmatmul.mubr.f32.gmra.mxu0 %v194
  %v277 = vpop.f32.mrf.mxu0
  %v278 = vadd.f32 0.0, %v277
  %v279 = vpop.f32.mrf.mxu0
  %280 = vmatprep.mubr.f32.mxu0 0.0
  %281 = vmatmul.mubr.f32.gmra.mxu0 %v197
  %v282 = vpop.f32.mrf.mxu0
  %v283 = vadd.f32 0.0, %v282
  %v284 = vpop.f32.mrf.mxu0
  %285 = vmatprep.mubr.f32.mxu0 0.0
  %286 = vmatmul.mubr.f32.gmra.mxu0 %v200
  %v287 = vpop.f32.mrf.mxu0
  %v288 = vadd.f32 0.0, %v287
  %v289 = vpop.f32.mrf.mxu0
  %290 = vmatprep.mubr.f32.mxu0 0.0
  %291 = vmatmul.mubr.f32.gmra.mxu0 %v203
  %v292 = vpop.f32.mrf.mxu0
  %v293 = vadd.f32 0.0, %v292
  %v294 = vpop.f32.mrf.mxu0
  %295 = vmatprep.mubr.f32.mxu0 0.0
  %296 = vmatmul.mubr.f32.gmra.mxu0 %v206
  %v297 = vpop.f32.mrf.mxu0
  %v298 = vadd.f32 0.0, %v297
  %v299 = vpop.f32.mrf.mxu0
  %300 = vmatprep.mubr.f32.mxu0 0.0
  %301 = vmatmul.mubr.f32.gmra.mxu0 %v209
  %v302 = vpop.f32.mrf.mxu0
  %v303 = vadd.f32 0.0, %v302
  %v304 = vpop.f32.mrf.mxu0
  %305 = vdwg.mxu0
  %v306 = vld [vmem:[%s2] sm:$0xff]
  %v307 = vld [vmem:[%s2 + $0x8] sm:$0xff]
  %v308 = vld [vmem:[%s2 + $0x10] sm:$0xff]
  %v309 = vld [vmem:[%s2 + $0x18] sm:$0xff]
  %v310 = vld [vmem:[%s2 + $0x20] sm:$0xff]
  %v311 = vld [vmem:[%s2 + $0x28] sm:$0xff]
  %v313 = vsel %vm192, %v306, 0
  %v316 = vsel %vm192, %v307, 0
  %v319 = vsel %vm192, %v308, 0
  %v322 = vsel %vm192, %v309, 0
  %v325 = vsel %vm192, %v310, 0
  %v328 = vsel %vm192, %v311, 0
  %330 = vmatprep.subr.mxu0 0.0
  %331 = vmatpush1.msra.mxu0 0.0
  %332 = vmatprep.subr.mxu0 0.0
  %333 = vmatpush1.msra.mxu0 0.0
  %334 = vmatprep.subr.mxu0 0.0
  %335 = vmatpush1.msra.mxu0 0.0
  %336 = vmatprep.subr.mxu0 0.0
  %337 = vmatpush1.msra.mxu0 0.0
  %338 = vmatprep.subr.mxu0 0.0
  %339 = vmatpush1.msra.mxu0 0.0
  %340 = vmatprep.subr.mxu0 0.0
  %341 = vmatpush1.msra.mxu0 0.0
  %342 = vmatprep.subr.mxu0 0.0
  %343 = vmatpush1.msra.mxu0 0.0
  %344 = vmatprep.subr.mxu0 0.0
  %345 = vmatpush1.msra.mxu0 0.0
  %346 = vmatprep.subr.mxu0 0.0
  %347 = vmatpush1.msra.mxu0 %v183
  %348 = vmatprep.subr.mxu0 0.0
  %349 = vmatpush1.msra.mxu0 %v178
  %350 = vmatprep.subr.mxu0 0.0
  %351 = vmatpush1.msra.mxu0 %v173
  %352 = vmatprep.subr.mxu0 0.0
  %353 = vmatpush1.msra.mxu0 %v168
  %354 = vmatprep.subr.mxu0 0.0
  %355 = vmatpush1.msra.mxu0 %v163
  %356 = vmatprep.subr.mxu0 0.0
  %357 = vmatpush1.msra.mxu0 %v158
  %358 = vmatprep.subr.mxu0 0.0
  %359 = vmatpush1.msra.mxu0 %v153
  %360 = vmatprep.subr.mxu0 0.0
  %361 = vmatpush1.msra.mxu0 %v148
  %362 = vmatprep.subr.mxu0 0.0
  %363 = vmatpush2.msra.mxu0 0.0
  %364 = vmatprep.subr.mxu0 0.0
  %365 = vmatpush2.msra.mxu0 0.0
  %366 = vmatprep.subr.mxu0 0.0
  %367 = vmatpush2.msra.mxu0 0.0
  %368 = vmatprep.subr.mxu0 0.0
  %369 = vmatpush2.msra.mxu0 0.0
  %370 = vmatprep.subr.mxu0 0.0
  %371 = vmatpush2.msra.mxu0 0.0
  %372 = vmatprep.subr.mxu0 0.0
  %373 = vmatpush2.msra.mxu0 0.0
  %374 = vmatprep.subr.mxu0 0.0
  %375 = vmatpush2.msra.mxu0 0.0
  %376 = vmatprep.subr.mxu0 0.0
  %377 = vmatpush2.msra.mxu0 0.0
  %378 = vmatprep.subr.mxu0 0.0
  %379 = vmatpush2.msra.mxu0 0.0
  %380 = vmatprep.subr.mxu0 0.0
  %381 = vmatpush2.msra.mxu0 0.0
  %382 = vmatprep.subr.mxu0 0.0
  %383 = vmatpush2.msra.mxu0 0.0
  %384 = vmatprep.subr.mxu0 0.0
  %385 = vmatpush2.msra.mxu0 0.0
  %386 = vmatprep.subr.mxu0 0.0
  %387 = vmatpush2.msra.mxu0 0.0
  %388 = vmatprep.subr.mxu0 0.0
  %389 = vmatpush2.msra.mxu0 0.0
  %390 = vmatprep.subr.mxu0 0.0
  %391 = vmatpush2.msra.mxu0 0.0
  %392 = vmatprep.subr.mxu0 0.0
  %393 = vmatpush2.msra.mxu0 0.0
  %394 = vmatprep.mubr.f32.mxu0 0.0
  %395 = vmatmul.mubr.f32.gmra.mxu0 %v313
  %v396 = vpop.f32.mrf.mxu0
  %v397 = vadd.f32 0.0, %v396
  %v398 = vpop.f32.mrf.mxu0
  %399 = vmatprep.mubr.f32.mxu0 0.0
  %400 = vmatmul.mubr.f32.gmra.mxu0 %v316
  %v401 = vpop.f32.mrf.mxu0
  %v402 = vadd.f32 0.0, %v401
  %v403 = vpop.f32.mrf.mxu0
  %404 = vmatprep.mubr.f32.mxu0 0.0
  %405 = vmatmul.mubr.f32.gmra.mxu0 %v319
  %v406 = vpop.f32.mrf.mxu0
  %v407 = vadd.f32 0.0, %v406
  %v408 = vpop.f32.mrf.mxu0
  %409 = vmatprep.mubr.f32.mxu0 0.0
  %410 = vmatmul.mubr.f32.gmra.mxu0 %v322
  %v411 = vpop.f32.mrf.mxu0
  %v412 = vadd.f32 0.0, %v411
  %v413 = vpop.f32.mrf.mxu0
  %414 = vmatprep.mubr.f32.mxu0 0.0
  %415 = vmatmul.mubr.f32.gmra.mxu0 %v325
  %v416 = vpop.f32.mrf.mxu0
  %v417 = vadd.f32 0.0, %v416
  %v418 = vpop.f32.mrf.mxu0
  %419 = vmatprep.mubr.f32.mxu0 0.0
  %420 = vmatmul.mubr.f32.gmra.mxu0 %v328
  %v421 = vpop.f32.mrf.mxu0
  %v422 = vadd.f32 0.0, %v421
  %v423 = vpop.f32.mrf.mxu0
  %424 = vdwg.mxu0
  %431 = vrot.lane.b32.xlu0 %v397, 96
  %v432 = vpop.permute.xlu0 %431
  %433 = vrot.lane.b32.xlu0 %v402, 96
  %v434 = vpop.permute.xlu0 %433
  %435 = vrot.lane.b32.xlu0 %v407, 96
  %v436 = vpop.permute.xlu0 %435
  %437 = vrot.lane.b32.xlu0 %v412, 96
  %v438 = vpop.permute.xlu0 %437
  %439 = vrot.lane.b32.xlu0 %v417, 96
  %v440 = vpop.permute.xlu0 %439
  %441 = vrot.lane.b32.xlu0 %v422, 96
  %v442 = vpop.permute.xlu0 %441
  %v449 = vadd.f32 %v278, %v432
  %v450 = vadd.f32 %v283, %v434
  %v451 = vadd.f32 %v288, %v436
  %v452 = vadd.f32 %v293, %v438
  %v453 = vadd.f32 %v298, %v440
  %v454 = vadd.f32 %v303, %v442
  %v455 = vld [vmem:[%s4] sm:$0x1]
  %v457 = vlaneseq
  %v458 = vshrl.u32 %v457, 7
  %v459 = vsub.s32 0, %v458
  %v460 = vrot.slane %v455, %v459
  %v462 = vadd.f32 %v449, %v460
  %v463 = vadd.f32 %v450, %v460
  %v464 = vadd.f32 %v451, %v460
  %v465 = vadd.f32 %v452, %v460
  %v466 = vadd.f32 %v453, %v460
  %v467 = vadd.f32 %v454, %v460
  %v468 = vld [vmem:[%s5] sm:$0x1]
  %v470 = vlaneseq
  %v471 = vshrl.u32 %v470, 7
  %v472 = vsub.s32 0, %v471
  %v473 = vrot.slane %v468, %v472
  %474 = vrot.lane.b32.xlu0 %v473, 64
  %v475 = vpop.permute.xlu0 %474
  %v477 = vadd.f32 %v449, %v475
  %v478 = vadd.f32 %v450, %v475
  %v479 = vadd.f32 %v451, %v475
  %v480 = vadd.f32 %v452, %v475
  %v481 = vadd.f32 %v453, %v475
  %v482 = vadd.f32 %v454, %v475
  %v483 = vtanh.pop %v462
  %v484 = vtanh.pop %v463
  %v485 = vtanh.pop %v464
  %v486 = vtanh.pop %v465
  %v487 = vtanh.pop %v466
  %v488 = vtanh.pop %v467
  %v489 = vxor.u32 %v477, 2147483648
  %v490 = vxor.u32 %v478, 2147483648
  %v491 = vxor.u32 %v479, 2147483648
  %v492 = vxor.u32 %v480, 2147483648
  %v493 = vxor.u32 %v481, 2147483648
  %v494 = vxor.u32 %v482, 2147483648
  %v495 = vmul.f32 %v489, 1.442695
  %v496 = vpow.pop %v495
  %v497 = vmul.f32 %v490, 1.442695
  %v498 = vpow.pop %v497
  %v499 = vmul.f32 %v491, 1.442695
  %v500 = vpow.pop %v499
  %v501 = vmul.f32 %v492, 1.442695
  %v502 = vpow.pop %v501
  %v503 = vmul.f32 %v493, 1.442695
  %v504 = vpow.pop %v503
  %v505 = vmul.f32 %v494, 1.442695
  %v506 = vpow.pop %v505
  %v507 = vadd.f32 %v496, 1.0
  %v508 = vadd.f32 %v498, 1.0
  %v509 = vadd.f32 %v500, 1.0
  %v510 = vadd.f32 %v502, 1.0
  %v511 = vadd.f32 %v504, 1.0
  %v512 = vadd.f32 %v506, 1.0
  %v513 = vrcp.pop %v507
  %v514 = vmul.f32 1.0, %v513
  %v515 = vrcp.pop %v508
  %v516 = vmul.f32 1.0, %v515
  %v517 = vrcp.pop %v509
  %v518 = vmul.f32 1.0, %v517
  %v519 = vrcp.pop %v510
  %v520 = vmul.f32 1.0, %v519
  %v521 = vrcp.pop %v511
  %v522 = vmul.f32 1.0, %v521
  %v523 = vrcp.pop %v512
  %v524 = vmul.f32 1.0, %v523
  %531 = vrot.lane.b32.xlu0 %v514, 64
  %v532 = vpop.permute.xlu0 %531
  %533 = vrot.lane.b32.xlu0 %v516, 64
  %v534 = vpop.permute.xlu0 %533
  %535 = vrot.lane.b32.xlu0 %v518, 64
  %v536 = vpop.permute.xlu0 %535
  %537 = vrot.lane.b32.xlu0 %v520, 64
  %v538 = vpop.permute.xlu0 %537
  %539 = vrot.lane.b32.xlu0 %v522, 64
  %v540 = vpop.permute.xlu0 %539
  %541 = vrot.lane.b32.xlu0 %v524, 64
  %v542 = vpop.permute.xlu0 %541
  %v549 = vmul.f32 %v483, %v532
  %v550 = vmul.f32 %v484, %v534
  %v551 = vmul.f32 %v485, %v536
  %v552 = vmul.f32 %v486, %v538
  %v553 = vmul.f32 %v487, %v540
  %v554 = vmul.f32 %v488, %v542
  %v555 = vld [vmem:[%s6] sm:$0xff]
  %v556 = vld [vmem:[%s6 + $0x8] sm:$0xff]
  %v557 = vld [vmem:[%s6 + $0x10] sm:$0xff]
  %v558 = vld [vmem:[%s6 + $0x18] sm:$0xff]
  %v559 = vld [vmem:[%s7] sm:$0x1]
  %v561 = vlaneseq
  %v562 = vshrl.u32 %v561, 7
  %v563 = vsub.s32 0, %v562
  %v564 = vrot.slane %v559, %v563
  %v567 = vsel %vm56, %v549, 0
  %v570 = vsel %vm56, %v550, 0
  %v573 = vsel %vm56, %v551, 0
  %v576 = vsel %vm56, %v552, 0
  %v579 = vsel %vm56, %v553, 0
  %v582 = vsel %vm56, %v554, 0
  %584 = vmatprep.subr.mxu0 0.0
  %585 = vmatpush1.msra.mxu0 0.0
  %586 = vmatprep.subr.mxu0 0.0
  %587 = vmatpush1.msra.mxu0 0.0
  %588 = vmatprep.subr.mxu0 0.0
  %589 = vmatpush1.msra.mxu0 0.0
  %590 = vmatprep.subr.mxu0 0.0
  %591 = vmatpush1.msra.mxu0 0.0
  %592 = vmatprep.subr.mxu0 0.0
  %593 = vmatpush1.msra.mxu0 0.0
  %594 = vmatprep.subr.mxu0 0.0
  %595 = vmatpush1.msra.mxu0 0.0
  %596 = vmatprep.subr.mxu0 0.0
  %597 = vmatpush1.msra.mxu0 0.0
  %598 = vmatprep.subr.mxu0 0.0
  %599 = vmatpush1.msra.mxu0 0.0
  %600 = vmatprep.subr.mxu0 0.0
  %601 = vmatpush1.msra.mxu0 0.0
  %602 = vmatprep.subr.mxu0 0.0
  %603 = vmatpush1.msra.mxu0 0.0
  %604 = vmatprep.subr.mxu0 0.0
  %605 = vmatpush1.msra.mxu0 0.0
  %606 = vmatprep.subr.mxu0 0.0
  %607 = vmatpush1.msra.mxu0 0.0
  %608 = vmatprep.subr.mxu0 0.0
  %609 = vmatpush1.msra.mxu0 %v558
  %610 = vmatprep.subr.mxu0 0.0
  %611 = vmatpush1.msra.mxu0 %v557
  %612 = vmatprep.subr.mxu0 0.0
  %613 = vmatpush1.msra.mxu0 %v556
  %614 = vmatprep.subr.mxu0 0.0
  %615 = vmatpush1.msra.mxu0 %v555
  %616 = vmatprep.subr.mxu0 0.0
  %617 = vmatpush2.msra.mxu0 0.0
  %618 = vmatprep.subr.mxu0 0.0
  %619 = vmatpush2.msra.mxu0 0.0
  %620 = vmatprep.subr.mxu0 0.0
  %621 = vmatpush2.msra.mxu0 0.0
  %622 = vmatprep.subr.mxu0 0.0
  %623 = vmatpush2.msra.mxu0 0.0
  %624 = vmatprep.subr.mxu0 0.0
  %625 = vmatpush2.msra.mxu0 0.0
  %626 = vmatprep.subr.mxu0 0.0
  %627 = vmatpush2.msra.mxu0 0.0
  %628 = vmatprep.subr.mxu0 0.0
  %629 = vmatpush2.msra.mxu0 0.0
  %630 = vmatprep.subr.mxu0 0.0
  %631 = vmatpush2.msra.mxu0 0.0
  %632 = vmatprep.subr.mxu0 0.0
  %633 = vmatpush2.msra.mxu0 0.0
  %634 = vmatprep.subr.mxu0 0.0
  %635 = vmatpush2.msra.mxu0 0.0
  %636 = vmatprep.subr.mxu0 0.0
  %637 = vmatpush2.msra.mxu0 0.0
  %638 = vmatprep.subr.mxu0 0.0
  %639 = vmatpush2.msra.mxu0 0.0
  %640 = vmatprep.subr.mxu0 0.0
  %641 = vmatpush2.msra.mxu0 0.0
  %642 = vmatprep.subr.mxu0 0.0
  %643 = vmatpush2.msra.mxu0 0.0
  %644 = vmatprep.subr.mxu0 0.0
  %645 = vmatpush2.msra.mxu0 0.0
  %646 = vmatprep.subr.mxu0 0.0
  %647 = vmatpush2.msra.mxu0 0.0
  %648 = vmatprep.mubr.f32.mxu0 0.0
  %649 = vmatmul.mubr.f32.gmra.mxu0 %v567
  %v650 = vpop.f32.mrf.mxu0
  %v651 = vadd.f32 %v564, %v650
  %v652 = vpop.f32.mrf.mxu0
  %653 = vmatprep.mubr.f32.mxu0 0.0
  %654 = vmatmul.mubr.f32.gmra.mxu0 %v570
  %v655 = vpop.f32.mrf.mxu0
  %v656 = vadd.f32 %v564, %v655
  %v657 = vpop.f32.mrf.mxu0
  %658 = vmatprep.mubr.f32.mxu0 0.0
  %659 = vmatmul.mubr.f32.gmra.mxu0 %v573
  %v660 = vpop.f32.mrf.mxu0
  %v661 = vadd.f32 %v564, %v660
  %v662 = vpop.f32.mrf.mxu0
  %663 = vmatprep.mubr.f32.mxu0 0.0
  %664 = vmatmul.mubr.f32.gmra.mxu0 %v576
  %v665 = vpop.f32.mrf.mxu0
  %v666 = vadd.f32 %v564, %v665
  %v667 = vpop.f32.mrf.mxu0
  %668 = vmatprep.mubr.f32.mxu0 0.0
  %669 = vmatmul.mubr.f32.gmra.mxu0 %v579
  %v670 = vpop.f32.mrf.mxu0
  %v671 = vadd.f32 %v564, %v670
  %v672 = vpop.f32.mrf.mxu0
  %673 = vmatprep.mubr.f32.mxu0 0.0
  %674 = vmatmul.mubr.f32.gmra.mxu0 %v582
  %v675 = vpop.f32.mrf.mxu0
  %v676 = vadd.f32 %v564, %v675
  %v677 = vpop.f32.mrf.mxu0
  %678 = vdwg.mxu0
  %vm679 = vcmask 1048064
  %680 = vst.msk [vmem:[%s13] sm:$0xff] %vm679, %v651
  %681 = vst.msk [vmem:[%s13 + $0x8] sm:$0xff] %vm679, %v656
  %682 = vst.msk [vmem:[%s13 + $0x10] sm:$0xff] %vm679, %v661
  %683 = vst.msk [vmem:[%s13 + $0x18] sm:$0xff] %vm679, %v666
  %684 = vst.msk [vmem:[%s13 + $0x20] sm:$0xff] %vm679, %v671
  %685 = vst.msk [vmem:[%s13 + $0x28] sm:$0xff] %vm679, %v676
  %v686 = vld [vmem:[%s9] sm:$0xff]
  %v687 = vld [vmem:[%s9 + $0x8] sm:$0xff]
  %v688 = vld [vmem:[%s9 + $0x10] sm:$0xff]
  %v689 = vld [vmem:[%s9 + $0x18] sm:$0xff]
  %v690 = vld [vmem:[%s9 + $0x20] sm:$0xff]
  %v691 = vld [vmem:[%s9 + $0x28] sm:$0xff]
  %v692 = vld [vmem:[%s10] sm:$0xff]
  %v693 = vld [vmem:[%s10 + $0x8] sm:$0xff]
  %v694 = vld [vmem:[%s10 + $0x10] sm:$0xff]
  %v695 = vld [vmem:[%s10 + $0x18] sm:$0xff]
  %v696 = vld [vmem:[%s10 + $0x20] sm:$0xff]
  %v697 = vld [vmem:[%s10 + $0x28] sm:$0xff]
  %704 = vrot.lane.b32.xlu0 %v651, 96
  %v705 = vpop.permute.xlu0 %704
  %706 = vrot.lane.b32.xlu0 %v656, 96
  %v707 = vpop.permute.xlu0 %706
  %708 = vrot.lane.b32.xlu0 %v661, 96
  %v709 = vpop.permute.xlu0 %708
  %710 = vrot.lane.b32.xlu0 %v666, 96
  %v711 = vpop.permute.xlu0 %710
  %712 = vrot.lane.b32.xlu0 %v671, 96
  %v713 = vpop.permute.xlu0 %712
  %714 = vrot.lane.b32.xlu0 %v676, 96
  %v715 = vpop.permute.xlu0 %714
  %vm722 = vcmask 392192
  %v724 = vsel %vm722, %v692, 0
  %v727 = vsel %vm722, %v693, 0
  %v730 = vsel %vm722, %v694, 0
  %v733 = vsel %vm722, %v695, 0
  %v736 = vsel %vm722, %v696, 0
  %v739 = vsel %vm722, %v697, 0
  %741 = vmatprep.subr.mxu0 0.0
  %742 = vmatpush1.msra.mxu0 0.0
  %743 = vmatprep.subr.mxu0 0.0
  %744 = vmatpush1.msra.mxu0 0.0
  %745 = vmatprep.subr.mxu0 0.0
  %746 = vmatpush1.msra.mxu0 0.0
  %747 = vmatprep.subr.mxu0 0.0
  %748 = vmatpush1.msra.mxu0 0.0
  %749 = vmatprep.subr.mxu0 0.0
  %750 = vmatpush1.msra.mxu0 0.0
  %751 = vmatprep.subr.mxu0 0.0
  %752 = vmatpush1.msra.mxu0 0.0
  %753 = vmatprep.subr.mxu0 0.0
  %754 = vmatpush1.msra.mxu0 0.0
  %755 = vmatprep.subr.mxu0 0.0
  %756 = vmatpush1.msra.mxu0 0.0
  %757 = vmatprep.subr.mxu0 0.0
  %758 = vmatpush1.msra.mxu0 0.0
  %759 = vmatprep.subr.mxu0 0.0
  %760 = vmatpush1.msra.mxu0 0.0
  %761 = vmatprep.subr.mxu0 0.0
  %762 = vmatpush1.msra.mxu0 %v715
  %763 = vmatprep.subr.mxu0 0.0
  %764 = vmatpush1.msra.mxu0 %v713
  %765 = vmatprep.subr.mxu0 0.0
  %766 = vmatpush1.msra.mxu0 %v711
  %767 = vmatprep.subr.mxu0 0.0
  %768 = vmatpush1.msra.mxu0 %v709
  %769 = vmatprep.subr.mxu0 0.0
  %770 = vmatpush1.msra.mxu0 %v707
  %771 = vmatprep.subr.mxu0 0.0
  %772 = vmatpush1.msra.mxu0 %v705
  %773 = vmatprep.subr.mxu0 0.0
  %774 = vmatpush2.msra.mxu0 0.0
  %775 = vmatprep.subr.mxu0 0.0
  %776 = vmatpush2.msra.mxu0 0.0
  %777 = vmatprep.subr.mxu0 0.0
  %778 = vmatpush2.msra.mxu0 0.0
  %779 = vmatprep.subr.mxu0 0.0
  %780 = vmatpush2.msra.mxu0 0.0
  %781 = vmatprep.subr.mxu0 0.0
  %782 = vmatpush2.msra.mxu0 0.0
  %783 = vmatprep.subr.mxu0 0.0
  %784 = vmatpush2.msra.mxu0 0.0
  %785 = vmatprep.subr.mxu0 0.0
  %786 = vmatpush2.msra.mxu0 0.0
  %787 = vmatprep.subr.mxu0 0.0
  %788 = vmatpush2.msra.mxu0 0.0
  %789 = vmatprep.subr.mxu0 0.0
  %790 = vmatpush2.msra.mxu0 0.0
  %791 = vmatprep.subr.mxu0 0.0
  %792 = vmatpush2.msra.mxu0 0.0
  %793 = vmatprep.subr.mxu0 0.0
  %794 = vmatpush2.msra.mxu0 0.0
  %795 = vmatprep.subr.mxu0 0.0
  %796 = vmatpush2.msra.mxu0 0.0
  %797 = vmatprep.subr.mxu0 0.0
  %798 = vmatpush2.msra.mxu0 0.0
  %799 = vmatprep.subr.mxu0 0.0
  %800 = vmatpush2.msra.mxu0 0.0
  %801 = vmatprep.subr.mxu0 0.0
  %802 = vmatpush2.msra.mxu0 0.0
  %803 = vmatprep.subr.mxu0 0.0
  %804 = vmatpush2.msra.mxu0 0.0
  %805 = vmatprep.mubr.f32.mxu0 0.0
  %806 = vmatmul.mubr.f32.gmra.mxu0 %v724
  %v807 = vpop.f32.mrf.mxu0
  %v808 = vadd.f32 0.0, %v807
  %v809 = vpop.f32.mrf.mxu0
  %810 = vmatprep.mubr.f32.mxu0 0.0
  %811 = vmatmul.mubr.f32.gmra.mxu0 %v727
  %v812 = vpop.f32.mrf.mxu0
  %v813 = vadd.f32 0.0, %v812
  %v814 = vpop.f32.mrf.mxu0
  %815 = vmatprep.mubr.f32.mxu0 0.0
  %816 = vmatmul.mubr.f32.gmra.mxu0 %v730
  %v817 = vpop.f32.mrf.mxu0
  %v818 = vadd.f32 0.0, %v817
  %v819 = vpop.f32.mrf.mxu0
  %820 = vmatprep.mubr.f32.mxu0 0.0
  %821 = vmatmul.mubr.f32.gmra.mxu0 %v733
  %v822 = vpop.f32.mrf.mxu0
  %v823 = vadd.f32 0.0, %v822
  %v824 = vpop.f32.mrf.mxu0
  %825 = vmatprep.mubr.f32.mxu0 0.0
  %826 = vmatmul.mubr.f32.gmra.mxu0 %v736
  %v827 = vpop.f32.mrf.mxu0
  %v828 = vadd.f32 0.0, %v827
  %v829 = vpop.f32.mrf.mxu0
  %830 = vmatprep.mubr.f32.mxu0 0.0
  %831 = vmatmul.mubr.f32.gmra.mxu0 %v739
  %v832 = vpop.f32.mrf.mxu0
  %v833 = vadd.f32 0.0, %v832
  %v834 = vpop.f32.mrf.mxu0
  %835 = vdwg.mxu0
  %v837 = vsel %vm722, %v686, 0
  %v840 = vsel %vm722, %v687, 0
  %v843 = vsel %vm722, %v688, 0
  %v846 = vsel %vm722, %v689, 0
  %v849 = vsel %vm722, %v690, 0
  %v852 = vsel %vm722, %v691, 0
  %854 = vmatprep.subr.mxu0 0.0
  %855 = vmatpush1.msra.mxu0 0.0
  %856 = vmatprep.subr.mxu0 0.0
  %857 = vmatpush1.msra.mxu0 0.0
  %858 = vmatprep.subr.mxu0 0.0
  %859 = vmatpush1.msra.mxu0 0.0
  %860 = vmatprep.subr.mxu0 0.0
  %861 = vmatpush1.msra.mxu0 0.0
  %862 = vmatprep.subr.mxu0 0.0
  %863 = vmatpush1.msra.mxu0 0.0
  %864 = vmatprep.subr.mxu0 0.0
  %865 = vmatpush1.msra.mxu0 0.0
  %866 = vmatprep.subr.mxu0 0.0
  %867 = vmatpush1.msra.mxu0 0.0
  %868 = vmatprep.subr.mxu0 0.0
  %869 = vmatpush1.msra.mxu0 0.0
  %870 = vmatprep.subr.mxu0 0.0
  %871 = vmatpush1.msra.mxu0 0.0
  %872 = vmatprep.subr.mxu0 0.0
  %873 = vmatpush1.msra.mxu0 0.0
  %874 = vmatprep.subr.mxu0 0.0
  %875 = vmatpush1.msra.mxu0 %v676
  %876 = vmatprep.subr.mxu0 0.0
  %877 = vmatpush1.msra.mxu0 %v671
  %878 = vmatprep.subr.mxu0 0.0
  %879 = vmatpush1.msra.mxu0 %v666
  %880 = vmatprep.subr.mxu0 0.0
  %881 = vmatpush1.msra.mxu0 %v661
  %882 = vmatprep.subr.mxu0 0.0
  %883 = vmatpush1.msra.mxu0 %v656
  %884 = vmatprep.subr.mxu0 0.0
  %885 = vmatpush1.msra.mxu0 %v651
  %886 = vmatprep.subr.mxu0 0.0
  %887 = vmatpush2.msra.mxu0 0.0
  %888 = vmatprep.subr.mxu0 0.0
  %889 = vmatpush2.msra.mxu0 0.0
  %890 = vmatprep.subr.mxu0 0.0
  %891 = vmatpush2.msra.mxu0 0.0
  %892 = vmatprep.subr.mxu0 0.0
  %893 = vmatpush2.msra.mxu0 0.0
  %894 = vmatprep.subr.mxu0 0.0
  %895 = vmatpush2.msra.mxu0 0.0
  %896 = vmatprep.subr.mxu0 0.0
  %897 = vmatpush2.msra.mxu0 0.0
  %898 = vmatprep.subr.mxu0 0.0
  %899 = vmatpush2.msra.mxu0 0.0
  %900 = vmatprep.subr.mxu0 0.0
  %901 = vmatpush2.msra.mxu0 0.0
  %902 = vmatprep.subr.mxu0 0.0
  %903 = vmatpush2.msra.mxu0 0.0
  %904 = vmatprep.subr.mxu0 0.0
  %905 = vmatpush2.msra.mxu0 0.0
  %906 = vmatprep.subr.mxu0 0.0
  %907 = vmatpush2.msra.mxu0 0.0
  %908 = vmatprep.subr.mxu0 0.0
  %909 = vmatpush2.msra.mxu0 0.0
  %910 = vmatprep.subr.mxu0 0.0
  %911 = vmatpush2.msra.mxu0 0.0
  %912 = vmatprep.subr.mxu0 0.0
  %913 = vmatpush2.msra.mxu0 0.0
  %914 = vmatprep.subr.mxu0 0.0
  %915 = vmatpush2.msra.mxu0 0.0
  %916 = vmatprep.subr.mxu0 0.0
  %917 = vmatpush2.msra.mxu0 0.0
  %918 = vmatprep.mubr.f32.mxu0 0.0
  %919 = vmatmul.mubr.f32.gmra.mxu0 %v837
  %v920 = vpop.f32.mrf.mxu0
  %v921 = vadd.f32 %v808, %v920
  %v922 = vpop.f32.mrf.mxu0
  %923 = vmatprep.mubr.f32.mxu0 0.0
  %924 = vmatmul.mubr.f32.gmra.mxu0 %v840
  %v925 = vpop.f32.mrf.mxu0
  %v926 = vadd.f32 %v813, %v925
  %v927 = vpop.f32.mrf.mxu0
  %928 = vmatprep.mubr.f32.mxu0 0.0
  %929 = vmatmul.mubr.f32.gmra.mxu0 %v843
  %v930 = vpop.f32.mrf.mxu0
  %v931 = vadd.f32 %v818, %v930
  %v932 = vpop.f32.mrf.mxu0
  %933 = vmatprep.mubr.f32.mxu0 0.0
  %934 = vmatmul.mubr.f32.gmra.mxu0 %v846
  %v935 = vpop.f32.mrf.mxu0
  %v936 = vadd.f32 %v823, %v935
  %v937 = vpop.f32.mrf.mxu0
  %938 = vmatprep.mubr.f32.mxu0 0.0
  %939 = vmatmul.mubr.f32.gmra.mxu0 %v849
  %v940 = vpop.f32.mrf.mxu0
  %v941 = vadd.f32 %v828, %v940
  %v942 = vpop.f32.mrf.mxu0
  %943 = vmatprep.mubr.f32.mxu0 0.0
  %944 = vmatmul.mubr.f32.gmra.mxu0 %v852
  %v945 = vpop.f32.mrf.mxu0
  %v946 = vadd.f32 %v833, %v945
  %v947 = vpop.f32.mrf.mxu0
  %948 = vdwg.mxu0
  %v949 = vld [vmem:[%s8] sm:$0x1]
  %v951 = vlaneseq
  %v952 = vshrl.u32 %v951, 7
  %v953 = vsub.s32 0, %v952
  %v954 = vrot.slane %v949, %v953
  %v956 = vadd.f32 %v921, %v954
  %v957 = vadd.f32 %v926, %v954
  %v958 = vadd.f32 %v931, %v954
  %v959 = vadd.f32 %v936, %v954
  %v960 = vadd.f32 %v941, %v954
  %v961 = vadd.f32 %v946, %v954
  %v962 = vld [vmem:[%s2] sm:$0xff]
  %v963 = vld [vmem:[%s2 + $0x8] sm:$0xff]
  %v964 = vld [vmem:[%s2 + $0x10] sm:$0xff]
  %v965 = vld [vmem:[%s2 + $0x18] sm:$0xff]
  %v966 = vld [vmem:[%s2 + $0x20] sm:$0xff]
  %v967 = vld [vmem:[%s2 + $0x28] sm:$0xff]
  %968 = vrot.lane.b32.xlu0 %v44, 96
  %v969 = vpop.permute.xlu0 %968
  %970 = vrot.lane.b32.xlu0 %v45, 96
  %v971 = vpop.permute.xlu0 %970
  %972 = vrot.lane.b32.xlu0 %v46, 96
  %v973 = vpop.permute.xlu0 %972
  %974 = vrot.lane.b32.xlu0 %v47, 96
  %v975 = vpop.permute.xlu0 %974
  %976 = vrot.lane.b32.xlu0 %v48, 96
  %v977 = vpop.permute.xlu0 %976
  %978 = vrot.lane.b32.xlu0 %v49, 96
  %v979 = vpop.permute.xlu0 %978
  %980 = vrot.lane.b32.xlu0 %v50, 96
  %v981 = vpop.permute.xlu0 %980
  %982 = vrot.lane.b32.xlu0 %v51, 96
  %v983 = vpop.permute.xlu0 %982
  %v992 = vadd.f32 %v44, %v969
  %v993 = vadd.f32 %v45, %v971
  %v994 = vadd.f32 %v46, %v973
  %v995 = vadd.f32 %v47, %v975
  %v996 = vadd.f32 %v48, %v977
  %v997 = vadd.f32 %v49, %v979
  %v998 = vadd.f32 %v50, %v981
  %v999 = vadd.f32 %v51, %v983
  %v1001 = vsel %vm192, %v962, 0
  %v1004 = vsel %vm192, %v963, 0
  %v1007 = vsel %vm192, %v964, 0
  %v1010 = vsel %vm192, %v965, 0
  %v1013 = vsel %vm192, %v966, 0
  %v1016 = vsel %vm192, %v967, 0
  %1018 = vmatprep.subr.mxu0 0.0
  %1019 = vmatpush1.msra.mxu0 0.0
  %1020 = vmatprep.subr.mxu0 0.0
  %1021 = vmatpush1.msra.mxu0 0.0
  %1022 = vmatprep.subr.mxu0 0.0
  %1023 = vmatpush1.msra.mxu0 0.0
  %1024 = vmatprep.subr.mxu0 0.0
  %1025 = vmatpush1.msra.mxu0 0.0
  %1026 = vmatprep.subr.mxu0 0.0
  %1027 = vmatpush1.msra.mxu0 0.0
  %1028 = vmatprep.subr.mxu0 0.0
  %1029 = vmatpush1.msra.mxu0 0.0
  %1030 = vmatprep.subr.mxu0 0.0
  %1031 = vmatpush1.msra.mxu0 0.0
  %1032 = vmatprep.subr.mxu0 0.0
  %1033 = vmatpush1.msra.mxu0 0.0
  %1034 = vmatprep.subr.mxu0 0.0
  %1035 = vmatpush1.msra.mxu0 %v999
  %1036 = vmatprep.subr.mxu0 0.0
  %1037 = vmatpush1.msra.mxu0 %v998
  %1038 = vmatprep.subr.mxu0 0.0
  %1039 = vmatpush1.msra.mxu0 %v997
  %1040 = vmatprep.subr.mxu0 0.0
  %1041 = vmatpush1.msra.mxu0 %v996
  %1042 = vmatprep.subr.mxu0 0.0
  %1043 = vmatpush1.msra.mxu0 %v995
  %1044 = vmatprep.subr.mxu0 0.0
  %1045 = vmatpush1.msra.mxu0 %v994
  %1046 = vmatprep.subr.mxu0 0.0
  %1047 = vmatpush1.msra.mxu0 %v993
  %1048 = vmatprep.subr.mxu0 0.0
  %1049 = vmatpush1.msra.mxu0 %v992
  %1050 = vmatprep.subr.mxu0 0.0
  %1051 = vmatpush2.msra.mxu0 0.0
  %1052 = vmatprep.subr.mxu0 0.0
  %1053 = vmatpush2.msra.mxu0 0.0
  %1054 = vmatprep.subr.mxu0 0.0
  %1055 = vmatpush2.msra.mxu0 0.0
  %1056 = vmatprep.subr.mxu0 0.0
  %1057 = vmatpush2.msra.mxu0 0.0
  %1058 = vmatprep.subr.mxu0 0.0
  %1059 = vmatpush2.msra.mxu0 0.0
  %1060 = vmatprep.subr.mxu0 0.0
  %1061 = vmatpush2.msra.mxu0 0.0
  %1062 = vmatprep.subr.mxu0 0.0
  %1063 = vmatpush2.msra.mxu0 0.0
  %1064 = vmatprep.subr.mxu0 0.0
  %1065 = vmatpush2.msra.mxu0 0.0
  %1066 = vmatprep.subr.mxu0 0.0
  %1067 = vmatpush2.msra.mxu0 0.0
  %1068 = vmatprep.subr.mxu0 0.0
  %1069 = vmatpush2.msra.mxu0 0.0
  %1070 = vmatprep.subr.mxu0 0.0
  %1071 = vmatpush2.msra.mxu0 0.0
  %1072 = vmatprep.subr.mxu0 0.0
  %1073 = vmatpush2.msra.mxu0 0.0
  %1074 = vmatprep.subr.mxu0 0.0
  %1075 = vmatpush2.msra.mxu0 0.0
  %1076 = vmatprep.subr.mxu0 0.0
  %1077 = vmatpush2.msra.mxu0 0.0
  %1078 = vmatprep.subr.mxu0 0.0
  %1079 = vmatpush2.msra.mxu0 0.0
  %1080 = vmatprep.subr.mxu0 0.0
  %1081 = vmatpush2.msra.mxu0 0.0
  %1082 = vmatprep.mubr.f32.mxu0 0.0
  %1083 = vmatmul.mubr.f32.gmra.mxu0 %v1001
  %v1084 = vpop.f32.mrf.mxu0
  %v1085 = vadd.f32 0.0, %v1084
  %v1086 = vpop.f32.mrf.mxu0
  %1087 = vmatprep.mubr.f32.mxu0 0.0
  %1088 = vmatmul.mubr.f32.gmra.mxu0 %v1004
  %v1089 = vpop.f32.mrf.mxu0
  %v1090 = vadd.f32 0.0, %v1089
  %v1091 = vpop.f32.mrf.mxu0
  %1092 = vmatprep.mubr.f32.mxu0 0.0
  %1093 = vmatmul.mubr.f32.gmra.mxu0 %v1007
  %v1094 = vpop.f32.mrf.mxu0
  %v1095 = vadd.f32 0.0, %v1094
  %v1096 = vpop.f32.mrf.mxu0
  %1097 = vmatprep.mubr.f32.mxu0 0.0
  %1098 = vmatmul.mubr.f32.gmra.mxu0 %v1010
  %v1099 = vpop.f32.mrf.mxu0
  %v1100 = vadd.f32 0.0, %v1099
  %v1101 = vpop.f32.mrf.mxu0
  %1102 = vmatprep.mubr.f32.mxu0 0.0
  %1103 = vmatmul.mubr.f32.gmra.mxu0 %v1013
  %v1104 = vpop.f32.mrf.mxu0
  %v1105 = vadd.f32 0.0, %v1104
  %v1106 = vpop.f32.mrf.mxu0
  %1107 = vmatprep.mubr.f32.mxu0 0.0
  %1108 = vmatmul.mubr.f32.gmra.mxu0 %v1016
  %v1109 = vpop.f32.mrf.mxu0
  %v1110 = vadd.f32 0.0, %v1109
  %v1111 = vpop.f32.mrf.mxu0
  %1112 = vdwg.mxu0
  %1119 = vrot.lane.b32.xlu0 %v1085, 32
  %v1120 = vpop.permute.xlu0 %1119
  %1121 = vrot.lane.b32.xlu0 %v1090, 32
  %v1122 = vpop.permute.xlu0 %1121
  %1123 = vrot.lane.b32.xlu0 %v1095, 32
  %v1124 = vpop.permute.xlu0 %1123
  %1125 = vrot.lane.b32.xlu0 %v1100, 32
  %v1126 = vpop.permute.xlu0 %1125
  %1127 = vrot.lane.b32.xlu0 %v1105, 32
  %v1128 = vpop.permute.xlu0 %1127
  %1129 = vrot.lane.b32.xlu0 %v1110, 32
  %v1130 = vpop.permute.xlu0 %1129
  %vm1137 = vcmask 523520
  %1138 = vst.msk [vmem:[%s13] sm:$0xff] %vm1137, %v1120
  %1139 = vst.msk [vmem:[%s13 + $0x8] sm:$0xff] %vm1137, %v1122
  %1140 = vst.msk [vmem:[%s13 + $0x10] sm:$0xff] %vm1137, %v1124
  %1141 = vst.msk [vmem:[%s13 + $0x18] sm:$0xff] %vm1137, %v1126
  %1142 = vst.msk [vmem:[%s13 + $0x20] sm:$0xff] %vm1137, %v1128
  %1143 = vst.msk [vmem:[%s13 + $0x28] sm:$0xff] %vm1137, %v1130
  %v1144 = vxor.u32 %v956, 2147483648
  %v1145 = vxor.u32 %v957, 2147483648
  %v1146 = vxor.u32 %v958, 2147483648
  %v1147 = vxor.u32 %v959, 2147483648
  %v1148 = vxor.u32 %v960, 2147483648
  %v1149 = vxor.u32 %v961, 2147483648
  %v1150 = vmul.f32 %v1144, 1.442695
  %v1151 = vpow.pop %v1150
  %v1152 = vmul.f32 %v1145, 1.442695
  %v1153 = vpow.pop %v1152
  %v1154 = vmul.f32 %v1146, 1.442695
  %v1155 = vpow.pop %v1154
  %v1156 = vmul.f32 %v1147, 1.442695
  %v1157 = vpow.pop %v1156
  %v1158 = vmul.f32 %v1148, 1.442695
  %v1159 = vpow.pop %v1158
  %v1160 = vmul.f32 %v1149, 1.442695
  %v1161 = vpow.pop %v1160
  %v1162 = vadd.f32 %v1151, 1.0
  %v1163 = vadd.f32 %v1153, 1.0
  %v1164 = vadd.f32 %v1155, 1.0
  %v1165 = vadd.f32 %v1157, 1.0
  %v1166 = vadd.f32 %v1159, 1.0
  %v1167 = vadd.f32 %v1161, 1.0
  %v1168 = vrcp.pop %v1162
  %v1169 = vmul.f32 1.0, %v1168
  %v1170 = vrcp.pop %v1163
  %v1171 = vmul.f32 1.0, %v1170
  %v1172 = vrcp.pop %v1164
  %v1173 = vmul.f32 1.0, %v1172
  %v1174 = vrcp.pop %v1165
  %v1175 = vmul.f32 1.0, %v1174
  %v1176 = vrcp.pop %v1166
  %v1177 = vmul.f32 1.0, %v1176
  %v1178 = vrcp.pop %v1167
  %v1179 = vmul.f32 1.0, %v1178
  %v1180 = vmul.f32 %v956, %v1169
  %v1181 = vmul.f32 %v957, %v1171
  %v1182 = vmul.f32 %v958, %v1173
  %v1183 = vmul.f32 %v959, %v1175
  %v1184 = vmul.f32 %v960, %v1177
  %v1185 = vmul.f32 %v961, %v1179
  %v1186 = vsub.f32 1.0, %v1169
  %v1187 = vsub.f32 1.0, %v1171
  %v1188 = vsub.f32 1.0, %v1173
  %v1189 = vsub.f32 1.0, %v1175
  %v1190 = vsub.f32 1.0, %v1177
  %v1191 = vsub.f32 1.0, %v1179
  %v1192 = vmul.f32 %v1085, %v1186
  %v1193 = vmul.f32 %v1090, %v1187
  %v1194 = vmul.f32 %v1095, %v1188
  %v1195 = vmul.f32 %v1100, %v1189
  %v1196 = vmul.f32 %v1105, %v1190
  %v1197 = vmul.f32 %v1110, %v1191
  %v1198 = vadd.f32 %v1180, %v1192
  %v1199 = vadd.f32 %v1181, %v1193
  %v1200 = vadd.f32 %v1182, %v1194
  %v1201 = vadd.f32 %v1183, %v1195
  %v1202 = vadd.f32 %v1184, %v1196
  %v1203 = vadd.f32 %v1185, %v1197
  %v1204 = vld [vmem:[%s11] sm:$0xff]
  %v1205 = vld [vmem:[%s11 + $0x8] sm:$0xff]
  %v1206 = vld [vmem:[%s11 + $0x10] sm:$0xff]
  %v1207 = vld [vmem:[%s12] sm:$0xff]
  %v1208 = vld [vmem:[%s12 + $0x8] sm:$0xff]
  %v1209 = vld [vmem:[%s12 + $0x10] sm:$0xff]
  %v1210 = vsel %vm56, %v1198, 0.0
  %1211 = vadd.xlane.f32.xlu0 %v1210
  %v1212 = vpop.xlane.xlu0 %1211
  %v1213 = vsel %vm56, %v1199, 0.0
  %1214 = vadd.xlane.f32.xlu0 %v1213
  %v1215 = vpop.xlane.xlu0 %1214
  %v1216 = vsel %vm56, %v1200, 0.0
  %1217 = vadd.xlane.f32.xlu0 %v1216
  %v1218 = vpop.xlane.xlu0 %1217
  %v1219 = vadd.f32 %v1212, %v1215
  %v1220 = vadd.f32 %v1219, %v1218
  %v1221 = vrot.slane %v1220, 4
  %v1222 = vadd.f32 %v1220, %v1221
  %v1223 = vrot.slane %v1222, 2
  %v1224 = vadd.f32 %v1222, %v1223
  %v1225 = vrot.slane %v1224, 1
  %v1226 = vadd.f32 %v1224, %v1225
  %v1227 = vmul.f32 %v1226, 0.0013020834
  %v1228 = vsub.f32 %v1198, %v1227
  %v1229 = vsub.f32 %v1199, %v1227
  %v1230 = vsub.f32 %v1200, %v1227
  %v1231 = vmul.f32 %v1228, %v1228
  %v1232 = vmul.f32 %v1229, %v1229
  %v1233 = vmul.f32 %v1230, %v1230
  %v1234 = vsel %vm56, %v1231, 0.0
  %1235 = vadd.xlane.f32.xlu0 %v1234
  %v1236 = vpop.xlane.xlu0 %1235
  %v1237 = vsel %vm56, %v1232, 0.0
  %1238 = vadd.xlane.f32.xlu0 %v1237
  %v1239 = vpop.xlane.xlu0 %1238
  %v1240 = vsel %vm56, %v1233, 0.0
  %1241 = vadd.xlane.f32.xlu0 %v1240
  %v1242 = vpop.xlane.xlu0 %1241
  %v1243 = vadd.f32 %v1236, %v1239
  %v1244 = vadd.f32 %v1243, %v1242
  %v1245 = vrot.slane %v1244, 4
  %v1246 = vadd.f32 %v1244, %v1245
  %v1247 = vrot.slane %v1246, 2
  %v1248 = vadd.f32 %v1246, %v1247
  %v1249 = vrot.slane %v1248, 1
  %v1250 = vadd.f32 %v1248, %v1249
  %v1251 = vmul.f32 %v1250, 0.0013020834
  %v1252 = vadd.f32 %v1251, 1e-05
  %v1253 = vrsqrt.pop %v1252
  %v1254 = vmul.f32 %v1228, %v1253
  %v1255 = vmul.f32 %v1229, %v1253
  %v1256 = vmul.f32 %v1230, %v1253
  %v1257 = vmul.f32 %v1254, %v1204
  %v1258 = vmul.f32 %v1255, %v1205
  %v1259 = vmul.f32 %v1256, %v1206
  %v1260 = vadd.f32 %v1257, %v1207
  %v1261 = vadd.f32 %v1258, %v1208
  %v1262 = vadd.f32 %v1259, %v1209
  %1263 = vst.msk [vmem:[%s13] sm:$0xff] %vm56, %v1260
  %1264 = vst.msk [vmem:[%s13 + $0x8] sm:$0xff] %vm56, %v1261
  %1265 = vst.msk [vmem:[%s13 + $0x10] sm:$0xff] %vm56, %v1262
  %v1266 = vsel %vm56, %v1201, 0.0
  %1267 = vadd.xlane.f32.xlu0 %v1266
  %v1268 = vpop.xlane.xlu0 %1267
  %v1269 = vsel %vm56, %v1202, 0.0
  %1270 = vadd.xlane.f32.xlu0 %v1269
  %v1271 = vpop.xlane.xlu0 %1270
  %v1272 = vsel %vm56, %v1203, 0.0
  %1273 = vadd.xlane.f32.xlu0 %v1272
  %v1274 = vpop.xlane.xlu0 %1273
  %v1275 = vadd.f32 %v1268, %v1271
  %v1276 = vadd.f32 %v1275, %v1274
  %v1277 = vrot.slane %v1276, 4
  %v1278 = vadd.f32 %v1276, %v1277
  %v1279 = vrot.slane %v1278, 2
  %v1280 = vadd.f32 %v1278, %v1279
  %v1281 = vrot.slane %v1280, 1
  %v1282 = vadd.f32 %v1280, %v1281
  %v1283 = vmul.f32 %v1282, 0.0013020834
  %v1284 = vsub.f32 %v1201, %v1283
  %v1285 = vsub.f32 %v1202, %v1283
  %v1286 = vsub.f32 %v1203, %v1283
  %v1287 = vmul.f32 %v1284, %v1284
  %v1288 = vmul.f32 %v1285, %v1285
  %v1289 = vmul.f32 %v1286, %v1286
  %v1290 = vsel %vm56, %v1287, 0.0
  %1291 = vadd.xlane.f32.xlu0 %v1290
  %v1292 = vpop.xlane.xlu0 %1291
  %v1293 = vsel %vm56, %v1288, 0.0
  %1294 = vadd.xlane.f32.xlu0 %v1293
  %v1295 = vpop.xlane.xlu0 %1294
  %v1296 = vsel %vm56, %v1289, 0.0
  %1297 = vadd.xlane.f32.xlu0 %v1296
  %v1298 = vpop.xlane.xlu0 %1297
  %v1299 = vadd.f32 %v1292, %v1295
  %v1300 = vadd.f32 %v1299, %v1298
  %v1301 = vrot.slane %v1300, 4
  %v1302 = vadd.f32 %v1300, %v1301
  %v1303 = vrot.slane %v1302, 2
  %v1304 = vadd.f32 %v1302, %v1303
  %v1305 = vrot.slane %v1304, 1
  %v1306 = vadd.f32 %v1304, %v1305
  %v1307 = vmul.f32 %v1306, 0.0013020834
  %v1308 = vadd.f32 %v1307, 1e-05
  %v1309 = vrsqrt.pop %v1308
  %v1310 = vmul.f32 %v1284, %v1309
  %v1311 = vmul.f32 %v1285, %v1309
  %v1312 = vmul.f32 %v1286, %v1309
  %v1313 = vmul.f32 %v1310, %v1204
  %v1314 = vmul.f32 %v1311, %v1205
  %v1315 = vmul.f32 %v1312, %v1206
  %v1316 = vadd.f32 %v1313, %v1207
  %v1317 = vadd.f32 %v1314, %v1208
  %v1318 = vadd.f32 %v1315, %v1209
  %1319 = vst.msk [vmem:[%s13 + $0x18] sm:$0xff] %vm56, %v1316
  %1320 = vst.msk [vmem:[%s13 + $0x20] sm:$0xff] %vm56, %v1317
  %1321 = vst.msk [vmem:[%s13 + $0x28] sm:$0xff] %vm56, %v1318
  // Predicated region
  $region54: #{_lambda_.6} parent=0 // pred_check
    _
  $region55: #{_lambda_.6} parent=0 // pred_check_branch
    %1323 = sbr.rel (0) target = $region57
  $region56: #{_lambda_.6} parent=0 // pred_region
    _
  $region57: #{_lambda_.6} parent=0 // pred_fallthru
    _
  // Predicated region
  $region58: #{_lambda_.6} parent=0 // pred_check
    _
  $region59: #{_lambda_.6} parent=0 // pred_check_branch
    %1325 = sbr.rel (0) target = $region61
  $region60: #{_lambda_.6} parent=0 // pred_region
    _
  $region61: #{_lambda_.6} parent=0 // pred_fallthru
    _

// kernel: _lambda_.7
$region0: #{_lambda_.7}
  #allocation0 [shape = 'u32[]', space=smem, size = 0x4, offset = 0x4, fixed_abs, tag = 'smem constant byte address 0x4 - core index']
  #allocation1 [shape = 'u32[144,128]{1,0:T(1,128)}', space=vmem, size = 0x12000, scoped, tag = 'internal scratch']
  %s0 = inlined_call_operand.vmem [shape: f32[48,128], index: 0, kind: input, shape index: {}]
  %s1 = inlined_call_operand.vmem [shape: f32[16,48], index: 1, kind: input, shape index: {}]
  %s2 = inlined_call_operand.vmem [shape: f32[16,48], index: 2, kind: input, shape index: {}]
  %s3 = inlined_call_operand.vmem [shape: f32[32,128], index: 3, kind: input, shape index: {}]
  %s4 = inlined_call_operand.vmem [shape: f32[1,32], index: 4, kind: input, shape index: {}]
  %s5 = inlined_call_operand.vmem [shape: f32[1,32], index: 5, kind: input, shape index: {}]
  %s6 = inlined_call_operand.vmem [shape: f32[32,128], index: 6, kind: input, shape index: {}]
  %s7 = inlined_call_operand.vmem [shape: f32[1,128], index: 7, kind: input, shape index: {}]
  %s8 = inlined_call_operand.vmem [shape: f32[1,32], index: 8, kind: input, shape index: {}]
  %s9 = inlined_call_operand.vmem [shape: f32[16,16], index: 9, kind: input, shape index: {}]
  %s10 = inlined_call_operand.vmem [shape: f32[16,16], index: 10, kind: input, shape index: {}]
  %s11 = inlined_call_operand.vmem [shape: f32[8,32], index: 11, kind: input, shape index: {}]
  %s12 = inlined_call_operand.vmem [shape: f32[8,32], index: 12, kind: input, shape index: {}]
  %s13 = inlined_call_operand.vmem [shape: f32[16,128], index: 13, kind: output, shape index: {}]
  %s14 = sld [smem:[#allocation0]]
  $region62: #{_lambda_.7} parent=0
    _
  %s16 = ssub.s32 1, %s14
  %s17 = scalar_select 0, %s16, %s14
  // Predicated region
  $region2: #{_lambda_.7} parent=0 // pred_check
    _
  $region3: #{_lambda_.7} parent=0 // pred_check_branch
    %19 = sbr.rel (0) target = $region5
  $region4: #{_lambda_.7} parent=0 // pred_region
    _
  $region5: #{_lambda_.7} parent=0 // pred_fallthru
    _
  // Predicated region
  $region6: #{_lambda_.7} parent=0 // pred_check
    _
  $region7: #{_lambda_.7} parent=0 // pred_check_branch
    %21 = sbr.rel (0) target = $region9
  $region8: #{_lambda_.7} parent=0 // pred_region
    _
  $region9: #{_lambda_.7} parent=0 // pred_fallthru
    _
  // Predicated region
  $region10: #{_lambda_.7} parent=0 // pred_check
    _
  $region11: #{_lambda_.7} parent=0 // pred_check_branch
    %23 = sbr.rel (0) target = $region13
  $region12: #{_lambda_.7} parent=0 // pred_region
    _
  $region13: #{_lambda_.7} parent=0 // pred_fallthru
    _
  // Predicated region
  $region14: #{_lambda_.7} parent=0 // pred_check
    _
  $region15: #{_lambda_.7} parent=0 // pred_check_branch
    %25 = sbr.rel (0) target = $region17
  $region16: #{_lambda_.7} parent=0 // pred_region
    _
  $region17: #{_lambda_.7} parent=0 // pred_fallthru
    _
  // Predicated region
  $region18: #{_lambda_.7} parent=0 // pred_check
    _
  $region19: #{_lambda_.7} parent=0 // pred_check_branch
    %27 = sbr.rel (0) target = $region21
  $region20: #{_lambda_.7} parent=0 // pred_region
    _
  $region21: #{_lambda_.7} parent=0 // pred_fallthru
    _
  // Predicated region
  $region22: #{_lambda_.7} parent=0 // pred_check
    _
  $region23: #{_lambda_.7} parent=0 // pred_check_branch
    %29 = sbr.rel (0) target = $region25
  $region24: #{_lambda_.7} parent=0 // pred_region
    _
  $region25: #{_lambda_.7} parent=0 // pred_fallthru
    _
  // Predicated region
  $region26: #{_lambda_.7} parent=0 // pred_check
    _
  $region27: #{_lambda_.7} parent=0 // pred_check_branch
    %31 = sbr.rel (0) target = $region29
  $region28: #{_lambda_.7} parent=0 // pred_region
    _
  $region29: #{_lambda_.7} parent=0 // pred_fallthru
    _
  // Predicated region
  $region30: #{_lambda_.7} parent=0 // pred_check
    _
  $region31: #{_lambda_.7} parent=0 // pred_check_branch
    %33 = sbr.rel (0) target = $region33
  $region32: #{_lambda_.7} parent=0 // pred_region
    _
  $region33: #{_lambda_.7} parent=0 // pred_fallthru
    _
  // Predicated region
  $region34: #{_lambda_.7} parent=0 // pred_check
    _
  $region35: #{_lambda_.7} parent=0 // pred_check_branch
    %35 = sbr.rel (0) target = $region37
  $region36: #{_lambda_.7} parent=0 // pred_region
    _
  $region37: #{_lambda_.7} parent=0 // pred_fallthru
    _
  // Predicated region
  $region38: #{_lambda_.7} parent=0 // pred_check
    _
  $region39: #{_lambda_.7} parent=0 // pred_check_branch
    %37 = sbr.rel (0) target = $region41
  $region40: #{_lambda_.7} parent=0 // pred_region
    _
  $region41: #{_lambda_.7} parent=0 // pred_fallthru
    _
  // Predicated region
  $region42: #{_lambda_.7} parent=0 // pred_check
    _
  $region43: #{_lambda_.7} parent=0 // pred_check_branch
    %39 = sbr.rel (0) target = $region45
  $region44: #{_lambda_.7} parent=0 // pred_region
    _
  $region45: #{_lambda_.7} parent=0 // pred_fallthru
    _
  // Predicated region
  $region46: #{_lambda_.7} parent=0 // pred_check
    _
  $region47: #{_lambda_.7} parent=0 // pred_check_branch
    %41 = sbr.rel (0) target = $region49
  $region48: #{_lambda_.7} parent=0 // pred_region
    _
  $region49: #{_lambda_.7} parent=0 // pred_fallthru
    _
  // Predicated region
  $region50: #{_lambda_.7} parent=0 // pred_check
    _
  $region51: #{_lambda_.7} parent=0 // pred_check_branch
    %43 = sbr.rel (0) target = $region53
  $region52: #{_lambda_.7} parent=0 // pred_region
    _
  $region53: #{_lambda_.7} parent=0 // pred_fallthru
    _
  %v44 = vld [vmem:[%s0] sm:$0xff]
  %v45 = vld [vmem:[%s0 + $0x8] sm:$0xff]
  %v46 = vld [vmem:[%s0 + $0x10] sm:$0xff]
  %v47 = vld [vmem:[%s0 + $0x18] sm:$0xff]
  %v48 = vld [vmem:[%s0 + $0x20] sm:$0xff]
  %v49 = vld [vmem:[%s0 + $0x28] sm:$0xff]
  %v50 = vld [vmem:[%s3] sm:$0xff]
  %v51 = vld [vmem:[%s3 + $0x8] sm:$0xff]
  %v52 = vld [vmem:[%s3 + $0x10] sm:$0xff]
  %v53 = vld [vmem:[%s3 + $0x18] sm:$0xff]
  %vm54 = vcmask 261120
  %v56 = vsel %vm54, %v44, 0
  %v59 = vsel %vm54, %v45, 0
  %v62 = vsel %vm54, %v46, 0
  %v65 = vsel %vm54, %v47, 0
  %v68 = vsel %vm54, %v48, 0
  %v71 = vsel %vm54, %v49, 0
  %73 = vmatprep.subr.mxu0 0.0
  %74 = vmatpush1.msra.mxu0 0.0
  %75 = vmatprep.subr.mxu0 0.0
  %76 = vmatpush1.msra.mxu0 0.0
  %77 = vmatprep.subr.mxu0 0.0
  %78 = vmatpush1.msra.mxu0 0.0
  %79 = vmatprep.subr.mxu0 0.0
  %80 = vmatpush1.msra.mxu0 0.0
  %81 = vmatprep.subr.mxu0 0.0
  %82 = vmatpush1.msra.mxu0 0.0
  %83 = vmatprep.subr.mxu0 0.0
  %84 = vmatpush1.msra.mxu0 0.0
  %85 = vmatprep.subr.mxu0 0.0
  %86 = vmatpush1.msra.mxu0 0.0
  %87 = vmatprep.subr.mxu0 0.0
  %88 = vmatpush1.msra.mxu0 0.0
  %89 = vmatprep.subr.mxu0 0.0
  %90 = vmatpush1.msra.mxu0 0.0
  %91 = vmatprep.subr.mxu0 0.0
  %92 = vmatpush1.msra.mxu0 0.0
  %93 = vmatprep.subr.mxu0 0.0
  %94 = vmatpush1.msra.mxu0 0.0
  %95 = vmatprep.subr.mxu0 0.0
  %96 = vmatpush1.msra.mxu0 0.0
  %97 = vmatprep.subr.mxu0 0.0
  %98 = vmatpush1.msra.mxu0 %v53
  %99 = vmatprep.subr.mxu0 0.0
  %100 = vmatpush1.msra.mxu0 %v52
  %101 = vmatprep.subr.mxu0 0.0
  %102 = vmatpush1.msra.mxu0 %v51
  %103 = vmatprep.subr.mxu0 0.0
  %104 = vmatpush1.msra.mxu0 %v50
  %105 = vmatprep.subr.mxu0 0.0
  %106 = vmatpush2.msra.mxu0 0.0
  %107 = vmatprep.subr.mxu0 0.0
  %108 = vmatpush2.msra.mxu0 0.0
  %109 = vmatprep.subr.mxu0 0.0
  %110 = vmatpush2.msra.mxu0 0.0
  %111 = vmatprep.subr.mxu0 0.0
  %112 = vmatpush2.msra.mxu0 0.0
  %113 = vmatprep.subr.mxu0 0.0
  %114 = vmatpush2.msra.mxu0 0.0
  %115 = vmatprep.subr.mxu0 0.0
  %116 = vmatpush2.msra.mxu0 0.0
  %117 = vmatprep.subr.mxu0 0.0
  %118 = vmatpush2.msra.mxu0 0.0
  %119 = vmatprep.subr.mxu0 0.0
  %120 = vmatpush2.msra.mxu0 0.0
  %121 = vmatprep.subr.mxu0 0.0
  %122 = vmatpush2.msra.mxu0 0.0
  %123 = vmatprep.subr.mxu0 0.0
  %124 = vmatpush2.msra.mxu0 0.0
  %125 = vmatprep.subr.mxu0 0.0
  %126 = vmatpush2.msra.mxu0 0.0
  %127 = vmatprep.subr.mxu0 0.0
  %128 = vmatpush2.msra.mxu0 0.0
  %129 = vmatprep.subr.mxu0 0.0
  %130 = vmatpush2.msra.mxu0 0.0
  %131 = vmatprep.subr.mxu0 0.0
  %132 = vmatpush2.msra.mxu0 0.0
  %133 = vmatprep.subr.mxu0 0.0
  %134 = vmatpush2.msra.mxu0 0.0
  %135 = vmatprep.subr.mxu0 0.0
  %136 = vmatpush2.msra.mxu0 0.0
  %137 = vmatprep.mubr.f32.mxu0 0.0
  %138 = vmatmul.mubr.f32.gmra.mxu0 %v56
  %v139 = vpop.f32.mrf.mxu0
  %v140 = vadd.f32 0.0, %v139
  %v141 = vpop.f32.mrf.mxu0
  %142 = vmatprep.mubr.f32.mxu0 0.0
  %143 = vmatmul.mubr.f32.gmra.mxu0 %v59
  %v144 = vpop.f32.mrf.mxu0
  %v145 = vadd.f32 0.0, %v144
  %v146 = vpop.f32.mrf.mxu0
  %147 = vmatprep.mubr.f32.mxu0 0.0
  %148 = vmatmul.mubr.f32.gmra.mxu0 %v62
  %v149 = vpop.f32.mrf.mxu0
  %v150 = vadd.f32 0.0, %v149
  %v151 = vpop.f32.mrf.mxu0
  %152 = vmatprep.mubr.f32.mxu0 0.0
  %153 = vmatmul.mubr.f32.gmra.mxu0 %v65
  %v154 = vpop.f32.mrf.mxu0
  %v155 = vadd.f32 0.0, %v154
  %v156 = vpop.f32.mrf.mxu0
  %157 = vmatprep.mubr.f32.mxu0 0.0
  %158 = vmatmul.mubr.f32.gmra.mxu0 %v68
  %v159 = vpop.f32.mrf.mxu0
  %v160 = vadd.f32 0.0, %v159
  %v161 = vpop.f32.mrf.mxu0
  %162 = vmatprep.mubr.f32.mxu0 0.0
  %163 = vmatmul.mubr.f32.gmra.mxu0 %v71
  %v164 = vpop.f32.mrf.mxu0
  %v165 = vadd.f32 0.0, %v164
  %v166 = vpop.f32.mrf.mxu0
  %167 = vdwg.mxu0
  %v168 = vld [vmem:[%s1] sm:$0xff]
  %v169 = vld [vmem:[%s1 + $0x8] sm:$0xff]
  %vm170 = vcmask 392192
  %v172 = vsel %vm170, %v168, 0
  %v175 = vsel %vm170, %v169, 0
  %177 = vmatprep.subr.mxu0 0.0
  %178 = vmatpush1.msra.mxu0 0.0
  %179 = vmatprep.subr.mxu0 0.0
  %180 = vmatpush1.msra.mxu0 0.0
  %181 = vmatprep.subr.mxu0 0.0
  %182 = vmatpush1.msra.mxu0 0.0
  %183 = vmatprep.subr.mxu0 0.0
  %184 = vmatpush1.msra.mxu0 0.0
  %185 = vmatprep.subr.mxu0 0.0
  %186 = vmatpush1.msra.mxu0 0.0
  %187 = vmatprep.subr.mxu0 0.0
  %188 = vmatpush1.msra.mxu0 0.0
  %189 = vmatprep.subr.mxu0 0.0
  %190 = vmatpush1.msra.mxu0 0.0
  %191 = vmatprep.subr.mxu0 0.0
  %192 = vmatpush1.msra.mxu0 0.0
  %193 = vmatprep.subr.mxu0 0.0
  %194 = vmatpush1.msra.mxu0 0.0
  %195 = vmatprep.subr.mxu0 0.0
  %196 = vmatpush1.msra.mxu0 0.0
  %197 = vmatprep.subr.mxu0 0.0
  %198 = vmatpush1.msra.mxu0 %v165
  %199 = vmatprep.subr.mxu0 0.0
  %200 = vmatpush1.msra.mxu0 %v160
  %201 = vmatprep.subr.mxu0 0.0
  %202 = vmatpush1.msra.mxu0 %v155
  %203 = vmatprep.subr.mxu0 0.0
  %204 = vmatpush1.msra.mxu0 %v150
  %205 = vmatprep.subr.mxu0 0.0
  %206 = vmatpush1.msra.mxu0 %v145
  %207 = vmatprep.subr.mxu0 0.0
  %208 = vmatpush1.msra.mxu0 %v140
  %209 = vmatprep.subr.mxu0 0.0
  %210 = vmatpush2.msra.mxu0 0.0
  %211 = vmatprep.subr.mxu0 0.0
  %212 = vmatpush2.msra.mxu0 0.0
  %213 = vmatprep.subr.mxu0 0.0
  %214 = vmatpush2.msra.mxu0 0.0
  %215 = vmatprep.subr.mxu0 0.0
  %216 = vmatpush2.msra.mxu0 0.0
  %217 = vmatprep.subr.mxu0 0.0
  %218 = vmatpush2.msra.mxu0 0.0
  %219 = vmatprep.subr.mxu0 0.0
  %220 = vmatpush2.msra.mxu0 0.0
  %221 = vmatprep.subr.mxu0 0.0
  %222 = vmatpush2.msra.mxu0 0.0
  %223 = vmatprep.subr.mxu0 0.0
  %224 = vmatpush2.msra.mxu0 0.0
  %225 = vmatprep.subr.mxu0 0.0
  %226 = vmatpush2.msra.mxu0 0.0
  %227 = vmatprep.subr.mxu0 0.0
  %228 = vmatpush2.msra.mxu0 0.0
  %229 = vmatprep.subr.mxu0 0.0
  %230 = vmatpush2.msra.mxu0 0.0
  %231 = vmatprep.subr.mxu0 0.0
  %232 = vmatpush2.msra.mxu0 0.0
  %233 = vmatprep.subr.mxu0 0.0
  %234 = vmatpush2.msra.mxu0 0.0
  %235 = vmatprep.subr.mxu0 0.0
  %236 = vmatpush2.msra.mxu0 0.0
  %237 = vmatprep.subr.mxu0 0.0
  %238 = vmatpush2.msra.mxu0 0.0
  %239 = vmatprep.subr.mxu0 0.0
  %240 = vmatpush2.msra.mxu0 0.0
  %241 = vmatprep.mubr.f32.mxu0 0.0
  %242 = vmatmul.mubr.f32.gmra.mxu0 %v172
  %v243 = vpop.f32.mrf.mxu0
  %v244 = vadd.f32 0.0, %v243
  %v245 = vpop.f32.mrf.mxu0
  %246 = vmatprep.mubr.f32.mxu0 0.0
  %247 = vmatmul.mubr.f32.gmra.mxu0 %v175
  %v248 = vpop.f32.mrf.mxu0
  %v249 = vadd.f32 0.0, %v248
  %v250 = vpop.f32.mrf.mxu0
  %251 = vdwg.mxu0
  %v252 = vld [vmem:[%s2] sm:$0xff]
  %v253 = vld [vmem:[%s2 + $0x8] sm:$0xff]
  %v255 = vsel %vm170, %v252, 0
  %v258 = vsel %vm170, %v253, 0
  %260 = vmatprep.subr.mxu0 0.0
  %261 = vmatpush1.msra.mxu0 0.0
  %262 = vmatprep.subr.mxu0 0.0
  %263 = vmatpush1.msra.mxu0 0.0
  %264 = vmatprep.subr.mxu0 0.0
  %265 = vmatpush1.msra.mxu0 0.0
  %266 = vmatprep.subr.mxu0 0.0
  %267 = vmatpush1.msra.mxu0 0.0
  %268 = vmatprep.subr.mxu0 0.0
  %269 = vmatpush1.msra.mxu0 0.0
  %270 = vmatprep.subr.mxu0 0.0
  %271 = vmatpush1.msra.mxu0 0.0
  %272 = vmatprep.subr.mxu0 0.0
  %273 = vmatpush1.msra.mxu0 0.0
  %274 = vmatprep.subr.mxu0 0.0
  %275 = vmatpush1.msra.mxu0 0.0
  %276 = vmatprep.subr.mxu0 0.0
  %277 = vmatpush1.msra.mxu0 0.0
  %278 = vmatprep.subr.mxu0 0.0
  %279 = vmatpush1.msra.mxu0 0.0
  %280 = vmatprep.subr.mxu0 0.0
  %281 = vmatpush1.msra.mxu0 %v165
  %282 = vmatprep.subr.mxu0 0.0
  %283 = vmatpush1.msra.mxu0 %v160
  %284 = vmatprep.subr.mxu0 0.0
  %285 = vmatpush1.msra.mxu0 %v155
  %286 = vmatprep.subr.mxu0 0.0
  %287 = vmatpush1.msra.mxu0 %v150
  %288 = vmatprep.subr.mxu0 0.0
  %289 = vmatpush1.msra.mxu0 %v145
  %290 = vmatprep.subr.mxu0 0.0
  %291 = vmatpush1.msra.mxu0 %v140
  %292 = vmatprep.subr.mxu0 0.0
  %293 = vmatpush2.msra.mxu0 0.0
  %294 = vmatprep.subr.mxu0 0.0
  %295 = vmatpush2.msra.mxu0 0.0
  %296 = vmatprep.subr.mxu0 0.0
  %297 = vmatpush2.msra.mxu0 0.0
  %298 = vmatprep.subr.mxu0 0.0
  %299 = vmatpush2.msra.mxu0 0.0
  %300 = vmatprep.subr.mxu0 0.0
  %301 = vmatpush2.msra.mxu0 0.0
  %302 = vmatprep.subr.mxu0 0.0
  %303 = vmatpush2.msra.mxu0 0.0
  %304 = vmatprep.subr.mxu0 0.0
  %305 = vmatpush2.msra.mxu0 0.0
  %306 = vmatprep.subr.mxu0 0.0
  %307 = vmatpush2.msra.mxu0 0.0
  %308 = vmatprep.subr.mxu0 0.0
  %309 = vmatpush2.msra.mxu0 0.0
  %310 = vmatprep.subr.mxu0 0.0
  %311 = vmatpush2.msra.mxu0 0.0
  %312 = vmatprep.subr.mxu0 0.0
  %313 = vmatpush2.msra.mxu0 0.0
  %314 = vmatprep.subr.mxu0 0.0
  %315 = vmatpush2.msra.mxu0 0.0
  %316 = vmatprep.subr.mxu0 0.0
  %317 = vmatpush2.msra.mxu0 0.0
  %318 = vmatprep.subr.mxu0 0.0
  %319 = vmatpush2.msra.mxu0 0.0
  %320 = vmatprep.subr.mxu0 0.0
  %321 = vmatpush2.msra.mxu0 0.0
  %322 = vmatprep.subr.mxu0 0.0
  %323 = vmatpush2.msra.mxu0 0.0
  %324 = vmatprep.mubr.f32.mxu0 0.0
  %325 = vmatmul.mubr.f32.gmra.mxu0 %v255
  %v326 = vpop.f32.mrf.mxu0
  %v327 = vadd.f32 0.0, %v326
  %v328 = vpop.f32.mrf.mxu0
  %329 = vmatprep.mubr.f32.mxu0 0.0
  %330 = vmatmul.mubr.f32.gmra.mxu0 %v258
  %v331 = vpop.f32.mrf.mxu0
  %v332 = vadd.f32 0.0, %v331
  %v333 = vpop.f32.mrf.mxu0
  %334 = vdwg.mxu0
  %337 = vrot.lane.b32.xlu0 %v327, 96
  %v338 = vpop.permute.xlu0 %337
  %339 = vrot.lane.b32.xlu0 %v332, 96
  %v340 = vpop.permute.xlu0 %339
  %v343 = vadd.f32 %v244, %v338
  %v344 = vadd.f32 %v249, %v340
  %v345 = vld [vmem:[%s4] sm:$0x1]
  %v347 = vlaneseq
  %v348 = vshrl.u32 %v347, 7
  %v349 = vsub.s32 0, %v348
  %v350 = vrot.slane %v345, %v349
  %v352 = vadd.f32 %v343, %v350
  %v353 = vadd.f32 %v344, %v350
  %v354 = vld [vmem:[%s5] sm:$0x1]
  %v356 = vlaneseq
  %v357 = vshrl.u32 %v356, 7
  %v358 = vsub.s32 0, %v357
  %v359 = vrot.slane %v354, %v358
  %360 = vrot.lane.b32.xlu0 %v359, 64
  %v361 = vpop.permute.xlu0 %360
  %v363 = vadd.f32 %v343, %v361
  %v364 = vadd.f32 %v344, %v361
  %v365 = vtanh.pop %v352
  %v366 = vtanh.pop %v353
  %v367 = vxor.u32 %v363, 2147483648
  %v368 = vxor.u32 %v364, 2147483648
  %v369 = vmul.f32 %v367, 1.442695
  %v370 = vpow.pop %v369
  %v371 = vmul.f32 %v368, 1.442695
  %v372 = vpow.pop %v371
  %v373 = vadd.f32 %v370, 1.0
  %v374 = vadd.f32 %v372, 1.0
  %v375 = vrcp.pop %v373
  %v376 = vmul.f32 1.0, %v375
  %v377 = vrcp.pop %v374
  %v378 = vmul.f32 1.0, %v377
  %381 = vrot.lane.b32.xlu0 %v376, 64
  %v382 = vpop.permute.xlu0 %381
  %383 = vrot.lane.b32.xlu0 %v378, 64
  %v384 = vpop.permute.xlu0 %383
  %v387 = vmul.f32 %v365, %v382
  %v388 = vmul.f32 %v366, %v384
  %v389 = vld [vmem:[%s6] sm:$0xff]
  %v390 = vld [vmem:[%s6 + $0x8] sm:$0xff]
  %v391 = vld [vmem:[%s6 + $0x10] sm:$0xff]
  %v392 = vld [vmem:[%s6 + $0x18] sm:$0xff]
  %v393 = vld [vmem:[%s7] sm:$0x1]
  %v395 = vlaneseq
  %v396 = vshrl.u32 %v395, 7
  %v397 = vsub.s32 0, %v396
  %v398 = vrot.slane %v393, %v397
  %v401 = vsel %vm54, %v387, 0
  %v404 = vsel %vm54, %v388, 0
  %406 = vmatprep.subr.mxu0 0.0
  %407 = vmatpush1.msra.mxu0 0.0
  %408 = vmatprep.subr.mxu0 0.0
  %409 = vmatpush1.msra.mxu0 0.0
  %410 = vmatprep.subr.mxu0 0.0
  %411 = vmatpush1.msra.mxu0 0.0
  %412 = vmatprep.subr.mxu0 0.0
  %413 = vmatpush1.msra.mxu0 0.0
  %414 = vmatprep.subr.mxu0 0.0
  %415 = vmatpush1.msra.mxu0 0.0
  %416 = vmatprep.subr.mxu0 0.0
  %417 = vmatpush1.msra.mxu0 0.0
  %418 = vmatprep.subr.mxu0 0.0
  %419 = vmatpush1.msra.mxu0 0.0
  %420 = vmatprep.subr.mxu0 0.0
  %421 = vmatpush1.msra.mxu0 0.0
  %422 = vmatprep.subr.mxu0 0.0
  %423 = vmatpush1.msra.mxu0 0.0
  %424 = vmatprep.subr.mxu0 0.0
  %425 = vmatpush1.msra.mxu0 0.0
  %426 = vmatprep.subr.mxu0 0.0
  %427 = vmatpush1.msra.mxu0 0.0
  %428 = vmatprep.subr.mxu0 0.0
  %429 = vmatpush1.msra.mxu0 0.0
  %430 = vmatprep.subr.mxu0 0.0
  %431 = vmatpush1.msra.mxu0 %v392
  %432 = vmatprep.subr.mxu0 0.0
  %433 = vmatpush1.msra.mxu0 %v391
  %434 = vmatprep.subr.mxu0 0.0
  %435 = vmatpush1.msra.mxu0 %v390
  %436 = vmatprep.subr.mxu0 0.0
  %437 = vmatpush1.msra.mxu0 %v389
  %438 = vmatprep.subr.mxu0 0.0
  %439 = vmatpush2.msra.mxu0 0.0
  %440 = vmatprep.subr.mxu0 0.0
  %441 = vmatpush2.msra.mxu0 0.0
  %442 = vmatprep.subr.mxu0 0.0
  %443 = vmatpush2.msra.mxu0 0.0
  %444 = vmatprep.subr.mxu0 0.0
  %445 = vmatpush2.msra.mxu0 0.0
  %446 = vmatprep.subr.mxu0 0.0
  %447 = vmatpush2.msra.mxu0 0.0
  %448 = vmatprep.subr.mxu0 0.0
  %449 = vmatpush2.msra.mxu0 0.0
  %450 = vmatprep.subr.mxu0 0.0
  %451 = vmatpush2.msra.mxu0 0.0
  %452 = vmatprep.subr.mxu0 0.0
  %453 = vmatpush2.msra.mxu0 0.0
  %454 = vmatprep.subr.mxu0 0.0
  %455 = vmatpush2.msra.mxu0 0.0
  %456 = vmatprep.subr.mxu0 0.0
  %457 = vmatpush2.msra.mxu0 0.0
  %458 = vmatprep.subr.mxu0 0.0
  %459 = vmatpush2.msra.mxu0 0.0
  %460 = vmatprep.subr.mxu0 0.0
  %461 = vmatpush2.msra.mxu0 0.0
  %462 = vmatprep.subr.mxu0 0.0
  %463 = vmatpush2.msra.mxu0 0.0
  %464 = vmatprep.subr.mxu0 0.0
  %465 = vmatpush2.msra.mxu0 0.0
  %466 = vmatprep.subr.mxu0 0.0
  %467 = vmatpush2.msra.mxu0 0.0
  %468 = vmatprep.subr.mxu0 0.0
  %469 = vmatpush2.msra.mxu0 0.0
  %470 = vmatprep.mubr.f32.mxu0 0.0
  %471 = vmatmul.mubr.f32.gmra.mxu0 %v401
  %v472 = vpop.f32.mrf.mxu0
  %v473 = vadd.f32 %v398, %v472
  %v474 = vpop.f32.mrf.mxu0
  %475 = vmatprep.mubr.f32.mxu0 0.0
  %476 = vmatmul.mubr.f32.gmra.mxu0 %v404
  %v477 = vpop.f32.mrf.mxu0
  %v478 = vadd.f32 %v398, %v477
  %v479 = vpop.f32.mrf.mxu0
  %480 = vdwg.mxu0
  %vm481 = vcmask 1048064
  %482 = vst.msk [vmem:[%s13] sm:$0xff] %vm481, %v473
  %483 = vst.msk [vmem:[%s13 + $0x8] sm:$0xff] %vm481, %v478
  %v484 = vld [vmem:[%s9] sm:$0xff]
  %v485 = vld [vmem:[%s9 + $0x8] sm:$0xff]
  %v486 = vld [vmem:[%s10] sm:$0xff]
  %v487 = vld [vmem:[%s10 + $0x8] sm:$0xff]
  %490 = vrot.lane.b32.xlu0 %v473, 96
  %v491 = vpop.permute.xlu0 %490
  %492 = vrot.lane.b32.xlu0 %v478, 96
  %v493 = vpop.permute.xlu0 %492
  %vm496 = vcmask 130048
  %v498 = vsel %vm496, %v486, 0
  %v501 = vsel %vm496, %v487, 0
  %503 = vmatprep.subr.mxu0 0.0
  %504 = vmatpush1.msra.mxu0 0.0
  %505 = vmatprep.subr.mxu0 0.0
  %506 = vmatpush1.msra.mxu0 0.0
  %507 = vmatprep.subr.mxu0 0.0
  %508 = vmatpush1.msra.mxu0 0.0
  %509 = vmatprep.subr.mxu0 0.0
  %510 = vmatpush1.msra.mxu0 0.0
  %511 = vmatprep.subr.mxu0 0.0
  %512 = vmatpush1.msra.mxu0 0.0
  %513 = vmatprep.subr.mxu0 0.0
  %514 = vmatpush1.msra.mxu0 0.0
  %515 = vmatprep.subr.mxu0 0.0
  %516 = vmatpush1.msra.mxu0 0.0
  %517 = vmatprep.subr.mxu0 0.0
  %518 = vmatpush1.msra.mxu0 0.0
  %519 = vmatprep.subr.mxu0 0.0
  %520 = vmatpush1.msra.mxu0 0.0
  %521 = vmatprep.subr.mxu0 0.0
  %522 = vmatpush1.msra.mxu0 0.0
  %523 = vmatprep.subr.mxu0 0.0
  %524 = vmatpush1.msra.mxu0 0.0
  %525 = vmatprep.subr.mxu0 0.0
  %526 = vmatpush1.msra.mxu0 0.0
  %527 = vmatprep.subr.mxu0 0.0
  %528 = vmatpush1.msra.mxu0 0.0
  %529 = vmatprep.subr.mxu0 0.0
  %530 = vmatpush1.msra.mxu0 0.0
  %531 = vmatprep.subr.mxu0 0.0
  %532 = vmatpush1.msra.mxu0 %v493
  %533 = vmatprep.subr.mxu0 0.0
  %534 = vmatpush1.msra.mxu0 %v491
  %535 = vmatprep.subr.mxu0 0.0
  %536 = vmatpush2.msra.mxu0 0.0
  %537 = vmatprep.subr.mxu0 0.0
  %538 = vmatpush2.msra.mxu0 0.0
  %539 = vmatprep.subr.mxu0 0.0
  %540 = vmatpush2.msra.mxu0 0.0
  %541 = vmatprep.subr.mxu0 0.0
  %542 = vmatpush2.msra.mxu0 0.0
  %543 = vmatprep.subr.mxu0 0.0
  %544 = vmatpush2.msra.mxu0 0.0
  %545 = vmatprep.subr.mxu0 0.0
  %546 = vmatpush2.msra.mxu0 0.0
  %547 = vmatprep.subr.mxu0 0.0
  %548 = vmatpush2.msra.mxu0 0.0
  %549 = vmatprep.subr.mxu0 0.0
  %550 = vmatpush2.msra.mxu0 0.0
  %551 = vmatprep.subr.mxu0 0.0
  %552 = vmatpush2.msra.mxu0 0.0
  %553 = vmatprep.subr.mxu0 0.0
  %554 = vmatpush2.msra.mxu0 0.0
  %555 = vmatprep.subr.mxu0 0.0
  %556 = vmatpush2.msra.mxu0 0.0
  %557 = vmatprep.subr.mxu0 0.0
  %558 = vmatpush2.msra.mxu0 0.0
  %559 = vmatprep.subr.mxu0 0.0
  %560 = vmatpush2.msra.mxu0 0.0
  %561 = vmatprep.subr.mxu0 0.0
  %562 = vmatpush2.msra.mxu0 0.0
  %563 = vmatprep.subr.mxu0 0.0
  %564 = vmatpush2.msra.mxu0 0.0
  %565 = vmatprep.subr.mxu0 0.0
  %566 = vmatpush2.msra.mxu0 0.0
  %567 = vmatprep.mubr.f32.mxu0 0.0
  %568 = vmatmul.mubr.f32.gmra.mxu0 %v498
  %v569 = vpop.f32.mrf.mxu0
  %v570 = vadd.f32 0.0, %v569
  %v571 = vpop.f32.mrf.mxu0
  %572 = vmatprep.mubr.f32.mxu0 0.0
  %573 = vmatmul.mubr.f32.gmra.mxu0 %v501
  %v574 = vpop.f32.mrf.mxu0
  %v575 = vadd.f32 0.0, %v574
  %v576 = vpop.f32.mrf.mxu0
  %577 = vdwg.mxu0
  %v579 = vsel %vm496, %v484, 0
  %v582 = vsel %vm496, %v485, 0
  %584 = vmatprep.subr.mxu0 0.0
  %585 = vmatpush1.msra.mxu0 0.0
  %586 = vmatprep.subr.mxu0 0.0
  %587 = vmatpush1.msra.mxu0 0.0
  %588 = vmatprep.subr.mxu0 0.0
  %589 = vmatpush1.msra.mxu0 0.0
  %590 = vmatprep.subr.mxu0 0.0
  %591 = vmatpush1.msra.mxu0 0.0
  %592 = vmatprep.subr.mxu0 0.0
  %593 = vmatpush1.msra.mxu0 0.0
  %594 = vmatprep.subr.mxu0 0.0
  %595 = vmatpush1.msra.mxu0 0.0
  %596 = vmatprep.subr.mxu0 0.0
  %597 = vmatpush1.msra.mxu0 0.0
  %598 = vmatprep.subr.mxu0 0.0
  %599 = vmatpush1.msra.mxu0 0.0
  %600 = vmatprep.subr.mxu0 0.0
  %601 = vmatpush1.msra.mxu0 0.0
  %602 = vmatprep.subr.mxu0 0.0
  %603 = vmatpush1.msra.mxu0 0.0
  %604 = vmatprep.subr.mxu0 0.0
  %605 = vmatpush1.msra.mxu0 0.0
  %606 = vmatprep.subr.mxu0 0.0
  %607 = vmatpush1.msra.mxu0 0.0
  %608 = vmatprep.subr.mxu0 0.0
  %609 = vmatpush1.msra.mxu0 0.0
  %610 = vmatprep.subr.mxu0 0.0
  %611 = vmatpush1.msra.mxu0 0.0
  %612 = vmatprep.subr.mxu0 0.0
  %613 = vmatpush1.msra.mxu0 %v478
  %614 = vmatprep.subr.mxu0 0.0
  %615 = vmatpush1.msra.mxu0 %v473
  %616 = vmatprep.subr.mxu0 0.0
  %617 = vmatpush2.msra.mxu0 0.0
  %618 = vmatprep.subr.mxu0 0.0
  %619 = vmatpush2.msra.mxu0 0.0
  %620 = vmatprep.subr.mxu0 0.0
  %621 = vmatpush2.msra.mxu0 0.0
  %622 = vmatprep.subr.mxu0 0.0
  %623 = vmatpush2.msra.mxu0 0.0
  %624 = vmatprep.subr.mxu0 0.0
  %625 = vmatpush2.msra.mxu0 0.0
  %626 = vmatprep.subr.mxu0 0.0
  %627 = vmatpush2.msra.mxu0 0.0
  %628 = vmatprep.subr.mxu0 0.0
  %629 = vmatpush2.msra.mxu0 0.0
  %630 = vmatprep.subr.mxu0 0.0
  %631 = vmatpush2.msra.mxu0 0.0
  %632 = vmatprep.subr.mxu0 0.0
  %633 = vmatpush2.msra.mxu0 0.0
  %634 = vmatprep.subr.mxu0 0.0
  %635 = vmatpush2.msra.mxu0 0.0
  %636 = vmatprep.subr.mxu0 0.0
  %637 = vmatpush2.msra.mxu0 0.0
  %638 = vmatprep.subr.mxu0 0.0
  %639 = vmatpush2.msra.mxu0 0.0
  %640 = vmatprep.subr.mxu0 0.0
  %641 = vmatpush2.msra.mxu0 0.0
  %642 = vmatprep.subr.mxu0 0.0
  %643 = vmatpush2.msra.mxu0 0.0
  %644 = vmatprep.subr.mxu0 0.0
  %645 = vmatpush2.msra.mxu0 0.0
  %646 = vmatprep.subr.mxu0 0.0
  %647 = vmatpush2.msra.mxu0 0.0
  %648 = vmatprep.mubr.f32.mxu0 0.0
  %649 = vmatmul.mubr.f32.gmra.mxu0 %v579
  %v650 = vpop.f32.mrf.mxu0
  %v651 = vadd.f32 %v570, %v650
  %v652 = vpop.f32.mrf.mxu0
  %653 = vmatprep.mubr.f32.mxu0 0.0
  %654 = vmatmul.mubr.f32.gmra.mxu0 %v582
  %v655 = vpop.f32.mrf.mxu0
  %v656 = vadd.f32 %v575, %v655
  %v657 = vpop.f32.mrf.mxu0
  %658 = vdwg.mxu0
  %v659 = vld [vmem:[%s8] sm:$0x1]
  %v661 = vlaneseq
  %v662 = vshrl.u32 %v661, 7
  %v663 = vsub.s32 0, %v662
  %v664 = vrot.slane %v659, %v663
  %v666 = vadd.f32 %v651, %v664
  %v667 = vadd.f32 %v656, %v664
  %v668 = vld [vmem:[%s2] sm:$0xff]
  %v669 = vld [vmem:[%s2 + $0x8] sm:$0xff]
  %670 = vrot.lane.b32.xlu0 %v44, 96
  %v671 = vpop.permute.xlu0 %670
  %672 = vrot.lane.b32.xlu0 %v45, 96
  %v673 = vpop.permute.xlu0 %672
  %674 = vrot.lane.b32.xlu0 %v46, 96
  %v675 = vpop.permute.xlu0 %674
  %676 = vrot.lane.b32.xlu0 %v47, 96
  %v677 = vpop.permute.xlu0 %676
  %678 = vrot.lane.b32.xlu0 %v48, 96
  %v679 = vpop.permute.xlu0 %678
  %680 = vrot.lane.b32.xlu0 %v49, 96
  %v681 = vpop.permute.xlu0 %680
  %v688 = vadd.f32 %v44, %v671
  %v689 = vadd.f32 %v45, %v673
  %v690 = vadd.f32 %v46, %v675
  %v691 = vadd.f32 %v47, %v677
  %v692 = vadd.f32 %v48, %v679
  %v693 = vadd.f32 %v49, %v681
  %v695 = vsel %vm170, %v668, 0
  %v698 = vsel %vm170, %v669, 0
  %700 = vmatprep.subr.mxu0 0.0
  %701 = vmatpush1.msra.mxu0 0.0
  %702 = vmatprep.subr.mxu0 0.0
  %703 = vmatpush1.msra.mxu0 0.0
  %704 = vmatprep.subr.mxu0 0.0
  %705 = vmatpush1.msra.mxu0 0.0
  %706 = vmatprep.subr.mxu0 0.0
  %707 = vmatpush1.msra.mxu0 0.0
  %708 = vmatprep.subr.mxu0 0.0
  %709 = vmatpush1.msra.mxu0 0.0
  %710 = vmatprep.subr.mxu0 0.0
  %711 = vmatpush1.msra.mxu0 0.0
  %712 = vmatprep.subr.mxu0 0.0
  %713 = vmatpush1.msra.mxu0 0.0
  %714 = vmatprep.subr.mxu0 0.0
  %715 = vmatpush1.msra.mxu0 0.0
  %716 = vmatprep.subr.mxu0 0.0
  %717 = vmatpush1.msra.mxu0 0.0
  %718 = vmatprep.subr.mxu0 0.0
  %719 = vmatpush1.msra.mxu0 0.0
  %720 = vmatprep.subr.mxu0 0.0
  %721 = vmatpush1.msra.mxu0 %v693
  %722 = vmatprep.subr.mxu0 0.0
  %723 = vmatpush1.msra.mxu0 %v692
  %724 = vmatprep.subr.mxu0 0.0
  %725 = vmatpush1.msra.mxu0 %v691
  %726 = vmatprep.subr.mxu0 0.0
  %727 = vmatpush1.msra.mxu0 %v690
  %728 = vmatprep.subr.mxu0 0.0
  %729 = vmatpush1.msra.mxu0 %v689
  %730 = vmatprep.subr.mxu0 0.0
  %731 = vmatpush1.msra.mxu0 %v688
  %732 = vmatprep.subr.mxu0 0.0
  %733 = vmatpush2.msra.mxu0 0.0
  %734 = vmatprep.subr.mxu0 0.0
  %735 = vmatpush2.msra.mxu0 0.0
  %736 = vmatprep.subr.mxu0 0.0
  %737 = vmatpush2.msra.mxu0 0.0
  %738 = vmatprep.subr.mxu0 0.0
  %739 = vmatpush2.msra.mxu0 0.0
  %740 = vmatprep.subr.mxu0 0.0
  %741 = vmatpush2.msra.mxu0 0.0
  %742 = vmatprep.subr.mxu0 0.0
  %743 = vmatpush2.msra.mxu0 0.0
  %744 = vmatprep.subr.mxu0 0.0
  %745 = vmatpush2.msra.mxu0 0.0
  %746 = vmatprep.subr.mxu0 0.0
  %747 = vmatpush2.msra.mxu0 0.0
  %748 = vmatprep.subr.mxu0 0.0
  %749 = vmatpush2.msra.mxu0 0.0
  %750 = vmatprep.subr.mxu0 0.0
  %751 = vmatpush2.msra.mxu0 0.0
  %752 = vmatprep.subr.mxu0 0.0
  %753 = vmatpush2.msra.mxu0 0.0
  %754 = vmatprep.subr.mxu0 0.0
  %755 = vmatpush2.msra.mxu0 0.0
  %756 = vmatprep.subr.mxu0 0.0
  %757 = vmatpush2.msra.mxu0 0.0
  %758 = vmatprep.subr.mxu0 0.0
  %759 = vmatpush2.msra.mxu0 0.0
  %760 = vmatprep.subr.mxu0 0.0
  %761 = vmatpush2.msra.mxu0 0.0
  %762 = vmatprep.subr.mxu0 0.0
  %763 = vmatpush2.msra.mxu0 0.0
  %764 = vmatprep.mubr.f32.mxu0 0.0
  %765 = vmatmul.mubr.f32.gmra.mxu0 %v695
  %v766 = vpop.f32.mrf.mxu0
  %v767 = vadd.f32 0.0, %v766
  %v768 = vpop.f32.mrf.mxu0
  %769 = vmatprep.mubr.f32.mxu0 0.0
  %770 = vmatmul.mubr.f32.gmra.mxu0 %v698
  %v771 = vpop.f32.mrf.mxu0
  %v772 = vadd.f32 0.0, %v771
  %v773 = vpop.f32.mrf.mxu0
  %774 = vdwg.mxu0
  %777 = vrot.lane.b32.xlu0 %v767, 32
  %v778 = vpop.permute.xlu0 %777
  %779 = vrot.lane.b32.xlu0 %v772, 32
  %v780 = vpop.permute.xlu0 %779
  %vm783 = vcmask 523520
  %784 = vst.msk [vmem:[%s13] sm:$0xff] %vm783, %v778
  %785 = vst.msk [vmem:[%s13 + $0x8] sm:$0xff] %vm783, %v780
  %v786 = vxor.u32 %v666, 2147483648
  %v787 = vxor.u32 %v667, 2147483648
  %v788 = vmul.f32 %v786, 1.442695
  %v789 = vpow.pop %v788
  %v790 = vmul.f32 %v787, 1.442695
  %v791 = vpow.pop %v790
  %v792 = vadd.f32 %v789, 1.0
  %v793 = vadd.f32 %v791, 1.0
  %v794 = vrcp.pop %v792
  %v795 = vmul.f32 1.0, %v794
  %v796 = vrcp.pop %v793
  %v797 = vmul.f32 1.0, %v796
  %v798 = vmul.f32 %v666, %v795
  %v799 = vmul.f32 %v667, %v797
  %v800 = vsub.f32 1.0, %v795
  %v801 = vsub.f32 1.0, %v797
  %v802 = vmul.f32 %v767, %v800
  %v803 = vmul.f32 %v772, %v801
  %v804 = vadd.f32 %v798, %v802
  %v805 = vadd.f32 %v799, %v803
  %v806 = vld [vmem:[%s11] sm:$0xff]
  %v807 = vld [vmem:[%s12] sm:$0xff]
  %v808 = vsel %vm54, %v804, 0.0
  %809 = vadd.xlane.f32.xlu0 %v808
  %v810 = vpop.xlane.xlu0 %809
  %v811 = vrot.slane %v810, 4
  %v812 = vadd.f32 %v810, %v811
  %v813 = vrot.slane %v812, 2
  %v814 = vadd.f32 %v812, %v813
  %v815 = vrot.slane %v814, 1
  %v816 = vadd.f32 %v814, %v815
  %v817 = vmul.f32 %v816, 0.00390625
  %v818 = vsub.f32 %v804, %v817
  %v819 = vmul.f32 %v818, %v818
  %v820 = vsel %vm54, %v819, 0.0
  %821 = vadd.xlane.f32.xlu0 %v820
  %v822 = vpop.xlane.xlu0 %821
  %v823 = vrot.slane %v822, 4
  %v824 = vadd.f32 %v822, %v823
  %v825 = vrot.slane %v824, 2
  %v826 = vadd.f32 %v824, %v825
  %v827 = vrot.slane %v826, 1
  %v828 = vadd.f32 %v826, %v827
  %v829 = vmul.f32 %v828, 0.00390625
  %v830 = vadd.f32 %v829, 1e-05
  %v831 = vrsqrt.pop %v830
  %v832 = vmul.f32 %v818, %v831
  %v833 = vmul.f32 %v832, %v806
  %v834 = vadd.f32 %v833, %v807
  %835 = vst.msk [vmem:[%s13] sm:$0xff] %vm54, %v834
  %v836 = vsel %vm54, %v805, 0.0
  %837 = vadd.xlane.f32.xlu0 %v836
  %v838 = vpop.xlane.xlu0 %837
  %v839 = vrot.slane %v838, 4
  %v840 = vadd.f32 %v838, %v839
  %v841 = vrot.slane %v840, 2
  %v842 = vadd.f32 %v840, %v841
  %v843 = vrot.slane %v842, 1
  %v844 = vadd.f32 %v842, %v843
  %v845 = vmul.f32 %v844, 0.00390625
  %v846 = vsub.f32 %v805, %v845
  %v847 = vmul.f32 %v846, %v846
  %v848 = vsel %vm54, %v847, 0.0
  %849 = vadd.xlane.f32.xlu0 %v848
  %v850 = vpop.xlane.xlu0 %849
  %v851 = vrot.slane %v850, 4
  %v852 = vadd.f32 %v850, %v851
  %v853 = vrot.slane %v852, 2
  %v854 = vadd.f32 %v852, %v853
  %v855 = vrot.slane %v854, 1
  %v856 = vadd.f32 %v854, %v855
  %v857 = vmul.f32 %v856, 0.00390625
  %v858 = vadd.f32 %v857, 1e-05
  %v859 = vrsqrt.pop %v858
  %v860 = vmul.f32 %v846, %v859
  %v861 = vmul.f32 %v860, %v806
  %v862 = vadd.f32 %v861, %v807
  %863 = vst.msk [vmem:[%s13 + $0x8] sm:$0xff] %vm54, %v862
  // Predicated region
  $region54: #{_lambda_.7} parent=0 // pred_check
    _
  $region55: #{_lambda_.7} parent=0 // pred_check_branch
    %865 = sbr.rel (0) target = $region57
  $region56: #{_lambda_.7} parent=0 // pred_region
    _
  $region57: #{_lambda_.7} parent=0 // pred_fallthru
    _
  // Predicated region
  $region58: #{_lambda_.7} parent=0 // pred_check
    _
  $region59: #{_lambda_.7} parent=0 // pred_check_branch
    %867 = sbr.rel (0) target = $region61
  $region60: #{_lambda_.7} parent=0 // pred_region
    _
  $region61: #{_lambda_.7} parent=0 // pred_fallthru
    _

// kernel: _lambda_.8
$region0: #{_lambda_.8}
  #allocation0 [shape = 'u32[]', space=smem, size = 0x4, offset = 0x4, fixed_abs, tag = 'smem constant byte address 0x4 - core index']
  #allocation1 [shape = 'u32[144,128]{1,0:T(1,128)}', space=vmem, size = 0x12000, scoped, tag = 'internal scratch']
  %s0 = inlined_call_operand.vmem [shape: f32[16,128], index: 0, kind: input, shape index: {}]
  %s1 = inlined_call_operand.vmem [shape: f32[128,128], index: 1, kind: input, shape index: {}]
  %s2 = inlined_call_operand.vmem [shape: f32[1,128], index: 2, kind: input, shape index: {}]
  %s3 = inlined_call_operand.vmem [shape: f32[128,8], index: 3, kind: input, shape index: {}]
  %s4 = inlined_call_operand.vmem [shape: f32[1,8], index: 4, kind: input, shape index: {}]
  %s5 = inlined_call_operand.vmem [shape: f32[16,8], index: 5, kind: output, shape index: {}]
  %s6 = sld [smem:[#allocation0]]
  $region30: #{_lambda_.8} parent=0
    _
  %s8 = ssub.s32 1, %s6
  %s9 = scalar_select 0, %s8, %s6
  // Predicated region
  $region2: #{_lambda_.8} parent=0 // pred_check
    _
  $region3: #{_lambda_.8} parent=0 // pred_check_branch
    %11 = sbr.rel (0) target = $region5
  $region4: #{_lambda_.8} parent=0 // pred_region
    _
  $region5: #{_lambda_.8} parent=0 // pred_fallthru
    _
  // Predicated region
  $region6: #{_lambda_.8} parent=0 // pred_check
    _
  $region7: #{_lambda_.8} parent=0 // pred_check_branch
    %13 = sbr.rel (0) target = $region9
  $region8: #{_lambda_.8} parent=0 // pred_region
    _
  $region9: #{_lambda_.8} parent=0 // pred_fallthru
    _
  // Predicated region
  $region10: #{_lambda_.8} parent=0 // pred_check
    _
  $region11: #{_lambda_.8} parent=0 // pred_check_branch
    %15 = sbr.rel (0) target = $region13
  $region12: #{_lambda_.8} parent=0 // pred_region
    _
  $region13: #{_lambda_.8} parent=0 // pred_fallthru
    _
  // Predicated region
  $region14: #{_lambda_.8} parent=0 // pred_check
    _
  $region15: #{_lambda_.8} parent=0 // pred_check_branch
    %17 = sbr.rel (0) target = $region17
  $region16: #{_lambda_.8} parent=0 // pred_region
    _
  $region17: #{_lambda_.8} parent=0 // pred_fallthru
    _
  // Predicated region
  $region18: #{_lambda_.8} parent=0 // pred_check
    _
  $region19: #{_lambda_.8} parent=0 // pred_check_branch
    %19 = sbr.rel (0) target = $region21
  $region20: #{_lambda_.8} parent=0 // pred_region
    _
  $region21: #{_lambda_.8} parent=0 // pred_fallthru
    _
  %v20 = vld [vmem:[%s0] sm:$0xff]
  %v21 = vld [vmem:[%s0 + $0x8] sm:$0xff]
  %v22 = vmax.f32 %v20, 0.0
  %v23 = vmax.f32 %v21, 0.0
  %v24 = vld [vmem:[%s1] sm:$0xff]
  %v25 = vld [vmem:[%s1 + $0x8] sm:$0xff]
  %v26 = vld [vmem:[%s1 + $0x10] sm:$0xff]
  %v27 = vld [vmem:[%s1 + $0x18] sm:$0xff]
  %v28 = vld [vmem:[%s1 + $0x20] sm:$0xff]
  %v29 = vld [vmem:[%s1 + $0x28] sm:$0xff]
  %v30 = vld [vmem:[%s1 + $0x30] sm:$0xff]
  %v31 = vld [vmem:[%s1 + $0x38] sm:$0xff]
  %v32 = vld [vmem:[%s1 + $0x40] sm:$0xff]
  %v33 = vld [vmem:[%s1 + $0x48] sm:$0xff]
  %v34 = vld [vmem:[%s1 + $0x50] sm:$0xff]
  %v35 = vld [vmem:[%s1 + $0x58] sm:$0xff]
  %v36 = vld [vmem:[%s1 + $0x60] sm:$0xff]
  %v37 = vld [vmem:[%s1 + $0x68] sm:$0xff]
  %v38 = vld [vmem:[%s1 + $0x70] sm:$0xff]
  %v39 = vld [vmem:[%s1 + $0x78] sm:$0xff]
  %v40 = vld [vmem:[%s2] sm:$0x1]
  %v42 = vlaneseq
  %v43 = vshrl.u32 %v42, 7
  %v44 = vsub.s32 0, %v43
  %v45 = vrot.slane %v40, %v44
  %47 = vmatprep.subr.mxu0 0.0
  %48 = vmatpush1.msra.mxu0 %v39
  %49 = vmatprep.subr.mxu0 0.0
  %50 = vmatpush1.msra.mxu0 %v38
  %51 = vmatprep.subr.mxu0 0.0
  %52 = vmatpush1.msra.mxu0 %v37
  %53 = vmatprep.subr.mxu0 0.0
  %54 = vmatpush1.msra.mxu0 %v36
  %55 = vmatprep.subr.mxu0 0.0
  %56 = vmatpush1.msra.mxu0 %v35
  %57 = vmatprep.subr.mxu0 0.0
  %58 = vmatpush1.msra.mxu0 %v34
  %59 = vmatprep.subr.mxu0 0.0
  %60 = vmatpush1.msra.mxu0 %v33
  %61 = vmatprep.subr.mxu0 0.0
  %62 = vmatpush1.msra.mxu0 %v32
  %63 = vmatprep.subr.mxu0 0.0
  %64 = vmatpush1.msra.mxu0 %v31
  %65 = vmatprep.subr.mxu0 0.0
  %66 = vmatpush1.msra.mxu0 %v30
  %67 = vmatprep.subr.mxu0 0.0
  %68 = vmatpush1.msra.mxu0 %v29
  %69 = vmatprep.subr.mxu0 0.0
  %70 = vmatpush1.msra.mxu0 %v28
  %71 = vmatprep.subr.mxu0 0.0
  %72 = vmatpush1.msra.mxu0 %v27
  %73 = vmatprep.subr.mxu0 0.0
  %74 = vmatpush1.msra.mxu0 %v26
  %75 = vmatprep.subr.mxu0 0.0
  %76 = vmatpush1.msra.mxu0 %v25
  %77 = vmatprep.subr.mxu0 0.0
  %78 = vmatpush1.msra.mxu0 %v24
  %79 = vmatprep.subr.mxu0 0.0
  %80 = vmatpush2.msra.mxu0 0.0
  %81 = vmatprep.subr.mxu0 0.0
  %82 = vmatpush2.msra.mxu0 0.0
  %83 = vmatprep.subr.mxu0 0.0
  %84 = vmatpush2.msra.mxu0 0.0
  %85 = vmatprep.subr.mxu0 0.0
  %86 = vmatpush2.msra.mxu0 0.0
  %87 = vmatprep.subr.mxu0 0.0
  %88 = vmatpush2.msra.mxu0 0.0
  %89 = vmatprep.subr.mxu0 0.0
  %90 = vmatpush2.msra.mxu0 0.0
  %91 = vmatprep.subr.mxu0 0.0
  %92 = vmatpush2.msra.mxu0 0.0
  %93 = vmatprep.subr.mxu0 0.0
  %94 = vmatpush2.msra.mxu0 0.0
  %95 = vmatprep.subr.mxu0 0.0
  %96 = vmatpush2.msra.mxu0 0.0
  %97 = vmatprep.subr.mxu0 0.0
  %98 = vmatpush2.msra.mxu0 0.0
  %99 = vmatprep.subr.mxu0 0.0
  %100 = vmatpush2.msra.mxu0 0.0
  %101 = vmatprep.subr.mxu0 0.0
  %102 = vmatpush2.msra.mxu0 0.0
  %103 = vmatprep.subr.mxu0 0.0
  %104 = vmatpush2.msra.mxu0 0.0
  %105 = vmatprep.subr.mxu0 0.0
  %106 = vmatpush2.msra.mxu0 0.0
  %107 = vmatprep.subr.mxu0 0.0
  %108 = vmatpush2.msra.mxu0 0.0
  %109 = vmatprep.subr.mxu0 0.0
  %110 = vmatpush2.msra.mxu0 0.0
  %111 = vmatprep.mubr.f32.mxu0 0.0
  %112 = vmatmul.mubr.f32.gmra.mxu0 %v22
  %v113 = vpop.f32.mrf.mxu0
  %v114 = vadd.f32 %v45, %v113
  %v115 = vpop.f32.mrf.mxu0
  %116 = vmatprep.mubr.f32.mxu0 0.0
  %117 = vmatmul.mubr.f32.gmra.mxu0 %v23
  %v118 = vpop.f32.mrf.mxu0
  %v119 = vadd.f32 %v45, %v118
  %v120 = vpop.f32.mrf.mxu0
  %121 = vdwg.mxu0
  %v122 = vmax.f32 %v114, 0.0
  %v123 = vmax.f32 %v119, 0.0
  %v124 = vld [vmem:[%s3] sm:$0xff]
  %v125 = vld [vmem:[%s3 + $0x8] sm:$0xff]
  %v126 = vld [vmem:[%s3 + $0x10] sm:$0xff]
  %v127 = vld [vmem:[%s3 + $0x18] sm:$0xff]
  %v128 = vld [vmem:[%s3 + $0x20] sm:$0xff]
  %v129 = vld [vmem:[%s3 + $0x28] sm:$0xff]
  %v130 = vld [vmem:[%s3 + $0x30] sm:$0xff]
  %v131 = vld [vmem:[%s3 + $0x38] sm:$0xff]
  %v132 = vld [vmem:[%s3 + $0x40] sm:$0xff]
  %v133 = vld [vmem:[%s3 + $0x48] sm:$0xff]
  %v134 = vld [vmem:[%s3 + $0x50] sm:$0xff]
  %v135 = vld [vmem:[%s3 + $0x58] sm:$0xff]
  %v136 = vld [vmem:[%s3 + $0x60] sm:$0xff]
  %v137 = vld [vmem:[%s3 + $0x68] sm:$0xff]
  %v138 = vld [vmem:[%s3 + $0x70] sm:$0xff]
  %v139 = vld [vmem:[%s3 + $0x78] sm:$0xff]
  %v140 = vld [vmem:[%s4] sm:$0x1]
  %v142 = vlaneseq
  %v143 = vshrl.u32 %v142, 7
  %v144 = vsub.s32 0, %v143
  %v145 = vrot.slane %v140, %v144
  %147 = vmatprep.subr.mxu0 0.0
  %148 = vmatpush1.msra.mxu0 %v139
  %149 = vmatprep.subr.mxu0 0.0
  %150 = vmatpush1.msra.mxu0 %v138
  %151 = vmatprep.subr.mxu0 0.0
  %152 = vmatpush1.msra.mxu0 %v137
  %153 = vmatprep.subr.mxu0 0.0
  %154 = vmatpush1.msra.mxu0 %v136
  %155 = vmatprep.subr.mxu0 0.0
  %156 = vmatpush1.msra.mxu0 %v135
  %157 = vmatprep.subr.mxu0 0.0
  %158 = vmatpush1.msra.mxu0 %v134
  %159 = vmatprep.subr.mxu0 0.0
  %160 = vmatpush1.msra.mxu0 %v133
  %161 = vmatprep.subr.mxu0 0.0
  %162 = vmatpush1.msra.mxu0 %v132
  %163 = vmatprep.subr.mxu0 0.0
  %164 = vmatpush1.msra.mxu0 %v131
  %165 = vmatprep.subr.mxu0 0.0
  %166 = vmatpush1.msra.mxu0 %v130
  %167 = vmatprep.subr.mxu0 0.0
  %168 = vmatpush1.msra.mxu0 %v129
  %169 = vmatprep.subr.mxu0 0.0
  %170 = vmatpush1.msra.mxu0 %v128
  %171 = vmatprep.subr.mxu0 0.0
  %172 = vmatpush1.msra.mxu0 %v127
  %173 = vmatprep.subr.mxu0 0.0
  %174 = vmatpush1.msra.mxu0 %v126
  %175 = vmatprep.subr.mxu0 0.0
  %176 = vmatpush1.msra.mxu0 %v125
  %177 = vmatprep.subr.mxu0 0.0
  %178 = vmatpush1.msra.mxu0 %v124
  %179 = vmatprep.subr.mxu0 0.0
  %180 = vmatpush2.msra.mxu0 0.0
  %181 = vmatprep.subr.mxu0 0.0
  %182 = vmatpush2.msra.mxu0 0.0
  %183 = vmatprep.subr.mxu0 0.0
  %184 = vmatpush2.msra.mxu0 0.0
  %185 = vmatprep.subr.mxu0 0.0
  %186 = vmatpush2.msra.mxu0 0.0
  %187 = vmatprep.subr.mxu0 0.0
  %188 = vmatpush2.msra.mxu0 0.0
  %189 = vmatprep.subr.mxu0 0.0
  %190 = vmatpush2.msra.mxu0 0.0
  %191 = vmatprep.subr.mxu0 0.0
  %192 = vmatpush2.msra.mxu0 0.0
  %193 = vmatprep.subr.mxu0 0.0
  %194 = vmatpush2.msra.mxu0 0.0
  %195 = vmatprep.subr.mxu0 0.0
  %196 = vmatpush2.msra.mxu0 0.0
  %197 = vmatprep.subr.mxu0 0.0
  %198 = vmatpush2.msra.mxu0 0.0
  %199 = vmatprep.subr.mxu0 0.0
  %200 = vmatpush2.msra.mxu0 0.0
  %201 = vmatprep.subr.mxu0 0.0
  %202 = vmatpush2.msra.mxu0 0.0
  %203 = vmatprep.subr.mxu0 0.0
  %204 = vmatpush2.msra.mxu0 0.0
  %205 = vmatprep.subr.mxu0 0.0
  %206 = vmatpush2.msra.mxu0 0.0
  %207 = vmatprep.subr.mxu0 0.0
  %208 = vmatpush2.msra.mxu0 0.0
  %209 = vmatprep.subr.mxu0 0.0
  %210 = vmatpush2.msra.mxu0 0.0
  %211 = vmatprep.mubr.f32.mxu0 0.0
  %212 = vmatmul.mubr.f32.gmra.mxu0 %v122
  %v213 = vpop.f32.mrf.mxu0
  %v214 = vadd.f32 %v145, %v213
  %v215 = vpop.f32.mrf.mxu0
  %216 = vmatprep.mubr.f32.mxu0 0.0
  %217 = vmatmul.mubr.f32.gmra.mxu0 %v123
  %v218 = vpop.f32.mrf.mxu0
  %v219 = vadd.f32 %v145, %v218
  %v220 = vpop.f32.mrf.mxu0
  %221 = vdwg.mxu0
  %v222 = vxor.u32 %v214, 2147483648
  %v223 = vxor.u32 %v219, 2147483648
  %v224 = vmul.f32 %v222, 1.442695
  %v225 = vpow.pop %v224
  %v226 = vmul.f32 %v223, 1.442695
  %v227 = vpow.pop %v226
  %v228 = vadd.f32 %v225, 1.0
  %v229 = vadd.f32 %v227, 1.0
  %v230 = vrcp.pop %v228
  %v231 = vmul.f32 1.0, %v230
  %v232 = vrcp.pop %v229
  %v233 = vmul.f32 1.0, %v232
  %vm234 = vcmask 64512
  %235 = vst.msk [vmem:[%s5] sm:$0xff] %vm234, %v231
  %236 = vst.msk [vmem:[%s5 + $0x8] sm:$0xff] %vm234, %v233
  // Predicated region
  $region22: #{_lambda_.8} parent=0 // pred_check
    _
  $region23: #{_lambda_.8} parent=0 // pred_check_branch
    %238 = sbr.rel (0) target = $region25
  $region24: #{_lambda_.8} parent=0 // pred_region
    _
  $region25: #{_lambda_.8} parent=0 // pred_fallthru
    _
  // Predicated region
  $region26: #{_lambda_.8} parent=0 // pred_check
    _
  $region27: #{_lambda_.8} parent=0 // pred_check_branch
    %240 = sbr.rel (0) target = $region29
  $region28: #{_lambda_.8} parent=0 // pred_region
    _
  $region29: #{_lambda_.8} parent=0 // pred_fallthru
    _

// kernel: _lambda_.9
$region0: #{_lambda_.9}
  #allocation0 [shape = 'u32[]', space=smem, size = 0x4, offset = 0x4, fixed_abs, tag = 'smem constant byte address 0x4 - core index']
  #allocation1 [shape = 'u32[144,128]{1,0:T(1,128)}', space=vmem, size = 0x12000, scoped, tag = 'internal scratch']
  %s0 = inlined_call_operand.vmem [shape: f32[4,2,8], index: 0, kind: input, shape index: {}]
  %s1 = inlined_call_operand.vmem [shape: f32[4,2,8], index: 1, kind: input, shape index: {}]
  %s2 = inlined_call_operand.vmem [shape: f32[8,8], index: 2, kind: input, shape index: {}]
  %s3 = inlined_call_operand.vmem [shape: f32[8,8], index: 3, kind: input, shape index: {}]
  %s4 = inlined_call_operand.vmem [shape: f32[2,8], index: 4, kind: input, shape index: {}]
  %s5 = inlined_call_operand.vmem [shape: f32[2,8], index: 5, kind: input, shape index: {}]
  %s6 = inlined_call_operand.vmem [shape: f32[2,8], index: 6, kind: input, shape index: {}]
  %s7 = inlined_call_operand.vmem [shape: f32[4,2,8], index: 7, kind: output, shape index: {}]
  %s8 = sld [smem:[#allocation0]]
  $region38: #{_lambda_.9} parent=0
    _
  %s10 = ssub.s32 1, %s8
  %s11 = scalar_select 0, %s10, %s8
  // Predicated region
  $region2: #{_lambda_.9} parent=0 // pred_check
    _
  $region3: #{_lambda_.9} parent=0 // pred_check_branch
    %13 = sbr.rel (0) target = $region5
  $region4: #{_lambda_.9} parent=0 // pred_region
    _
  $region5: #{_lambda_.9} parent=0 // pred_fallthru
    _
  // Predicated region
  $region6: #{_lambda_.9} parent=0 // pred_check
    _
  $region7: #{_lambda_.9} parent=0 // pred_check_branch
    %15 = sbr.rel (0) target = $region9
  $region8: #{_lambda_.9} parent=0 // pred_region
    _
  $region9: #{_lambda_.9} parent=0 // pred_fallthru
    _
  // Predicated region
  $region10: #{_lambda_.9} parent=0 // pred_check
    _
  $region11: #{_lambda_.9} parent=0 // pred_check_branch
    %17 = sbr.rel (0) target = $region13
  $region12: #{_lambda_.9} parent=0 // pred_region
    _
  $region13: #{_lambda_.9} parent=0 // pred_fallthru
    _
  // Predicated region
  $region14: #{_lambda_.9} parent=0 // pred_check
    _
  $region15: #{_lambda_.9} parent=0 // pred_check_branch
    %19 = sbr.rel (0) target = $region17
  $region16: #{_lambda_.9} parent=0 // pred_region
    _
  $region17: #{_lambda_.9} parent=0 // pred_fallthru
    _
  // Predicated region
  $region18: #{_lambda_.9} parent=0 // pred_check
    _
  $region19: #{_lambda_.9} parent=0 // pred_check_branch
    %21 = sbr.rel (0) target = $region21
  $region20: #{_lambda_.9} parent=0 // pred_region
    _
  $region21: #{_lambda_.9} parent=0 // pred_fallthru
    _
  // Predicated region
  $region22: #{_lambda_.9} parent=0 // pred_check
    _
  $region23: #{_lambda_.9} parent=0 // pred_check_branch
    %23 = sbr.rel (0) target = $region25
  $region24: #{_lambda_.9} parent=0 // pred_region
    _
  $region25: #{_lambda_.9} parent=0 // pred_fallthru
    _
  // Predicated region
  $region26: #{_lambda_.9} parent=0 // pred_check
    _
  $region27: #{_lambda_.9} parent=0 // pred_check_branch
    %25 = sbr.rel (0) target = $region29
  $region28: #{_lambda_.9} parent=0 // pred_region
    _
  $region29: #{_lambda_.9} parent=0 // pred_fallthru
    _
  %v26 = vld [vmem:[%s2] sm:$0xff]
  %v27 = vld [vmem:[%s3] sm:$0xff]
  %v28 = vld [vmem:[%s4] sm:$0x3]
  %v29 = vld [vmem:[%s5] sm:$0x3]
  %v30 = vld [vmem:[%s6] sm:$0x3]
  %v31 = vadd.f32 %v28, %v29
  %v32 = vadd.f32 %v31, %v30
  %v33 = vmax.f32 %v32, 1e-12
  %v34 = vrcp.pop %v33
  %v35 = vmul.f32 1.0, %v34
  %v36 = vmul.f32 %v29, %v35
  %vm37 = vcmask 64512
  %v39 = vsel %vm37, %v29, 0
  %41 = vmatprep.subr.mxu0 0.0
  %42 = vmatpush1.msra.mxu0 0.0
  %43 = vmatprep.subr.mxu0 0.0
  %44 = vmatpush1.msra.mxu0 0.0
  %45 = vmatprep.subr.mxu0 0.0
  %46 = vmatpush1.msra.mxu0 0.0
  %47 = vmatprep.subr.mxu0 0.0
  %48 = vmatpush1.msra.mxu0 0.0
  %49 = vmatprep.subr.mxu0 0.0
  %50 = vmatpush1.msra.mxu0 0.0
  %51 = vmatprep.subr.mxu0 0.0
  %52 = vmatpush1.msra.mxu0 0.0
  %53 = vmatprep.subr.mxu0 0.0
  %54 = vmatpush1.msra.mxu0 0.0
  %55 = vmatprep.subr.mxu0 0.0
  %56 = vmatpush1.msra.mxu0 0.0
  %57 = vmatprep.subr.mxu0 0.0
  %58 = vmatpush1.msra.mxu0 0.0
  %59 = vmatprep.subr.mxu0 0.0
  %60 = vmatpush1.msra.mxu0 0.0
  %61 = vmatprep.subr.mxu0 0.0
  %62 = vmatpush1.msra.mxu0 0.0
  %63 = vmatprep.subr.mxu0 0.0
  %64 = vmatpush1.msra.mxu0 0.0
  %65 = vmatprep.subr.mxu0 0.0
  %66 = vmatpush1.msra.mxu0 0.0
  %67 = vmatprep.subr.mxu0 0.0
  %68 = vmatpush1.msra.mxu0 0.0
  %69 = vmatprep.subr.mxu0 0.0
  %70 = vmatpush1.msra.mxu0 0.0
  %71 = vmatprep.subr.mxu0 0.0
  %72 = vmatpush1.msra.mxu0 %v27
  %73 = vmatprep.subr.mxu0 0.0
  %74 = vmatpush2.msra.mxu0 0.0
  %75 = vmatprep.subr.mxu0 0.0
  %76 = vmatpush2.msra.mxu0 0.0
  %77 = vmatprep.subr.mxu0 0.0
  %78 = vmatpush2.msra.mxu0 0.0
  %79 = vmatprep.subr.mxu0 0.0
  %80 = vmatpush2.msra.mxu0 0.0
  %81 = vmatprep.subr.mxu0 0.0
  %82 = vmatpush2.msra.mxu0 0.0
  %83 = vmatprep.subr.mxu0 0.0
  %84 = vmatpush2.msra.mxu0 0.0
  %85 = vmatprep.subr.mxu0 0.0
  %86 = vmatpush2.msra.mxu0 0.0
  %87 = vmatprep.subr.mxu0 0.0
  %88 = vmatpush2.msra.mxu0 0.0
  %89 = vmatprep.subr.mxu0 0.0
  %90 = vmatpush2.msra.mxu0 0.0
  %91 = vmatprep.subr.mxu0 0.0
  %92 = vmatpush2.msra.mxu0 0.0
  %93 = vmatprep.subr.mxu0 0.0
  %94 = vmatpush2.msra.mxu0 0.0
  %95 = vmatprep.subr.mxu0 0.0
  %96 = vmatpush2.msra.mxu0 0.0
  %97 = vmatprep.subr.mxu0 0.0
  %98 = vmatpush2.msra.mxu0 0.0
  %99 = vmatprep.subr.mxu0 0.0
  %100 = vmatpush2.msra.mxu0 0.0
  %101 = vmatprep.subr.mxu0 0.0
  %102 = vmatpush2.msra.mxu0 0.0
  %103 = vmatprep.subr.mxu0 0.0
  %104 = vmatpush2.msra.mxu0 0.0
  %105 = vmatprep.mubr.f32.mxu0 0.0
  %106 = vmatmul.mubr.f32.gmra.mxu0 %v39
  %v107 = vpop.f32.mrf.mxu0
  %v108 = vadd.f32 0.0, %v107
  %v109 = vpop.f32.mrf.mxu0
  %110 = vdwg.mxu0
  %v111 = vmul.f32 %v108, %v35
  %v113 = vsel %vm37, %v36, 0
  %115 = vmatprep.subr.mxu0 0.0
  %116 = vmatpush1.msra.mxu0 0.0
  %117 = vmatprep.subr.mxu0 0.0
  %118 = vmatpush1.msra.mxu0 0.0
  %119 = vmatprep.subr.mxu0 0.0
  %120 = vmatpush1.msra.mxu0 0.0
  %121 = vmatprep.subr.mxu0 0.0
  %122 = vmatpush1.msra.mxu0 0.0
  %123 = vmatprep.subr.mxu0 0.0
  %124 = vmatpush1.msra.mxu0 0.0
  %125 = vmatprep.subr.mxu0 0.0
  %126 = vmatpush1.msra.mxu0 0.0
  %127 = vmatprep.subr.mxu0 0.0
  %128 = vmatpush1.msra.mxu0 0.0
  %129 = vmatprep.subr.mxu0 0.0
  %130 = vmatpush1.msra.mxu0 0.0
  %131 = vmatprep.subr.mxu0 0.0
  %132 = vmatpush1.msra.mxu0 0.0
  %133 = vmatprep.subr.mxu0 0.0
  %134 = vmatpush1.msra.mxu0 0.0
  %135 = vmatprep.subr.mxu0 0.0
  %136 = vmatpush1.msra.mxu0 0.0
  %137 = vmatprep.subr.mxu0 0.0
  %138 = vmatpush1.msra.mxu0 0.0
  %139 = vmatprep.subr.mxu0 0.0
  %140 = vmatpush1.msra.mxu0 0.0
  %141 = vmatprep.subr.mxu0 0.0
  %142 = vmatpush1.msra.mxu0 0.0
  %143 = vmatprep.subr.mxu0 0.0
  %144 = vmatpush1.msra.mxu0 0.0
  %145 = vmatprep.subr.mxu0 0.0
  %146 = vmatpush1.msra.mxu0 %v26
  %147 = vmatprep.subr.mxu0 0.0
  %148 = vmatpush2.msra.mxu0 0.0
  %149 = vmatprep.subr.mxu0 0.0
  %150 = vmatpush2.msra.mxu0 0.0
  %151 = vmatprep.subr.mxu0 0.0
  %152 = vmatpush2.msra.mxu0 0.0
  %153 = vmatprep.subr.mxu0 0.0
  %154 = vmatpush2.msra.mxu0 0.0
  %155 = vmatprep.subr.mxu0 0.0
  %156 = vmatpush2.msra.mxu0 0.0
  %157 = vmatprep.subr.mxu0 0.0
  %158 = vmatpush2.msra.mxu0 0.0
  %159 = vmatprep.subr.mxu0 0.0
  %160 = vmatpush2.msra.mxu0 0.0
  %161 = vmatprep.subr.mxu0 0.0
  %162 = vmatpush2.msra.mxu0 0.0
  %163 = vmatprep.subr.mxu0 0.0
  %164 = vmatpush2.msra.mxu0 0.0
  %165 = vmatprep.subr.mxu0 0.0
  %166 = vmatpush2.msra.mxu0 0.0
  %167 = vmatprep.subr.mxu0 0.0
  %168 = vmatpush2.msra.mxu0 0.0
  %169 = vmatprep.subr.mxu0 0.0
  %170 = vmatpush2.msra.mxu0 0.0
  %171 = vmatprep.subr.mxu0 0.0
  %172 = vmatpush2.msra.mxu0 0.0
  %173 = vmatprep.subr.mxu0 0.0
  %174 = vmatpush2.msra.mxu0 0.0
  %175 = vmatprep.subr.mxu0 0.0
  %176 = vmatpush2.msra.mxu0 0.0
  %177 = vmatprep.subr.mxu0 0.0
  %178 = vmatpush2.msra.mxu0 0.0
  %179 = vmatprep.mubr.f32.mxu0 0.0
  %180 = vmatmul.mubr.f32.gmra.mxu0 %v113
  %v181 = vpop.f32.mrf.mxu0
  %v182 = vadd.f32 %v111, %v181
  %v183 = vpop.f32.mrf.mxu0
  %184 = vdwg.mxu0
  %v185 = vld [vmem:[%s0] sm:$0x3]
  %v186 = vmul.f32 %v185, %v182
  %v187 = vld [vmem:[%s1] sm:$0x3]
  %v188 = vmul.f32 %v29, %v187
  %v189 = vadd.f32 %v188, %v30
  %v190 = vadd.f32 %v29, %v186
  %v191 = vsub.f32 %v190, %v188
  %v192 = vsub.f32 %v28, %v186
  %vm193 = vcmask 58368
  %194 = vst.msk [vmem:[%s7] sm:$0x3] %vm193, %v186
  %v195 = vadd.f32 %v192, %v191
  %v196 = vadd.f32 %v195, %v189
  %v197 = vmax.f32 %v196, 1e-12
  %v198 = vrcp.pop %v197
  %v199 = vmul.f32 1.0, %v198
  %v200 = vmul.f32 %v191, %v199
  %v202 = vsel %vm37, %v191, 0
  %204 = vmatprep.subr.mxu0 0.0
  %205 = vmatpush1.msra.mxu0 0.0
  %206 = vmatprep.subr.mxu0 0.0
  %207 = vmatpush1.msra.mxu0 0.0
  %208 = vmatprep.subr.mxu0 0.0
  %209 = vmatpush1.msra.mxu0 0.0
  %210 = vmatprep.subr.mxu0 0.0
  %211 = vmatpush1.msra.mxu0 0.0
  %212 = vmatprep.subr.mxu0 0.0
  %213 = vmatpush1.msra.mxu0 0.0
  %214 = vmatprep.subr.mxu0 0.0
  %215 = vmatpush1.msra.mxu0 0.0
  %216 = vmatprep.subr.mxu0 0.0
  %217 = vmatpush1.msra.mxu0 0.0
  %218 = vmatprep.subr.mxu0 0.0
  %219 = vmatpush1.msra.mxu0 0.0
  %220 = vmatprep.subr.mxu0 0.0
  %221 = vmatpush1.msra.mxu0 0.0
  %222 = vmatprep.subr.mxu0 0.0
  %223 = vmatpush1.msra.mxu0 0.0
  %224 = vmatprep.subr.mxu0 0.0
  %225 = vmatpush1.msra.mxu0 0.0
  %226 = vmatprep.subr.mxu0 0.0
  %227 = vmatpush1.msra.mxu0 0.0
  %228 = vmatprep.subr.mxu0 0.0
  %229 = vmatpush1.msra.mxu0 0.0
  %230 = vmatprep.subr.mxu0 0.0
  %231 = vmatpush1.msra.mxu0 0.0
  %232 = vmatprep.subr.mxu0 0.0
  %233 = vmatpush1.msra.mxu0 0.0
  %234 = vmatprep.subr.mxu0 0.0
  %235 = vmatpush1.msra.mxu0 %v27
  %236 = vmatprep.subr.mxu0 0.0
  %237 = vmatpush2.msra.mxu0 0.0
  %238 = vmatprep.subr.mxu0 0.0
  %239 = vmatpush2.msra.mxu0 0.0
  %240 = vmatprep.subr.mxu0 0.0
  %241 = vmatpush2.msra.mxu0 0.0
  %242 = vmatprep.subr.mxu0 0.0
  %243 = vmatpush2.msra.mxu0 0.0
  %244 = vmatprep.subr.mxu0 0.0
  %245 = vmatpush2.msra.mxu0 0.0
  %246 = vmatprep.subr.mxu0 0.0
  %247 = vmatpush2.msra.mxu0 0.0
  %248 = vmatprep.subr.mxu0 0.0
  %249 = vmatpush2.msra.mxu0 0.0
  %250 = vmatprep.subr.mxu0 0.0
  %251 = vmatpush2.msra.mxu0 0.0
  %252 = vmatprep.subr.mxu0 0.0
  %253 = vmatpush2.msra.mxu0 0.0
  %254 = vmatprep.subr.mxu0 0.0
  %255 = vmatpush2.msra.mxu0 0.0
  %256 = vmatprep.subr.mxu0 0.0
  %257 = vmatpush2.msra.mxu0 0.0
  %258 = vmatprep.subr.mxu0 0.0
  %259 = vmatpush2.msra.mxu0 0.0
  %260 = vmatprep.subr.mxu0 0.0
  %261 = vmatpush2.msra.mxu0 0.0
  %262 = vmatprep.subr.mxu0 0.0
  %263 = vmatpush2.msra.mxu0 0.0
  %264 = vmatprep.subr.mxu0 0.0
  %265 = vmatpush2.msra.mxu0 0.0
  %266 = vmatprep.subr.mxu0 0.0
  %267 = vmatpush2.msra.mxu0 0.0
  %268 = vmatprep.mubr.f32.mxu0 0.0
  %269 = vmatmul.mubr.f32.gmra.mxu0 %v202
  %v270 = vpop.f32.mrf.mxu0
  %v271 = vadd.f32 0.0, %v270
  %v272 = vpop.f32.mrf.mxu0
  %273 = vdwg.mxu0
  %v274 = vmul.f32 %v271, %v199
  %v276 = vsel %vm37, %v200, 0
  %278 = vmatprep.subr.mxu0 0.0
  %279 = vmatpush1.msra.mxu0 0.0
  %280 = vmatprep.subr.mxu0 0.0
  %281 = vmatpush1.msra.mxu0 0.0
  %282 = vmatprep.subr.mxu0 0.0
  %283 = vmatpush1.msra.mxu0 0.0
  %284 = vmatprep.subr.mxu0 0.0
  %285 = vmatpush1.msra.mxu0 0.0
  %286 = vmatprep.subr.mxu0 0.0
  %287 = vmatpush1.msra.mxu0 0.0
  %288 = vmatprep.subr.mxu0 0.0
  %289 = vmatpush1.msra.mxu0 0.0
  %290 = vmatprep.subr.mxu0 0.0
  %291 = vmatpush1.msra.mxu0 0.0
  %292 = vmatprep.subr.mxu0 0.0
  %293 = vmatpush1.msra.mxu0 0.0
  %294 = vmatprep.subr.mxu0 0.0
  %295 = vmatpush1.msra.mxu0 0.0
  %296 = vmatprep.subr.mxu0 0.0
  %297 = vmatpush1.msra.mxu0 0.0
  %298 = vmatprep.subr.mxu0 0.0
  %299 = vmatpush1.msra.mxu0 0.0
  %300 = vmatprep.subr.mxu0 0.0
  %301 = vmatpush1.msra.mxu0 0.0
  %302 = vmatprep.subr.mxu0 0.0
  %303 = vmatpush1.msra.mxu0 0.0
  %304 = vmatprep.subr.mxu0 0.0
  %305 = vmatpush1.msra.mxu0 0.0
  %306 = vmatprep.subr.mxu0 0.0
  %307 = vmatpush1.msra.mxu0 0.0
  %308 = vmatprep.subr.mxu0 0.0
  %309 = vmatpush1.msra.mxu0 %v26
  %310 = vmatprep.subr.mxu0 0.0
  %311 = vmatpush2.msra.mxu0 0.0
  %312 = vmatprep.subr.mxu0 0.0
  %313 = vmatpush2.msra.mxu0 0.0
  %314 = vmatprep.subr.mxu0 0.0
  %315 = vmatpush2.msra.mxu0 0.0
  %316 = vmatprep.subr.mxu0 0.0
  %317 = vmatpush2.msra.mxu0 0.0
  %318 = vmatprep.subr.mxu0 0.0
  %319 = vmatpush2.msra.mxu0 0.0
  %320 = vmatprep.subr.mxu0 0.0
  %321 = vmatpush2.msra.mxu0 0.0
  %322 = vmatprep.subr.mxu0 0.0
  %323 = vmatpush2.msra.mxu0 0.0
  %324 = vmatprep.subr.mxu0 0.0
  %325 = vmatpush2.msra.mxu0 0.0
  %326 = vmatprep.subr.mxu0 0.0
  %327 = vmatpush2.msra.mxu0 0.0
  %328 = vmatprep.subr.mxu0 0.0
  %329 = vmatpush2.msra.mxu0 0.0
  %330 = vmatprep.subr.mxu0 0.0
  %331 = vmatpush2.msra.mxu0 0.0
  %332 = vmatprep.subr.mxu0 0.0
  %333 = vmatpush2.msra.mxu0 0.0
  %334 = vmatprep.subr.mxu0 0.0
  %335 = vmatpush2.msra.mxu0 0.0
  %336 = vmatprep.subr.mxu0 0.0
  %337 = vmatpush2.msra.mxu0 0.0
  %338 = vmatprep.subr.mxu0 0.0
  %339 = vmatpush2.msra.mxu0 0.0
  %340 = vmatprep.subr.mxu0 0.0
  %341 = vmatpush2.msra.mxu0 0.0
  %342 = vmatprep.mubr.f32.mxu0 0.0
  %343 = vmatmul.mubr.f32.gmra.mxu0 %v276
  %v344 = vpop.f32.mrf.mxu0
  %v345 = vadd.f32 %v274, %v344
  %v346 = vpop.f32.mrf.mxu0
  %347 = vdwg.mxu0
  %s348 = scalar_lea.vmem %s0, 2
  %v349 = vld [vmem:[%s348] sm:$0x3]
  %v350 = vmul.f32 %v349, %v345
  %s351 = scalar_lea.vmem %s1, 2
  %v352 = vld [vmem:[%s351] sm:$0x3]
  %v353 = vmul.f32 %v191, %v352
  %v354 = vadd.f32 %v353, %v189
  %v355 = vadd.f32 %v191, %v350
  %v356 = vsub.f32 %v355, %v353
  %v357 = vsub.f32 %v192, %v350
  %s358 = scalar_lea.vmem %s7, 2
  %359 = vst.msk [vmem:[%s358] sm:$0x3] %vm193, %v350
  %v360 = vadd.f32 %v357, %v356
  %v361 = vadd.f32 %v360, %v354
  %v362 = vmax.f32 %v361, 1e-12
  %v363 = vrcp.pop %v362
  %v364 = vmul.f32 1.0, %v363
  %v365 = vmul.f32 %v356, %v364
  %v367 = vsel %vm37, %v356, 0
  %369 = vmatprep.subr.mxu0 0.0
  %370 = vmatpush1.msra.mxu0 0.0
  %371 = vmatprep.subr.mxu0 0.0
  %372 = vmatpush1.msra.mxu0 0.0
  %373 = vmatprep.subr.mxu0 0.0
  %374 = vmatpush1.msra.mxu0 0.0
  %375 = vmatprep.subr.mxu0 0.0
  %376 = vmatpush1.msra.mxu0 0.0
  %377 = vmatprep.subr.mxu0 0.0
  %378 = vmatpush1.msra.mxu0 0.0
  %379 = vmatprep.subr.mxu0 0.0
  %380 = vmatpush1.msra.mxu0 0.0
  %381 = vmatprep.subr.mxu0 0.0
  %382 = vmatpush1.msra.mxu0 0.0
  %383 = vmatprep.subr.mxu0 0.0
  %384 = vmatpush1.msra.mxu0 0.0
  %385 = vmatprep.subr.mxu0 0.0
  %386 = vmatpush1.msra.mxu0 0.0
  %387 = vmatprep.subr.mxu0 0.0
  %388 = vmatpush1.msra.mxu0 0.0
  %389 = vmatprep.subr.mxu0 0.0
  %390 = vmatpush1.msra.mxu0 0.0
  %391 = vmatprep.subr.mxu0 0.0
  %392 = vmatpush1.msra.mxu0 0.0
  %393 = vmatprep.subr.mxu0 0.0
  %394 = vmatpush1.msra.mxu0 0.0
  %395 = vmatprep.subr.mxu0 0.0
  %396 = vmatpush1.msra.mxu0 0.0
  %397 = vmatprep.subr.mxu0 0.0
  %398 = vmatpush1.msra.mxu0 0.0
  %399 = vmatprep.subr.mxu0 0.0
  %400 = vmatpush1.msra.mxu0 %v27
  %401 = vmatprep.subr.mxu0 0.0
  %402 = vmatpush2.msra.mxu0 0.0
  %403 = vmatprep.subr.mxu0 0.0
  %404 = vmatpush2.msra.mxu0 0.0
  %405 = vmatprep.subr.mxu0 0.0
  %406 = vmatpush2.msra.mxu0 0.0
  %407 = vmatprep.subr.mxu0 0.0
  %408 = vmatpush2.msra.mxu0 0.0
  %409 = vmatprep.subr.mxu0 0.0
  %410 = vmatpush2.msra.mxu0 0.0
  %411 = vmatprep.subr.mxu0 0.0
  %412 = vmatpush2.msra.mxu0 0.0
  %413 = vmatprep.subr.mxu0 0.0
  %414 = vmatpush2.msra.mxu0 0.0
  %415 = vmatprep.subr.mxu0 0.0
  %416 = vmatpush2.msra.mxu0 0.0
  %417 = vmatprep.subr.mxu0 0.0
  %418 = vmatpush2.msra.mxu0 0.0
  %419 = vmatprep.subr.mxu0 0.0
  %420 = vmatpush2.msra.mxu0 0.0
  %421 = vmatprep.subr.mxu0 0.0
  %422 = vmatpush2.msra.mxu0 0.0
  %423 = vmatprep.subr.mxu0 0.0
  %424 = vmatpush2.msra.mxu0 0.0
  %425 = vmatprep.subr.mxu0 0.0
  %426 = vmatpush2.msra.mxu0 0.0
  %427 = vmatprep.subr.mxu0 0.0
  %428 = vmatpush2.msra.mxu0 0.0
  %429 = vmatprep.subr.mxu0 0.0
  %430 = vmatpush2.msra.mxu0 0.0
  %431 = vmatprep.subr.mxu0 0.0
  %432 = vmatpush2.msra.mxu0 0.0
  %433 = vmatprep.mubr.f32.mxu0 0.0
  %434 = vmatmul.mubr.f32.gmra.mxu0 %v367
  %v435 = vpop.f32.mrf.mxu0
  %v436 = vadd.f32 0.0, %v435
  %v437 = vpop.f32.mrf.mxu0
  %438 = vdwg.mxu0
  %v439 = vmul.f32 %v436, %v364
  %v441 = vsel %vm37, %v365, 0
  %443 = vmatprep.subr.mxu0 0.0
  %444 = vmatpush1.msra.mxu0 0.0
  %445 = vmatprep.subr.mxu0 0.0
  %446 = vmatpush1.msra.mxu0 0.0
  %447 = vmatprep.subr.mxu0 0.0
  %448 = vmatpush1.msra.mxu0 0.0
  %449 = vmatprep.subr.mxu0 0.0
  %450 = vmatpush1.msra.mxu0 0.0
  %451 = vmatprep.subr.mxu0 0.0
  %452 = vmatpush1.msra.mxu0 0.0
  %453 = vmatprep.subr.mxu0 0.0
  %454 = vmatpush1.msra.mxu0 0.0
  %455 = vmatprep.subr.mxu0 0.0
  %456 = vmatpush1.msra.mxu0 0.0
  %457 = vmatprep.subr.mxu0 0.0
  %458 = vmatpush1.msra.mxu0 0.0
  %459 = vmatprep.subr.mxu0 0.0
  %460 = vmatpush1.msra.mxu0 0.0
  %461 = vmatprep.subr.mxu0 0.0
  %462 = vmatpush1.msra.mxu0 0.0
  %463 = vmatprep.subr.mxu0 0.0
  %464 = vmatpush1.msra.mxu0 0.0
  %465 = vmatprep.subr.mxu0 0.0
  %466 = vmatpush1.msra.mxu0 0.0
  %467 = vmatprep.subr.mxu0 0.0
  %468 = vmatpush1.msra.mxu0 0.0
  %469 = vmatprep.subr.mxu0 0.0
  %470 = vmatpush1.msra.mxu0 0.0
  %471 = vmatprep.subr.mxu0 0.0
  %472 = vmatpush1.msra.mxu0 0.0
  %473 = vmatprep.subr.mxu0 0.0
  %474 = vmatpush1.msra.mxu0 %v26
  %475 = vmatprep.subr.mxu0 0.0
  %476 = vmatpush2.msra.mxu0 0.0
  %477 = vmatprep.subr.mxu0 0.0
  %478 = vmatpush2.msra.mxu0 0.0
  %479 = vmatprep.subr.mxu0 0.0
  %480 = vmatpush2.msra.mxu0 0.0
  %481 = vmatprep.subr.mxu0 0.0
  %482 = vmatpush2.msra.mxu0 0.0
  %483 = vmatprep.subr.mxu0 0.0
  %484 = vmatpush2.msra.mxu0 0.0
  %485 = vmatprep.subr.mxu0 0.0
  %486 = vmatpush2.msra.mxu0 0.0
  %487 = vmatprep.subr.mxu0 0.0
  %488 = vmatpush2.msra.mxu0 0.0
  %489 = vmatprep.subr.mxu0 0.0
  %490 = vmatpush2.msra.mxu0 0.0
  %491 = vmatprep.subr.mxu0 0.0
  %492 = vmatpush2.msra.mxu0 0.0
  %493 = vmatprep.subr.mxu0 0.0
  %494 = vmatpush2.msra.mxu0 0.0
  %495 = vmatprep.subr.mxu0 0.0
  %496 = vmatpush2.msra.mxu0 0.0
  %497 = vmatprep.subr.mxu0 0.0
  %498 = vmatpush2.msra.mxu0 0.0
  %499 = vmatprep.subr.mxu0 0.0
  %500 = vmatpush2.msra.mxu0 0.0
  %501 = vmatprep.subr.mxu0 0.0
  %502 = vmatpush2.msra.mxu0 0.0
  %503 = vmatprep.subr.mxu0 0.0
  %504 = vmatpush2.msra.mxu0 0.0
  %505 = vmatprep.subr.mxu0 0.0
  %506 = vmatpush2.msra.mxu0 0.0
  %507 = vmatprep.mubr.f32.mxu0 0.0
  %508 = vmatmul.mubr.f32.gmra.mxu0 %v441
  %v509 = vpop.f32.mrf.mxu0
  %v510 = vadd.f32 %v439, %v509
  %v511 = vpop.f32.mrf.mxu0
  %512 = vdwg.mxu0
  %s513 = scalar_lea.vmem %s0, 4
  %v514 = vld [vmem:[%s513] sm:$0x3]
  %v515 = vmul.f32 %v514, %v510
  %s516 = scalar_lea.vmem %s1, 4
  %v517 = vld [vmem:[%s516] sm:$0x3]
  %v518 = vmul.f32 %v356, %v517
  %v519 = vadd.f32 %v518, %v354
  %v520 = vadd.f32 %v356, %v515
  %v521 = vsub.f32 %v520, %v518
  %v522 = vsub.f32 %v357, %v515
  %s523 = scalar_lea.vmem %s7, 4
  %524 = vst.msk [vmem:[%s523] sm:$0x3] %vm193, %v515
  %v525 = vadd.f32 %v522, %v521
  %v526 = vadd.f32 %v525, %v519
  %v527 = vmax.f32 %v526, 1e-12
  %v528 = vrcp.pop %v527
  %v529 = vmul.f32 1.0, %v528
  %v530 = vmul.f32 %v521, %v529
  %v532 = vsel %vm37, %v521, 0
  %534 = vmatprep.subr.mxu0 0.0
  %535 = vmatpush1.msra.mxu0 0.0
  %536 = vmatprep.subr.mxu0 0.0
  %537 = vmatpush1.msra.mxu0 0.0
  %538 = vmatprep.subr.mxu0 0.0
  %539 = vmatpush1.msra.mxu0 0.0
  %540 = vmatprep.subr.mxu0 0.0
  %541 = vmatpush1.msra.mxu0 0.0
  %542 = vmatprep.subr.mxu0 0.0
  %543 = vmatpush1.msra.mxu0 0.0
  %544 = vmatprep.subr.mxu0 0.0
  %545 = vmatpush1.msra.mxu0 0.0
  %546 = vmatprep.subr.mxu0 0.0
  %547 = vmatpush1.msra.mxu0 0.0
  %548 = vmatprep.subr.mxu0 0.0
  %549 = vmatpush1.msra.mxu0 0.0
  %550 = vmatprep.subr.mxu0 0.0
  %551 = vmatpush1.msra.mxu0 0.0
  %552 = vmatprep.subr.mxu0 0.0
  %553 = vmatpush1.msra.mxu0 0.0
  %554 = vmatprep.subr.mxu0 0.0
  %555 = vmatpush1.msra.mxu0 0.0
  %556 = vmatprep.subr.mxu0 0.0
  %557 = vmatpush1.msra.mxu0 0.0
  %558 = vmatprep.subr.mxu0 0.0
  %559 = vmatpush1.msra.mxu0 0.0
  %560 = vmatprep.subr.mxu0 0.0
  %561 = vmatpush1.msra.mxu0 0.0
  %562 = vmatprep.subr.mxu0 0.0
  %563 = vmatpush1.msra.mxu0 0.0
  %564 = vmatprep.subr.mxu0 0.0
  %565 = vmatpush1.msra.mxu0 %v27
  %566 = vmatprep.subr.mxu0 0.0
  %567 = vmatpush2.msra.mxu0 0.0
  %568 = vmatprep.subr.mxu0 0.0
  %569 = vmatpush2.msra.mxu0 0.0
  %570 = vmatprep.subr.mxu0 0.0
  %571 = vmatpush2.msra.mxu0 0.0
  %572 = vmatprep.subr.mxu0 0.0
  %573 = vmatpush2.msra.mxu0 0.0
  %574 = vmatprep.subr.mxu0 0.0
  %575 = vmatpush2.msra.mxu0 0.0
  %576 = vmatprep.subr.mxu0 0.0
  %577 = vmatpush2.msra.mxu0 0.0
  %578 = vmatprep.subr.mxu0 0.0
  %579 = vmatpush2.msra.mxu0 0.0
  %580 = vmatprep.subr.mxu0 0.0
  %581 = vmatpush2.msra.mxu0 0.0
  %582 = vmatprep.subr.mxu0 0.0
  %583 = vmatpush2.msra.mxu0 0.0
  %584 = vmatprep.subr.mxu0 0.0
  %585 = vmatpush2.msra.mxu0 0.0
  %586 = vmatprep.subr.mxu0 0.0
  %587 = vmatpush2.msra.mxu0 0.0
  %588 = vmatprep.subr.mxu0 0.0
  %589 = vmatpush2.msra.mxu0 0.0
  %590 = vmatprep.subr.mxu0 0.0
  %591 = vmatpush2.msra.mxu0 0.0
  %592 = vmatprep.subr.mxu0 0.0
  %593 = vmatpush2.msra.mxu0 0.0
  %594 = vmatprep.subr.mxu0 0.0
  %595 = vmatpush2.msra.mxu0 0.0
  %596 = vmatprep.subr.mxu0 0.0
  %597 = vmatpush2.msra.mxu0 0.0
  %598 = vmatprep.mubr.f32.mxu0 0.0
  %599 = vmatmul.mubr.f32.gmra.mxu0 %v532
  %v600 = vpop.f32.mrf.mxu0
  %v601 = vadd.f32 0.0, %v600
  %v602 = vpop.f32.mrf.mxu0
  %603 = vdwg.mxu0
  %v604 = vmul.f32 %v601, %v529
  %v606 = vsel %vm37, %v530, 0
  %608 = vmatprep.subr.mxu0 0.0
  %609 = vmatpush1.msra.mxu0 0.0
  %610 = vmatprep.subr.mxu0 0.0
  %611 = vmatpush1.msra.mxu0 0.0
  %612 = vmatprep.subr.mxu0 0.0
  %613 = vmatpush1.msra.mxu0 0.0
  %614 = vmatprep.subr.mxu0 0.0
  %615 = vmatpush1.msra.mxu0 0.0
  %616 = vmatprep.subr.mxu0 0.0
  %617 = vmatpush1.msra.mxu0 0.0
  %618 = vmatprep.subr.mxu0 0.0
  %619 = vmatpush1.msra.mxu0 0.0
  %620 = vmatprep.subr.mxu0 0.0
  %621 = vmatpush1.msra.mxu0 0.0
  %622 = vmatprep.subr.mxu0 0.0
  %623 = vmatpush1.msra.mxu0 0.0
  %624 = vmatprep.subr.mxu0 0.0
  %625 = vmatpush1.msra.mxu0 0.0
  %626 = vmatprep.subr.mxu0 0.0
  %627 = vmatpush1.msra.mxu0 0.0
  %628 = vmatprep.subr.mxu0 0.0
  %629 = vmatpush1.msra.mxu0 0.0
  %630 = vmatprep.subr.mxu0 0.0
  %631 = vmatpush1.msra.mxu0 0.0
  %632 = vmatprep.subr.mxu0 0.0
  %633 = vmatpush1.msra.mxu0 0.0
  %634 = vmatprep.subr.mxu0 0.0
  %635 = vmatpush1.msra.mxu0 0.0
  %636 = vmatprep.subr.mxu0 0.0
  %637 = vmatpush1.msra.mxu0 0.0
  %638 = vmatprep.subr.mxu0 0.0
  %639 = vmatpush1.msra.mxu0 %v26
  %640 = vmatprep.subr.mxu0 0.0
  %641 = vmatpush2.msra.mxu0 0.0
  %642 = vmatprep.subr.mxu0 0.0
  %643 = vmatpush2.msra.mxu0 0.0
  %644 = vmatprep.subr.mxu0 0.0
  %645 = vmatpush2.msra.mxu0 0.0
  %646 = vmatprep.subr.mxu0 0.0
  %647 = vmatpush2.msra.mxu0 0.0
  %648 = vmatprep.subr.mxu0 0.0
  %649 = vmatpush2.msra.mxu0 0.0
  %650 = vmatprep.subr.mxu0 0.0
  %651 = vmatpush2.msra.mxu0 0.0
  %652 = vmatprep.subr.mxu0 0.0
  %653 = vmatpush2.msra.mxu0 0.0
  %654 = vmatprep.subr.mxu0 0.0
  %655 = vmatpush2.msra.mxu0 0.0
  %656 = vmatprep.subr.mxu0 0.0
  %657 = vmatpush2.msra.mxu0 0.0
  %658 = vmatprep.subr.mxu0 0.0
  %659 = vmatpush2.msra.mxu0 0.0
  %660 = vmatprep.subr.mxu0 0.0
  %661 = vmatpush2.msra.mxu0 0.0
  %662 = vmatprep.subr.mxu0 0.0
  %663 = vmatpush2.msra.mxu0 0.0
  %664 = vmatprep.subr.mxu0 0.0
  %665 = vmatpush2.msra.mxu0 0.0
  %666 = vmatprep.subr.mxu0 0.0
  %667 = vmatpush2.msra.mxu0 0.0
  %668 = vmatprep.subr.mxu0 0.0
  %669 = vmatpush2.msra.mxu0 0.0
  %670 = vmatprep.subr.mxu0 0.0
  %671 = vmatpush2.msra.mxu0 0.0
  %672 = vmatprep.mubr.f32.mxu0 0.0
  %673 = vmatmul.mubr.f32.gmra.mxu0 %v606
  %v674 = vpop.f32.mrf.mxu0
  %v675 = vadd.f32 %v604, %v674
  %v676 = vpop.f32.mrf.mxu0
  %677 = vdwg.mxu0
  %s678 = scalar_lea.vmem %s0, 6
  %v679 = vld [vmem:[%s678] sm:$0x3]
  %v680 = vmul.f32 %v679, %v675
  %s681 = scalar_lea.vmem %s7, 6
  %682 = vst.msk [vmem:[%s681] sm:$0x3] %vm193, %v680
  // Predicated region
  $region30: #{_lambda_.9} parent=0 // pred_check
    _
  $region31: #{_lambda_.9} parent=0 // pred_check_branch
    %684 = sbr.rel (0) target = $region33
  $region32: #{_lambda_.9} parent=0 // pred_region
    _
  $region33: #{_lambda_.9} parent=0 // pred_fallthru
    _
  // Predicated region
  $region34: #{_lambda_.9} parent=0 // pred_check
    _
  $region35: #{_lambda_.9} parent=0 // pred_check_branch
    %686 = sbr.rel (0) target = $region37
  $region36: #{_lambda_.9} parent=0 // pred_region
    _
  $region37: #{_lambda_.9} parent=0 // pred_fallthru
    _

</llo_original>
